<compile_context>
chip_gen: v7x
topology: tpu7x:2x2x1
jax: 0.10.0
libtpu: 0.0.40
codegen_flags: <defaults>
</compile_context>

<pallas_src>
import functools

import jax
import jax.numpy as jnp
from jax import lax
from jax.experimental import pallas as pl
from jax.experimental.pallas import tpu as pltpu

BN_EPS = 1e-5
_VMEM_LIMIT = 48 * 1024 * 1024        # safe on v5e(16 MiB scoped default)..v7x(64 MiB phys)

# Contract dim 0 of the (Cin, S) NCHW slab against dim 0 of the (Cin, Cout) weight
# -> (S, Cout) NHWC-ordered rows.  Transposed-LHS dot_general (splash-attention dKV
# uses the same dimension numbers), so no HBM-level transpose is ever materialized.
_TN_DIMS = (((0,), (0,)), ((), ()))


def _conv1x1_nchw_block(x_ci_s, w_ci_co):
    return lax.dot_general(x_ci_s, w_ci_co, _TN_DIMS,
                           preferred_element_type=jnp.float32)


# --------------------------------------------------------------------------- kernels
def _fused_kernel(xp_ref, xa_ref, wp_ref, wa_ref, gbp_ref, gba_ref,
                  m_ref, a_ref, yp_scr, ya_scr, *, n_rows, n_b):
    """Small-N fast path: conv + BN stats + BN apply + sigmoid in ONE call.

    xp_ref: (B, Cin_p, HW)   xa_ref: (B, Cin_a, HW)    (original NCHW layout)
    wp_ref: (Cin_p, Cp)      wa_ref: (Cin_a, Ca)
    gbp/gba: (2, C) packed [gamma; beta]
    m_ref: (B, HW, Cp)       a_ref: (B, HW, Ca)
    yp_scr/ya_scr: VMEM scratch holding pre-BN conv outputs (y computed once).
    """
    wp = wp_ref[...]
    wa = wa_ref[...]
    cp = wp.shape[1]
    ca = wa.shape[1]
    sum_p = jnp.zeros((1, cp), jnp.float32)
    ssq_p = jnp.zeros((1, cp), jnp.float32)
    sum_a = jnp.zeros((1, ca), jnp.float32)
    ssq_a = jnp.zeros((1, ca), jnp.float32)

    for bi in range(n_b):  # static unroll (fast path is gated on small B)
        yp = _conv1x1_nchw_block(xp_ref[bi], wp)
        ya = _conv1x1_nchw_block(xa_ref[bi], wa)
        yp_scr[bi] = yp
        ya_scr[bi] = ya
        sum_p += jnp.sum(yp, axis=0, keepdims=True)
        ssq_p += jnp.sum(yp * yp, axis=0, keepdims=True)
        sum_a += jnp.sum(ya, axis=0, keepdims=True)
        ssq_a += jnp.sum(ya * ya, axis=0, keepdims=True)

    inv_n = jnp.float32(1.0 / n_rows)
    mean_p = sum_p * inv_n
    var_p = jnp.maximum(ssq_p * inv_n - mean_p * mean_p, 0.0)
    mean_a = sum_a * inv_n
    var_a = jnp.maximum(ssq_a * inv_n - mean_a * mean_a, 0.0)

    s_p = gbp_ref[0:1, :] * lax.rsqrt(var_p + BN_EPS)
    t_p = gbp_ref[1:2, :] - mean_p * s_p        # conv bias cancels under train BN
    s_a = gba_ref[0:1, :] * lax.rsqrt(var_a + BN_EPS)
    t_a = gba_ref[1:2, :] - mean_a * s_a

    for bi in range(n_b):
        m_ref[bi] = yp_scr[bi] * s_p + t_p
        a_ref[bi] = jax.nn.sigmoid(ya_scr[bi] * s_a + t_a)


def _stats_kernel(xp_ref, xa_ref, wp_ref, wa_ref, stp_ref, sta_ref, *, t_b):
    """Two-phase path, phase 1: per-batch-tile partial (sum, sumsq) of y = conv(x).

    Grid = (batch tiles [parallel], spatial tiles [arbitrary/reduction]).
    stp_ref/sta_ref: (2, C) resident partial accumulators, one per batch tile
    (kept separate per parallel step so v7x's two TensorCores never race).
    """
    @pl.when(pl.program_id(1) == 0)
    def _():
        stp_ref[...] = jnp.zeros_like(stp_ref)
        sta_ref[...] = jnp.zeros_like(sta_ref)

    wp = wp_ref[...]
    wa = wa_ref[...]
    cp = wp.shape[1]
    ca = wa.shape[1]
    sum_p = jnp.zeros((1, cp), jnp.float32)
    ssq_p = jnp.zeros((1, cp), jnp.float32)
    sum_a = jnp.zeros((1, ca), jnp.float32)
    ssq_a = jnp.zeros((1, ca), jnp.float32)

    for bi in range(t_b):  # static unroll over batch elements in this tile
        yp = _conv1x1_nchw_block(xp_ref[bi], wp)
        ya = _conv1x1_nchw_block(xa_ref[bi], wa)
        sum_p += jnp.sum(yp, axis=0, keepdims=True)
        ssq_p += jnp.sum(yp * yp, axis=0, keepdims=True)
        sum_a += jnp.sum(ya, axis=0, keepdims=True)
        ssq_a += jnp.sum(ya * ya, axis=0, keepdims=True)

    # Two separate row updates: no sublane concat / relayout through the XLU.
    stp_ref[0:1, :] += sum_p
    stp_ref[1:2, :] += ssq_p
    sta_ref[0:1, :] += sum_a
    sta_ref[1:2, :] += ssq_a


def _apply_kernel(xp_ref, xa_ref, wp_ref, wa_ref, fp_ref, fa_ref,
                  m_ref, a_ref, *, t_b):
    """Two-phase path, phase 2: recompute the cheap matmul, apply folded BN, sigmoid.

    fp_ref/fa_ref: (2, C) pre-folded [scale; shift] (computed once in the wrapper),
    so the per-tile epilogue is a single FMA (+ sigmoid on the 32 act lanes only).
    """
    wp = wp_ref[...]
    wa = wa_ref[...]
    s_p, t_p = fp_ref[0:1, :], fp_ref[1:2, :]
    s_a, t_a = fa_ref[0:1, :], fa_ref[1:2, :]
    for bi in range(t_b):
        yp = _conv1x1_nchw_block(xp_ref[bi], wp)
        ya = _conv1x1_nchw_block(xa_ref[bi], wa)
        m_ref[bi] = yp * s_p + t_p
        a_ref[bi] = jax.nn.sigmoid(ya * s_a + t_a)


# --------------------------------------------------------------------------- tiling helpers
def _largest_divisor_leq(n, cap):
    cap = min(n, max(1, cap))
    for d in range(cap, 0, -1):
        if n % d == 0:
            return d
    return 1


def _pick_hw_tile(hw, max_rows):
    """Spatial tile: full HW if it fits, else the largest 128-multiple divisor."""
    if hw <= max_rows:
        return hw
    start = max_rows - (max_rows % 128)
    for t in range(start, 127, -128):
        if hw % t == 0:
            return t
    # No lane-aligned divisor of HW: fall back to the full spatial extent (rare; the
    # batch axis still bounds the tile at one image's worth).
    return hw


# --------------------------------------------------------------------------- wrapper
def primary_quat_caps(x_pose_nchw, x_act_nchw, params, out_caps, quat_dims=3,
                      max_tile_rows=4096, max_batch_unroll=16,
                      fast_path_vmem_bytes=8 * 1024 * 1024,
                      force_two_phase=False):
    """PrimaryQuatCaps forward. Inputs are NCHW float32. Returns (M, a)."""
    B, cin_p, H, W = x_pose_nchw.shape
    Ba, cin_a, Ha, Wa = x_act_nchw.shape
    assert (B, H, W) == (Ba, Ha, Wa)
    HW = H * W
    N = B * HW
    Cp = out_caps * quat_dims
    Ca = out_caps

    # Free reshapes only -- the NCHW data never round-trips HBM before the kernel.
    xp = x_pose_nchw.reshape(B, cin_p, HW).astype(jnp.float32)
    xa = x_act_nchw.reshape(B, cin_a, HW).astype(jnp.float32)

    wp, _bp, gp, betap, wa, _ba, ga, betaa = params
    # Conv biases (_bp, _ba) cancel exactly under train-mode BN -> never DMA'd.
    wp = wp.astype(jnp.float32)
    wa = wa.astype(jnp.float32)
    gb_p = jnp.concatenate([gp.reshape(1, Cp), betap.reshape(1, Cp)], axis=0)  # (2,Cp)
    gb_a = jnp.concatenate([ga.reshape(1, Ca), betaa.reshape(1, Ca)], axis=0)  # (2,Ca)

    # ---- small-N single-call fast path (x + y-scratch + out fit in VMEM) ----
    fused_bytes = 4 * N * (cin_p + cin_a + 2 * (Cp + Ca))
    use_fast = ((not force_two_phase) and B <= max_batch_unroll
                and fused_bytes <= fast_path_vmem_bytes)

    if use_fast:
        m_flat, a_flat = pl.pallas_call(
            functools.partial(_fused_kernel, n_rows=N, n_b=B),
            grid=(1,),
            in_specs=[
                pl.BlockSpec((B, cin_p, HW), lambda i: (0, 0, 0)),
                pl.BlockSpec((B, cin_a, HW), lambda i: (0, 0, 0)),
                pl.BlockSpec((cin_p, Cp), lambda i: (0, 0)),
                pl.BlockSpec((cin_a, Ca), lambda i: (0, 0)),
                pl.BlockSpec((2, Cp), lambda i: (0, 0)),
                pl.BlockSpec((2, Ca), lambda i: (0, 0)),
            ],
            out_specs=(
                pl.BlockSpec((B, HW, Cp), lambda i: (0, 0, 0)),
                pl.BlockSpec((B, HW, Ca), lambda i: (0, 0, 0)),
            ),
            out_shape=(jax.ShapeDtypeStruct((B, HW, Cp), jnp.float32),
                       jax.ShapeDtypeStruct((B, HW, Ca), jnp.float32)),
            scratch_shapes=[pltpu.VMEM((B, HW, Cp), jnp.float32),
                            pltpu.VMEM((B, HW, Ca), jnp.float32)],
            compiler_params=pltpu.CompilerParams(
                dimension_semantics=("arbitrary",),
                vmem_limit_bytes=_VMEM_LIMIT),
        )(xp, xa, wp, wa, gb_p, gb_a)
    else:
        # ---- two-phase tiled path ----
        t_hw = _pick_hw_tile(HW, max_tile_rows)
        t_b = _largest_divisor_leq(
            B, min(max_batch_unroll, max(1, max_tile_rows // t_hw)))
        n_bt = B // t_b
        n_hw = HW // t_hw

        xp_spec = pl.BlockSpec((t_b, cin_p, t_hw), lambda b, s: (b, 0, s))
        xa_spec = pl.BlockSpec((t_b, cin_a, t_hw), lambda b, s: (b, 0, s))
        wp_spec = pl.BlockSpec((cin_p, Cp), lambda b, s: (0, 0))
        wa_spec = pl.BlockSpec((cin_a, Ca), lambda b, s: (0, 0))

        # Phase 1: per-batch-tile partial stats; batch axis "parallel" (splits the
        # reduction across v7x's two TensorCores), spatial axis "arbitrary".
        stats_p, stats_a = pl.pallas_call(
            functools.partial(_stats_kernel, t_b=t_b),
            grid=(n_bt, n_hw),
            in_specs=[xp_spec, xa_spec, wp_spec, wa_spec],
            out_specs=(
                pl.BlockSpec((None, 2, Cp), lambda b, s: (b, 0, 0)),
                pl.BlockSpec((None, 2, Ca), lambda b, s: (b, 0, 0)),
            ),
            out_shape=(jax.ShapeDtypeStruct((n_bt, 2, Cp), jnp.float32),
                       jax.ShapeDtypeStruct((n_bt, 2, Ca), jnp.float32)),
            compiler_params=pltpu.CompilerParams(
                dimension_semantics=("parallel", "arbitrary"),
                vmem_limit_bytes=_VMEM_LIMIT),
        )(xp, xa, wp, wa)

        # Tiny XLA epilogue on (n_bt, 2, <=128): combine partials and fold the whole
        # BN affine into one (scale, shift) pair so the apply kernel is just an FMA.
        def fold(stats, gamma_beta):
            s = jnp.sum(stats, axis=0)                    # (2, C)
            mean = s[0] / N
            var = jnp.maximum(s[1] / N - mean * mean, 0.0)
            scale = gamma_beta[0] * lax.rsqrt(var + BN_EPS)
            shift = gamma_beta[1] - mean * scale
            return jnp.stack([scale, shift], axis=0)      # (2, C)

        fold_p = fold(stats_p, gb_p)
        fold_a = fold(stats_a, gb_a)

        # Phase 2: recompute the cheap K<=64 matmul per tile, normalize, sigmoid.
        m_flat, a_flat = pl.pallas_call(
            functools.partial(_apply_kernel, t_b=t_b),
            grid=(n_bt, n_hw),
            in_specs=[xp_spec, xa_spec, wp_spec, wa_spec,
                      pl.BlockSpec((2, Cp), lambda b, s: (0, 0)),
                      pl.BlockSpec((2, Ca), lambda b, s: (0, 0))],
            out_specs=(
                pl.BlockSpec((t_b, t_hw, Cp), lambda b, s: (b, s, 0)),
                pl.BlockSpec((t_b, t_hw, Ca), lambda b, s: (b, s, 0)),
            ),
            out_shape=(jax.ShapeDtypeStruct((B, HW, Cp), jnp.float32),
                       jax.ShapeDtypeStruct((B, HW, Ca), jnp.float32)),
            compiler_params=pltpu.CompilerParams(
                dimension_semantics=("parallel", "parallel"),
                vmem_limit_bytes=_VMEM_LIMIT),
        )(xp, xa, wp, wa, fold_p, fold_a)

    # Contiguous reshapes only (row = b*HW + h*W + w, column c = cap*quat_dims + q),
    # matching permute(0,2,3,1) + view in the PyTorch module -> no HBM copy.
    M = m_flat.reshape(B, H, W, out_caps, quat_dims)
    a = a_flat.reshape(B, H, W, out_caps)
    return M, a


# --------------------------------------------------------------------------- params / reference
def init_params(key, in_channels_pose, in_channels_act, out_caps, quat_dims=3):
    """Parameter init matching the PyTorch module; weights stored as (C_in, C_out)."""
    Cp = out_caps * quat_dims
    Ca = out_caps
    k_pw, k_pb, k_aw, k_ab = jax.random.split(key, 4)

    # pose_layer: xavier_uniform_ over (C_out=Cp, C_in) fan pair.
    bound_p = float(jnp.sqrt(6.0 / (in_channels_pose + Cp)))
    wp = jax.random.uniform(k_pw, (in_channels_pose, Cp), jnp.float32, -bound_p, bound_p)
    bound_pb = 1.0 / float(jnp.sqrt(in_channels_pose))
    bp = jax.random.uniform(k_pb, (1, Cp), jnp.float32, -bound_pb, bound_pb)

    # activation_layer: PyTorch default conv init (bound 1/sqrt(fan_in)).
    bound_a = 1.0 / float(jnp.sqrt(in_channels_act))
    wa = jax.random.uniform(k_aw, (in_channels_act, Ca), jnp.float32, -bound_a, bound_a)
    ba = jax.random.uniform(k_ab, (1, Ca), jnp.float32, -bound_a, bound_a)

    gp = jnp.ones((1, Cp), jnp.float32)
    betap = jnp.zeros((1, Cp), jnp.float32)
    ga = jnp.ones((1, Ca), jnp.float32)
    betaa = jnp.zeros((1, Ca), jnp.float32)
    return (wp, bp, gp, betap, wa, ba, ga, betaa)


def _reference(x_pose, x_act, params, out_caps, quat_dims=3):
    """Pure-JAX train-mode reference. Keeps the conv biases to show they cancel."""
    wp, bp, gp, betap, wa, ba, ga, betaa = params

    def branch(x, w, b, g, beta):
        Ci = x.shape[1]
        y = jnp.dot(jnp.transpose(x, (0, 2, 3, 1)).reshape(-1, Ci), w,
                    precision=jax.lax.Precision.HIGHEST) + b
        mean = jnp.mean(y, axis=0, keepdims=True)
        var = jnp.mean((y - mean) ** 2, axis=0, keepdims=True)
        return g * (y - mean) / jnp.sqrt(var + BN_EPS) + beta

    B, _, H, W = x_pose.shape
    m = branch(x_pose, wp, bp, gp, betap).reshape(B, H, W, out_caps, quat_dims)
    a = jax.nn.sigmoid(branch(x_act, wa, ba, ga, betaa)).reshape(B, H, W, out_caps)
    return m, a


# --------------------------------------------------------------------------- demo
if __name__ == "__main__":
    # Shapes follow MatQuatCapNet's primarycaps: in_channels_pose=64, in_channels_act=32,
    # outCaps=32, quat_dims=3 -> pose slab 96 channels, act slab 32 channels.
    B, H, W = 2, 16, 16
    CIN_POSE, CIN_ACT, OUT_CAPS, QUAT_DIMS = 64, 32, 32, 3

    key = jax.random.PRNGKey(0)
    k_xp, k_xa, k_p = jax.random.split(key, 3)
    x_pose = jax.random.normal(k_xp, (B, CIN_POSE, H, W), dtype=jnp.float32)
    x_act = jax.random.normal(k_xa, (B, CIN_ACT, H, W), dtype=jnp.float32)
    params = init_params(k_p, CIN_POSE, CIN_ACT, OUT_CAPS, QUAT_DIMS)

    M_ref, a_ref = _reference(x_pose, x_act, params, OUT_CAPS, QUAT_DIMS)

    # Path 1: fused single-call fast path (small N fits comfortably in VMEM).
    fwd_fast = jax.jit(functools.partial(
        primary_quat_caps, out_caps=OUT_CAPS, quat_dims=QUAT_DIMS))
    M1, a1 = fwd_fast(x_pose, x_act, params)
    jax.block_until_ready((M1, a1))

    # Path 2: two-phase tiled path. max_tile_rows=128 here ONLY so the tiny demo
    # shapes exercise the (batch x spatial) grid; the production default is 4096.
    fwd_tiled = jax.jit(functools.partial(
        primary_quat_caps, out_caps=OUT_CAPS, quat_dims=QUAT_DIMS,
        force_two_phase=True, max_tile_rows=128))
    M2, a2 = fwd_tiled(x_pose, x_act, params)
    jax.block_until_ready((M2, a2))

    for M, a in ((M1, a1), (M2, a2)):
        assert M.shape == (B, H, W, OUT_CAPS, QUAT_DIMS), M.shape
        assert a.shape == (B, H, W, OUT_CAPS), a.shape
        assert bool(jnp.all(jnp.isfinite(M))) and bool(jnp.all(jnp.isfinite(a)))
        assert bool(jnp.all((a >= 0.0) & (a <= 1.0)))
        assert bool(jnp.allclose(M, M_ref, atol=2e-3, rtol=2e-3))
        assert bool(jnp.allclose(a, a_ref, atol=2e-3, rtol=2e-3))

    print("KERNEL_OK")
</pallas_src>

<mosaic_0001>
module attributes {stable_mosaic.version = 11 : i64} {
  func.func @_fused_kernel(%arg0: i32, %arg1: memref<2x64x256xf32, #tpu.memory_space<vmem>>, %arg2: memref<2x32x256xf32, #tpu.memory_space<vmem>>, %arg3: memref<64x96xf32, #tpu.memory_space<vmem>>, %arg4: memref<32x32xf32, #tpu.memory_space<vmem>>, %arg5: memref<2x96xf32, #tpu.memory_space<vmem>>, %arg6: memref<2x32xf32, #tpu.memory_space<vmem>>, %arg7: memref<2x256x96xf32, #tpu.memory_space<vmem>>, %arg8: memref<2x256x32xf32, #tpu.memory_space<vmem>>, %arg9: memref<2x256x96xf32, #tpu.memory_space<vmem>>, %arg10: memref<2x256x32xf32, #tpu.memory_space<vmem>>) attributes {dimension_semantics = [#tpu.dimension_semantics<arbitrary>], iteration_bounds = array<i64: 1>, scalar_prefetch = 0 : i64, scratch_operands = 2 : i64, tpu.core_type = #tpu.core_type<tc>, window_params = [{pipeline_mode = #tpu.pipeline_mode<synchronous>, transform_indices = @transform_0, window_bounds = array<i64: 2, 64, 256>}, {pipeline_mode = #tpu.pipeline_mode<synchronous>, transform_indices = @transform_1, window_bounds = array<i64: 2, 32, 256>}, {pipeline_mode = #tpu.pipeline_mode<synchronous>, transform_indices = @transform_2, window_bounds = array<i64: 64, 96>}, {pipeline_mode = #tpu.pipeline_mode<synchronous>, transform_indices = @transform_3, window_bounds = array<i64: 32, 32>}, {pipeline_mode = #tpu.pipeline_mode<synchronous>, transform_indices = @transform_4, window_bounds = array<i64: 2, 96>}, {pipeline_mode = #tpu.pipeline_mode<synchronous>, transform_indices = @transform_5, window_bounds = array<i64: 2, 32>}, {pipeline_mode = #tpu.pipeline_mode<synchronous>, transform_indices = @transform_6, window_bounds = array<i64: 2, 256, 96>}, {pipeline_mode = #tpu.pipeline_mode<synchronous>, transform_indices = @transform_7, window_bounds = array<i64: 2, 256, 32>}]} {
    %c0 = arith.constant 0 : index
    %c0_0 = arith.constant 0 : index
    %0 = vector.load %arg3[%c0, %c0_0] : memref<64x96xf32, #tpu.memory_space<vmem>>, vector<64x96xf32>
    %c0_1 = arith.constant 0 : index
    %c0_2 = arith.constant 0 : index
    %1 = vector.load %arg4[%c0_1, %c0_2] : memref<32x32xf32, #tpu.memory_space<vmem>>, vector<32x32xf32>
    %cst = arith.constant 0.000000e+00 : f32
    %2 = vector.broadcast %cst : f32 to vector<1x96xf32>
    %cst_3 = arith.constant 0.000000e+00 : f32
    %3 = vector.broadcast %cst_3 : f32 to vector<1x96xf32>
    %cst_4 = arith.constant 0.000000e+00 : f32
    %4 = vector.broadcast %cst_4 : f32 to vector<1x32xf32>
    %cst_5 = arith.constant 0.000000e+00 : f32
    %5 = vector.broadcast %cst_5 : f32 to vector<1x32xf32>
    %c0_6 = arith.constant 0 : index
    %c0_7 = arith.constant 0 : index
    %c0_8 = arith.constant 0 : index
    %6 = vector.load %arg1[%c0_6, %c0_7, %c0_8] : memref<2x64x256xf32, #tpu.memory_space<vmem>>, vector<1x64x256xf32>
    %7 = vector.shape_cast %6 : vector<1x64x256xf32> to vector<64x256xf32>
    %cst_9 = arith.constant dense<0.000000e+00> : vector<256x96xf32>
    %8 = tpu.matmul %7, %0, %cst_9 {dimension_numbers = #tpu.dot_dimension_numbers<[0], [0], [1], [1], [0, 1, 1, 1], [], []>} : vector<64x256xf32>, vector<64x96xf32>, vector<256x96xf32> -> vector<256x96xf32>
    %c0_10 = arith.constant 0 : index
    %c0_11 = arith.constant 0 : index
    %c0_12 = arith.constant 0 : index
    %9 = vector.load %arg2[%c0_10, %c0_11, %c0_12] : memref<2x32x256xf32, #tpu.memory_space<vmem>>, vector<1x32x256xf32>
    %10 = vector.shape_cast %9 : vector<1x32x256xf32> to vector<32x256xf32>
    %cst_13 = arith.constant dense<0.000000e+00> : vector<256x32xf32>
    %11 = tpu.matmul %10, %1, %cst_13 {dimension_numbers = #tpu.dot_dimension_numbers<[0], [0], [1], [1], [0, 1, 1, 1], [], []>} : vector<32x256xf32>, vector<32x32xf32>, vector<256x32xf32> -> vector<256x32xf32>
    %c0_14 = arith.constant 0 : index
    %c0_15 = arith.constant 0 : index
    %c0_16 = arith.constant 0 : index
    %12 = vector.load %arg9[%c0_14, %c0_15, %c0_16] : memref<2x256x96xf32, #tpu.memory_space<vmem>>, vector<1x256x96xf32>
    %13 = vector.shape_cast %12 : vector<1x256x96xf32> to vector<256x96xf32>
    %14 = vector.shape_cast %8 : vector<256x96xf32> to vector<1x256x96xf32>
    tpu.vector_store %arg9[%c0_14, %c0_15, %c0_16], %14 {strides = array<i32>} : memref<2x256x96xf32, #tpu.memory_space<vmem>>, vector<1x256x96xf32>,
    %c0_17 = arith.constant 0 : index
    %c0_18 = arith.constant 0 : index
    %c0_19 = arith.constant 0 : index
    %15 = vector.load %arg10[%c0_17, %c0_18, %c0_19] : memref<2x256x32xf32, #tpu.memory_space<vmem>>, vector<1x256x32xf32>
    %16 = vector.shape_cast %15 : vector<1x256x32xf32> to vector<256x32xf32>
    %17 = vector.shape_cast %11 : vector<256x32xf32> to vector<1x256x32xf32>
    tpu.vector_store %arg10[%c0_17, %c0_18, %c0_19], %17 {strides = array<i32>} : memref<2x256x32xf32, #tpu.memory_space<vmem>>, vector<1x256x32xf32>,
    %cst_20 = arith.constant dense<0.000000e+00> : vector<96xf32>
    %18 = vector.multi_reduction <add>, %8, %cst_20 [0] : vector<256x96xf32> to vector<96xf32>
    %19 = vector.shape_cast %18 : vector<96xf32> to vector<1x96xf32>
    %20 = arith.addf %2, %19 : vector<1x96xf32>
    %21 = arith.mulf %8, %8 : vector<256x96xf32>
    %cst_21 = arith.constant dense<0.000000e+00> : vector<96xf32>
    %22 = vector.multi_reduction <add>, %21, %cst_21 [0] : vector<256x96xf32> to vector<96xf32>
    %23 = vector.shape_cast %22 : vector<96xf32> to vector<1x96xf32>
    %24 = arith.addf %3, %23 : vector<1x96xf32>
    %cst_22 = arith.constant dense<0.000000e+00> : vector<32xf32>
    %25 = vector.multi_reduction <add>, %11, %cst_22 [0] : vector<256x32xf32> to vector<32xf32>
    %26 = vector.shape_cast %25 : vector<32xf32> to vector<1x32xf32>
    %27 = arith.addf %4, %26 : vector<1x32xf32>
    %28 = arith.mulf %11, %11 : vector<256x32xf32>
    %cst_23 = arith.constant dense<0.000000e+00> : vector<32xf32>
    %29 = vector.multi_reduction <add>, %28, %cst_23 [0] : vector<256x32xf32> to vector<32xf32>
    %30 = vector.shape_cast %29 : vector<32xf32> to vector<1x32xf32>
    %31 = arith.addf %5, %30 : vector<1x32xf32>
    %c1 = arith.constant 1 : index
    %c0_24 = arith.constant 0 : index
    %c0_25 = arith.constant 0 : index
    %32 = vector.load %arg1[%c1, %c0_24, %c0_25] : memref<2x64x256xf32, #tpu.memory_space<vmem>>, vector<1x64x256xf32>
    %33 = vector.shape_cast %32 : vector<1x64x256xf32> to vector<64x256xf32>
    %cst_26 = arith.constant dense<0.000000e+00> : vector<256x96xf32>
    %34 = tpu.matmul %33, %0, %cst_26 {dimension_numbers = #tpu.dot_dimension_numbers<[0], [0], [1], [1], [0, 1, 1, 1], [], []>} : vector<64x256xf32>, vector<64x96xf32>, vector<256x96xf32> -> vector<256x96xf32>
    %c1_27 = arith.constant 1 : index
    %c0_28 = arith.constant 0 : index
    %c0_29 = arith.constant 0 : index
    %35 = vector.load %arg2[%c1_27, %c0_28, %c0_29] : memref<2x32x256xf32, #tpu.memory_space<vmem>>, vector<1x32x256xf32>
    %36 = vector.shape_cast %35 : vector<1x32x256xf32> to vector<32x256xf32>
    %cst_30 = arith.constant dense<0.000000e+00> : vector<256x32xf32>
    %37 = tpu.matmul %36, %1, %cst_30 {dimension_numbers = #tpu.dot_dimension_numbers<[0], [0], [1], [1], [0, 1, 1, 1], [], []>} : vector<32x256xf32>, vector<32x32xf32>, vector<256x32xf32> -> vector<256x32xf32>
    %c1_31 = arith.constant 1 : index
    %c0_32 = arith.constant 0 : index
    %c0_33 = arith.constant 0 : index
    %38 = vector.load %arg9[%c1_31, %c0_32, %c0_33] : memref<2x256x96xf32, #tpu.memory_space<vmem>>, vector<1x256x96xf32>
    %39 = vector.shape_cast %38 : vector<1x256x96xf32> to vector<256x96xf32>
    %40 = vector.shape_cast %34 : vector<256x96xf32> to vector<1x256x96xf32>
    tpu.vector_store %arg9[%c1_31, %c0_32, %c0_33], %40 {strides = array<i32>} : memref<2x256x96xf32, #tpu.memory_space<vmem>>, vector<1x256x96xf32>,
    %c1_34 = arith.constant 1 : index
    %c0_35 = arith.constant 0 : index
    %c0_36 = arith.constant 0 : index
    %41 = vector.load %arg10[%c1_34, %c0_35, %c0_36] : memref<2x256x32xf32, #tpu.memory_space<vmem>>, vector<1x256x32xf32>
    %42 = vector.shape_cast %41 : vector<1x256x32xf32> to vector<256x32xf32>
    %43 = vector.shape_cast %37 : vector<256x32xf32> to vector<1x256x32xf32>
    tpu.vector_store %arg10[%c1_34, %c0_35, %c0_36], %43 {strides = array<i32>} : memref<2x256x32xf32, #tpu.memory_space<vmem>>, vector<1x256x32xf32>,
    %cst_37 = arith.constant dense<0.000000e+00> : vector<96xf32>
    %44 = vector.multi_reduction <add>, %34, %cst_37 [0] : vector<256x96xf32> to vector<96xf32>
    %45 = vector.shape_cast %44 : vector<96xf32> to vector<1x96xf32>
    %46 = arith.addf %20, %45 : vector<1x96xf32>
    %47 = arith.mulf %34, %34 : vector<256x96xf32>
    %cst_38 = arith.constant dense<0.000000e+00> : vector<96xf32>
    %48 = vector.multi_reduction <add>, %47, %cst_38 [0] : vector<256x96xf32> to vector<96xf32>
    %49 = vector.shape_cast %48 : vector<96xf32> to vector<1x96xf32>
    %50 = arith.addf %24, %49 : vector<1x96xf32>
    %cst_39 = arith.constant dense<0.000000e+00> : vector<32xf32>
    %51 = vector.multi_reduction <add>, %37, %cst_39 [0] : vector<256x32xf32> to vector<32xf32>
    %52 = vector.shape_cast %51 : vector<32xf32> to vector<1x32xf32>
    %53 = arith.addf %27, %52 : vector<1x32xf32>
    %54 = arith.mulf %37, %37 : vector<256x32xf32>
    %cst_40 = arith.constant dense<0.000000e+00> : vector<32xf32>
    %55 = vector.multi_reduction <add>, %54, %cst_40 [0] : vector<256x32xf32> to vector<32xf32>
    %56 = vector.shape_cast %55 : vector<32xf32> to vector<1x32xf32>
    %57 = arith.addf %31, %56 : vector<1x32xf32>
    %cst_41 = arith.constant 0.001953125 : f32
    %58 = vector.broadcast %cst_41 : f32 to vector<1x96xf32>
    %59 = arith.mulf %46, %58 : vector<1x96xf32>
    %cst_42 = arith.constant 0.001953125 : f32
    %60 = vector.broadcast %cst_42 : f32 to vector<1x96xf32>
    %61 = arith.mulf %50, %60 : vector<1x96xf32>
    %62 = arith.mulf %59, %59 : vector<1x96xf32>
    %63 = arith.subf %61, %62 : vector<1x96xf32>
    %cst_43 = arith.constant 0.000000e+00 : f32
    %64 = vector.broadcast %cst_43 : f32 to vector<1x96xf32>
    %65 = arith.maximumf %63, %64 : vector<1x96xf32>
    %cst_44 = arith.constant 0.001953125 : f32
    %66 = vector.broadcast %cst_44 : f32 to vector<1x32xf32>
    %67 = arith.mulf %53, %66 : vector<1x32xf32>
    %cst_45 = arith.constant 0.001953125 : f32
    %68 = vector.broadcast %cst_45 : f32 to vector<1x32xf32>
    %69 = arith.mulf %57, %68 : vector<1x32xf32>
    %70 = arith.mulf %67, %67 : vector<1x32xf32>
    %71 = arith.subf %69, %70 : vector<1x32xf32>
    %cst_46 = arith.constant 0.000000e+00 : f32
    %72 = vector.broadcast %cst_46 : f32 to vector<1x32xf32>
    %73 = arith.maximumf %71, %72 : vector<1x32xf32>
    %c0_47 = arith.constant 0 : index
    %c0_48 = arith.constant 0 : index
    %74 = vector.load %arg5[%c0_47, %c0_48] : memref<2x96xf32, #tpu.memory_space<vmem>>, vector<1x96xf32>
    %cst_49 = arith.constant 9.99999974E-6 : f32
    %75 = vector.broadcast %cst_49 : f32 to vector<1x96xf32>
    %76 = arith.addf %65, %75 : vector<1x96xf32>
    %77 = math.rsqrt %76 : vector<1x96xf32>
    %78 = arith.mulf %74, %77 : vector<1x96xf32>
    %c1_50 = arith.constant 1 : index
    %c0_51 = arith.constant 0 : index
    %79 = vector.load %arg5[%c1_50, %c0_51] : memref<2x96xf32, #tpu.memory_space<vmem>>, vector<1x96xf32>
    %80 = arith.mulf %59, %78 : vector<1x96xf32>
    %81 = arith.subf %79, %80 : vector<1x96xf32>
    %c0_52 = arith.constant 0 : index
    %c0_53 = arith.constant 0 : index
    %82 = vector.load %arg6[%c0_52, %c0_53] : memref<2x32xf32, #tpu.memory_space<vmem>>, vector<1x32xf32>
    %cst_54 = arith.constant 9.99999974E-6 : f32
    %83 = vector.broadcast %cst_54 : f32 to vector<1x32xf32>
    %84 = arith.addf %73, %83 : vector<1x32xf32>
    %85 = math.rsqrt %84 : vector<1x32xf32>
    %86 = arith.mulf %82, %85 : vector<1x32xf32>
    %c1_55 = arith.constant 1 : index
    %c0_56 = arith.constant 0 : index
    %87 = vector.load %arg6[%c1_55, %c0_56] : memref<2x32xf32, #tpu.memory_space<vmem>>, vector<1x32xf32>
    %88 = arith.mulf %67, %86 : vector<1x32xf32>
    %89 = arith.subf %87, %88 : vector<1x32xf32>
    %c0_57 = arith.constant 0 : index
    %c0_58 = arith.constant 0 : index
    %c0_59 = arith.constant 0 : index
    %90 = vector.load %arg9[%c0_57, %c0_58, %c0_59] : memref<2x256x96xf32, #tpu.memory_space<vmem>>, vector<1x256x96xf32>
    %91 = vector.shape_cast %90 : vector<1x256x96xf32> to vector<256x96xf32>
    %92 = vector.broadcast %78 : vector<1x96xf32> to vector<256x96xf32>
    %93 = arith.mulf %91, %92 : vector<256x96xf32>
    %94 = vector.broadcast %81 : vector<1x96xf32> to vector<256x96xf32>
    %95 = arith.addf %93, %94 : vector<256x96xf32>
    %c0_60 = arith.constant 0 : index
    %c0_61 = arith.constant 0 : index
    %c0_62 = arith.constant 0 : index
    %96 = vector.load %arg7[%c0_60, %c0_61, %c0_62] : memref<2x256x96xf32, #tpu.memory_space<vmem>>, vector<1x256x96xf32>
    %97 = vector.shape_cast %96 : vector<1x256x96xf32> to vector<256x96xf32>
    %98 = vector.shape_cast %95 : vector<256x96xf32> to vector<1x256x96xf32>
    tpu.vector_store %arg7[%c0_60, %c0_61, %c0_62], %98 {strides = array<i32>} : memref<2x256x96xf32, #tpu.memory_space<vmem>>, vector<1x256x96xf32>,
    %c0_63 = arith.constant 0 : index
    %c0_64 = arith.constant 0 : index
    %c0_65 = arith.constant 0 : index
    %99 = vector.load %arg10[%c0_63, %c0_64, %c0_65] : memref<2x256x32xf32, #tpu.memory_space<vmem>>, vector<1x256x32xf32>
    %100 = vector.shape_cast %99 : vector<1x256x32xf32> to vector<256x32xf32>
    %101 = vector.broadcast %86 : vector<1x32xf32> to vector<256x32xf32>
    %102 = arith.mulf %100, %101 : vector<256x32xf32>
    %103 = vector.broadcast %89 : vector<1x32xf32> to vector<256x32xf32>
    %104 = arith.addf %102, %103 : vector<256x32xf32>
    %105 = arith.negf %104 : vector<256x32xf32>
    %106 = math.exp %105 : vector<256x32xf32>
    %cst_66 = arith.constant 1.000000e+00 : f32
    %107 = vector.broadcast %cst_66 : f32 to vector<256x32xf32>
    %108 = arith.addf %107, %106 : vector<256x32xf32>
    %109 = arith.divf %107, %108 : vector<256x32xf32>
    %c0_67 = arith.constant 0 : index
    %c0_68 = arith.constant 0 : index
    %c0_69 = arith.constant 0 : index
    %110 = vector.load %arg8[%c0_67, %c0_68, %c0_69] : memref<2x256x32xf32, #tpu.memory_space<vmem>>, vector<1x256x32xf32>
    %111 = vector.shape_cast %110 : vector<1x256x32xf32> to vector<256x32xf32>
    %112 = vector.shape_cast %109 : vector<256x32xf32> to vector<1x256x32xf32>
    tpu.vector_store %arg8[%c0_67, %c0_68, %c0_69], %112 {strides = array<i32>} : memref<2x256x32xf32, #tpu.memory_space<vmem>>, vector<1x256x32xf32>,
    %c1_70 = arith.constant 1 : index
    %c0_71 = arith.constant 0 : index
    %c0_72 = arith.constant 0 : index
    %113 = vector.load %arg9[%c1_70, %c0_71, %c0_72] : memref<2x256x96xf32, #tpu.memory_space<vmem>>, vector<1x256x96xf32>
    %114 = vector.shape_cast %113 : vector<1x256x96xf32> to vector<256x96xf32>
    %115 = vector.broadcast %78 : vector<1x96xf32> to vector<256x96xf32>
    %116 = arith.mulf %114, %115 : vector<256x96xf32>
    %117 = vector.broadcast %81 : vector<1x96xf32> to vector<256x96xf32>
    %118 = arith.addf %116, %117 : vector<256x96xf32>
    %c1_73 = arith.constant 1 : index
    %c0_74 = arith.constant 0 : index
    %c0_75 = arith.constant 0 : index
    %119 = vector.load %arg7[%c1_73, %c0_74, %c0_75] : memref<2x256x96xf32, #tpu.memory_space<vmem>>, vector<1x256x96xf32>
    %120 = vector.shape_cast %119 : vector<1x256x96xf32> to vector<256x96xf32>
    %121 = vector.shape_cast %118 : vector<256x96xf32> to vector<1x256x96xf32>
    tpu.vector_store %arg7[%c1_73, %c0_74, %c0_75], %121 {strides = array<i32>} : memref<2x256x96xf32, #tpu.memory_space<vmem>>, vector<1x256x96xf32>,
    %c1_76 = arith.constant 1 : index
    %c0_77 = arith.constant 0 : index
    %c0_78 = arith.constant 0 : index
    %122 = vector.load %arg10[%c1_76, %c0_77, %c0_78] : memref<2x256x32xf32, #tpu.memory_space<vmem>>, vector<1x256x32xf32>
    %123 = vector.shape_cast %122 : vector<1x256x32xf32> to vector<256x32xf32>
    %124 = vector.broadcast %86 : vector<1x32xf32> to vector<256x32xf32>
    %125 = arith.mulf %123, %124 : vector<256x32xf32>
    %126 = vector.broadcast %89 : vector<1x32xf32> to vector<256x32xf32>
    %127 = arith.addf %125, %126 : vector<256x32xf32>
    %128 = arith.negf %127 : vector<256x32xf32>
    %129 = math.exp %128 : vector<256x32xf32>
    %cst_79 = arith.constant 1.000000e+00 : f32
    %130 = vector.broadcast %cst_79 : f32 to vector<256x32xf32>
    %131 = arith.addf %130, %129 : vector<256x32xf32>
    %132 = arith.divf %130, %131 : vector<256x32xf32>
    %c1_80 = arith.constant 1 : index
    %c0_81 = arith.constant 0 : index
    %c0_82 = arith.constant 0 : index
    %133 = vector.load %arg8[%c1_80, %c0_81, %c0_82] : memref<2x256x32xf32, #tpu.memory_space<vmem>>, vector<1x256x32xf32>
    %134 = vector.shape_cast %133 : vector<1x256x32xf32> to vector<256x32xf32>
    %135 = vector.shape_cast %132 : vector<256x32xf32> to vector<1x256x32xf32>
    tpu.vector_store %arg8[%c1_80, %c0_81, %c0_82], %135 {strides = array<i32>} : memref<2x256x32xf32, #tpu.memory_space<vmem>>, vector<1x256x32xf32>,
    return
  }
  func.func @transform_0(%arg0: i32) -> (i32, i32, i32) {
    %c0_i32 = arith.constant 0 : i32
    %c0_i32_0 = arith.constant 0 : i32
    %c0_i32_1 = arith.constant 0 : i32
    %c0_i32_2 = arith.constant 0 : i32
    return %c0_i32, %c0_i32_0, %c0_i32_1 : i32, i32, i32
  }
  func.func @transform_1(%arg0: i32) -> (i32, i32, i32) {
    %c0_i32 = arith.constant 0 : i32
    %c0_i32_0 = arith.constant 0 : i32
    %c0_i32_1 = arith.constant 0 : i32
    %c0_i32_2 = arith.constant 0 : i32
    return %c0_i32, %c0_i32_0, %c0_i32_1 : i32, i32, i32
  }
  func.func @transform_2(%arg0: i32) -> (i32, i32) {
    %c0_i32 = arith.constant 0 : i32
    %c0_i32_0 = arith.constant 0 : i32
    %c0_i32_1 = arith.constant 0 : i32
    return %c0_i32, %c0_i32_0 : i32, i32
  }
  func.func @transform_3(%arg0: i32) -> (i32, i32) {
    %c0_i32 = arith.constant 0 : i32
    %c0_i32_0 = arith.constant 0 : i32
    %c0_i32_1 = arith.constant 0 : i32
    return %c0_i32, %c0_i32_0 : i32, i32
  }
  func.func @transform_4(%arg0: i32) -> (i32, i32) {
    %c0_i32 = arith.constant 0 : i32
    %c0_i32_0 = arith.constant 0 : i32
    %c0_i32_1 = arith.constant 0 : i32
    return %c0_i32, %c0_i32_0 : i32, i32
  }
  func.func @transform_5(%arg0: i32) -> (i32, i32) {
    %c0_i32 = arith.constant 0 : i32
    %c0_i32_0 = arith.constant 0 : i32
    %c0_i32_1 = arith.constant 0 : i32
    return %c0_i32, %c0_i32_0 : i32, i32
  }
  func.func @transform_6(%arg0: i32) -> (i32, i32, i32) {
    %c0_i32 = arith.constant 0 : i32
    %c0_i32_0 = arith.constant 0 : i32
    %c0_i32_1 = arith.constant 0 : i32
    %c0_i32_2 = arith.constant 0 : i32
    return %c0_i32, %c0_i32_0, %c0_i32_1 : i32, i32, i32
  }
  func.func @transform_7(%arg0: i32) -> (i32, i32, i32) {
    %c0_i32 = arith.constant 0 : i32
    %c0_i32_0 = arith.constant 0 : i32
    %c0_i32_1 = arith.constant 0 : i32
    %c0_i32_2 = arith.constant 0 : i32
    return %c0_i32, %c0_i32_0, %c0_i32_1 : i32, i32, i32
  }
}

</mosaic_0001>

<llo_original>
// kernel: primary_quat_caps.1
$region0: #{primary_quat_caps.1}
  #allocation0 [shape = 'u32[]', space=smem, size = 0x4, offset = 0x4, fixed_abs, tag = 'smem constant byte address 0x4 - core index']
  #allocation1 [shape = 'u32[144,128]{1,0:T(1,128)}', space=vmem, size = 0x12000, scoped, tag = 'internal scratch']
  #allocation2 [shape = 'f32[2,256,96]{2,1,0:T(8,128)}', space=vmem, size = 0x40000, scoped, tag = 'scratch operand']
  #allocation3 [shape = 'f32[2,256,32]{2,1,0:T(8,128)}', space=vmem, size = 0x40000, scoped, tag = 'scratch operand']
  %s0 = inlined_call_operand.vmem [shape: f32[2,64,256], index: 0, kind: input, shape index: {}]
  %s1 = inlined_call_operand.vmem [shape: f32[2,32,256], index: 1, kind: input, shape index: {}]
  %s2 = inlined_call_operand.hbm [shape: f32[64,96], index: 2, kind: input, shape index: {}]
  %s3 = inlined_call_operand.hbm [shape: f32[32,32], index: 3, kind: input, shape index: {}]
  %s4 = inlined_call_operand.vmem [shape: f32[2,96], index: 4, kind: input, shape index: {}]
  %s5 = inlined_call_operand.vmem [shape: f32[2,32], index: 5, kind: input, shape index: {}]
  %s6 = inlined_call_operand.vmem [shape: f32[2,256,96], index: 6, kind: output, shape index: {0}]
  %s7 = inlined_call_operand.hbm [shape: f32[2,256,32], index: 7, kind: output, shape index: {1}]
  %8 = xla_tuple %s6, %s7
  %s9 = sld [smem:[#allocation0]]
  $region50: #{primary_quat_caps.1} parent=0
    _
  %s11 = ssub.s32 1, %s9
  %s12 = scalar_select 0, %s11, %s9
  $region1: #{primary_quat_caps.1} parent=0
    #allocation4 [shape = 'u8[32768]{0}', space=vmem, size = 0x8000, scoped, tag = 'input window, operand 2, single buffered']
    #allocation5 [shape = 's32[1]{0}', space=sflag, size = 0x4, scoped, tag = 'scoped memory for primary_quat_caps.1']
    #allocation6 [shape = 's32[1]{0}', space=sflag, size = 0x4, scoped, tag = 'scoped memory for primary_quat_caps.1']
    #allocation7 [shape = 'u8[16384]{0}', space=vmem, size = 0x4000, scoped, tag = 'input window, operand 3, single buffered']
    #allocation8 [shape = 's32[1]{0}', space=sflag, size = 0x4, scoped, tag = 'scoped memory for primary_quat_caps.1']
    #allocation9 [shape = 'u8[262144]{0}', space=vmem, size = 0x40000, scoped, tag = 'output window, operand 1, single buffered']
    %13 = vsyncpa [#allocation5], 0
    %14 = vsyncpa [#allocation8], 0
    %15 = vsyncpa [#allocation6], 0
    // Predicated region
    $region2: #{primary_quat_caps.1} parent=1 // pred_check
      _
    $region3: #{primary_quat_caps.1} parent=1 // pred_check_branch
      %17 = sbr.rel (0) target = $region5
    $region4: #{primary_quat_caps.1} parent=1 // pred_region
      _
    $region5: #{primary_quat_caps.1} parent=1 // pred_fallthru
      _
    // Predicated region
    $region6: #{primary_quat_caps.1} parent=1 // pred_check
      _
    $region7: #{primary_quat_caps.1} parent=1 // pred_check_branch
      %19 = sbr.rel (0) target = $region9
    $region8: #{primary_quat_caps.1} parent=1 // pred_region
      _
    $region9: #{primary_quat_caps.1} parent=1 // pred_fallthru
      _
    // Predicated region
    $region10: #{primary_quat_caps.1} parent=1 // pred_check
      _
    $region11: #{primary_quat_caps.1} parent=1 // pred_check_branch
      %21 = sbr.rel (0) target = $region13
    $region12: #{primary_quat_caps.1} parent=1 // pred_region
      %s23 = ssub.s32 1024, 1024
      %24 = vsyncadd [#allocation5], %s23
      %s25 = sshll.u32 [#allocation4], 4
      %s26 = int_to_ptr.vmem [resolvable:$true] %s25
      %31 = dma.hbm_to_vmem [thread:$0]  %s2, 1024, %s26, [#allocation5], 128, 128, 8
    $region13: #{primary_quat_caps.1} parent=1 // pred_fallthru
      _
    // Predicated region
    $region14: #{primary_quat_caps.1} parent=1 // pred_check
      _
    $region15: #{primary_quat_caps.1} parent=1 // pred_check_branch
      %33 = sbr.rel (0) target = $region17
    $region16: #{primary_quat_caps.1} parent=1 // pred_region
      %s35 = ssub.s32 512, 512
      %36 = vsyncadd [#allocation8], %s35
      %s37 = sshll.u32 [#allocation7], 4
      %s38 = int_to_ptr.vmem [resolvable:$true] %s37
      %43 = dma.hbm_to_vmem [thread:$0]  %s3, 512, %s38, [#allocation8], 128, 128, 8
    $region17: #{primary_quat_caps.1} parent=1 // pred_fallthru
      _
    // Predicated region
    $region18: #{primary_quat_caps.1} parent=1 // pred_check
      _
    $region19: #{primary_quat_caps.1} parent=1 // pred_check_branch
      %45 = sbr.rel (0) target = $region21
    $region20: #{primary_quat_caps.1} parent=1 // pred_region
      _
    $region21: #{primary_quat_caps.1} parent=1 // pred_fallthru
      _
    // Predicated region
    $region22: #{primary_quat_caps.1} parent=1 // pred_check
      _
    $region23: #{primary_quat_caps.1} parent=1 // pred_check_branch
      %47 = sbr.rel (0) target = $region25
    $region24: #{primary_quat_caps.1} parent=1 // pred_region
      _
    $region25: #{primary_quat_caps.1} parent=1 // pred_fallthru
      _
    // Predicated region
    $region26: #{primary_quat_caps.1} parent=1 // pred_check
      _
    $region27: #{primary_quat_caps.1} parent=1 // pred_check_branch
      %49 = sbr.rel (0) target = $region29
    $region28: #{primary_quat_caps.1} parent=1 // pred_region
      %50 = dma.done [#allocation5], 1024
    $region29: #{primary_quat_caps.1} parent=1 // pred_fallthru
      _
    // Predicated region
    $region30: #{primary_quat_caps.1} parent=1 // pred_check
      _
    $region31: #{primary_quat_caps.1} parent=1 // pred_check_branch
      %52 = sbr.rel (0) target = $region33
    $region32: #{primary_quat_caps.1} parent=1 // pred_region
      %53 = dma.done [#allocation8], 512
    $region33: #{primary_quat_caps.1} parent=1 // pred_fallthru
      _
    %v54 = vld [vmem:[#allocation4] sm:$0xff]
    %v55 = vld [vmem:[#allocation4 + $0x8] sm:$0xff]
    %v56 = vld [vmem:[#allocation4 + $0x10] sm:$0xff]
    %v57 = vld [vmem:[#allocation4 + $0x18] sm:$0xff]
    %v58 = vld [vmem:[#allocation4 + $0x20] sm:$0xff]
    %v59 = vld [vmem:[#allocation4 + $0x28] sm:$0xff]
    %v60 = vld [vmem:[#allocation4 + $0x30] sm:$0xff]
    %v61 = vld [vmem:[#allocation4 + $0x38] sm:$0xff]
    %v62 = vld [vmem:[#allocation7] sm:$0xff]
    %v63 = vld [vmem:[#allocation7 + $0x8] sm:$0xff]
    %v64 = vld [vmem:[#allocation7 + $0x10] sm:$0xff]
    %v65 = vld [vmem:[#allocation7 + $0x18] sm:$0xff]
    %v66 = vld [vmem:[%s0] sm:$0xff]
    %v67 = vld [vmem:[%s0 + $0x8] sm:$0xff]
    %v68 = vld [vmem:[%s0 + $0x10] sm:$0xff]
    %v69 = vld [vmem:[%s0 + $0x18] sm:$0xff]
    %v70 = vld [vmem:[%s0 + $0x20] sm:$0xff]
    %v71 = vld [vmem:[%s0 + $0x28] sm:$0xff]
    %v72 = vld [vmem:[%s0 + $0x30] sm:$0xff]
    %v73 = vld [vmem:[%s0 + $0x38] sm:$0xff]
    %v74 = vld [vmem:[%s0 + $0x40] sm:$0xff]
    %v75 = vld [vmem:[%s0 + $0x48] sm:$0xff]
    %v76 = vld [vmem:[%s0 + $0x50] sm:$0xff]
    %v77 = vld [vmem:[%s0 + $0x58] sm:$0xff]
    %v78 = vld [vmem:[%s0 + $0x60] sm:$0xff]
    %v79 = vld [vmem:[%s0 + $0x68] sm:$0xff]
    %v80 = vld [vmem:[%s0 + $0x70] sm:$0xff]
    %v81 = vld [vmem:[%s0 + $0x78] sm:$0xff]
    %82 = vxpose.xlu0.b32.start [1/16] %v66, 128
    %83 = vxpose.xlu0.b32.cont [2/16] %v68, 128
    %84 = vxpose.xlu0.b32.cont [3/16] %v70, 128
    %85 = vxpose.xlu0.b32.cont [4/16] %v72, 128
    %86 = vxpose.xlu0.b32.cont [5/16] %v74, 128
    %87 = vxpose.xlu0.b32.cont [6/16] %v76, 128
    %88 = vxpose.xlu0.b32.cont [7/16] %v78, 128
    %89 = vxpose.xlu0.b32.cont [8/16] %v80, 128
    %90 = vxpose.xlu0.b32.cont [9/16] 0.0, 128
    %91 = vxpose.xlu0.b32.cont [10/16] 0.0, 128
    %92 = vxpose.xlu0.b32.cont [11/16] 0.0, 128
    %93 = vxpose.xlu0.b32.cont [12/16] 0.0, 128
    %94 = vxpose.xlu0.b32.cont [13/16] 0.0, 128
    %95 = vxpose.xlu0.b32.cont [14/16] 0.0, 128
    %96 = vxpose.xlu0.b32.cont [15/16] 0.0, 128
    %97 = vxpose.xlu0.b32.end [16/16] 0.0, 128
    %v98 = vpop.trf.xlu0
    %v99 = vpop.trf.xlu0
    %v100 = vpop.trf.xlu0
    %v101 = vpop.trf.xlu0
    %v102 = vpop.trf.xlu0
    %v103 = vpop.trf.xlu0
    %v104 = vpop.trf.xlu0
    %v105 = vpop.trf.xlu0
    %v106 = vpop.trf.xlu0
    %v107 = vpop.trf.xlu0
    %v108 = vpop.trf.xlu0
    %v109 = vpop.trf.xlu0
    %v110 = vpop.trf.xlu0
    %v111 = vpop.trf.xlu0
    %v112 = vpop.trf.xlu0
    %v113 = vpop.trf.xlu0
    %114 = vxpose.xlu0.b32.start [1/16] %v67, 128
    %115 = vxpose.xlu0.b32.cont [2/16] %v69, 128
    %116 = vxpose.xlu0.b32.cont [3/16] %v71, 128
    %117 = vxpose.xlu0.b32.cont [4/16] %v73, 128
    %118 = vxpose.xlu0.b32.cont [5/16] %v75, 128
    %119 = vxpose.xlu0.b32.cont [6/16] %v77, 128
    %120 = vxpose.xlu0.b32.cont [7/16] %v79, 128
    %121 = vxpose.xlu0.b32.cont [8/16] %v81, 128
    %122 = vxpose.xlu0.b32.cont [9/16] 0.0, 128
    %123 = vxpose.xlu0.b32.cont [10/16] 0.0, 128
    %124 = vxpose.xlu0.b32.cont [11/16] 0.0, 128
    %125 = vxpose.xlu0.b32.cont [12/16] 0.0, 128
    %126 = vxpose.xlu0.b32.cont [13/16] 0.0, 128
    %127 = vxpose.xlu0.b32.cont [14/16] 0.0, 128
    %128 = vxpose.xlu0.b32.cont [15/16] 0.0, 128
    %129 = vxpose.xlu0.b32.end [16/16] 0.0, 128
    %v130 = vpop.trf.xlu0
    %v131 = vpop.trf.xlu0
    %v132 = vpop.trf.xlu0
    %v133 = vpop.trf.xlu0
    %v134 = vpop.trf.xlu0
    %v135 = vpop.trf.xlu0
    %v136 = vpop.trf.xlu0
    %v137 = vpop.trf.xlu0
    %v138 = vpop.trf.xlu0
    %v139 = vpop.trf.xlu0
    %v140 = vpop.trf.xlu0
    %v141 = vpop.trf.xlu0
    %v142 = vpop.trf.xlu0
    %v143 = vpop.trf.xlu0
    %v144 = vpop.trf.xlu0
    %v145 = vpop.trf.xlu0
    %vm146 = vcmask 523264
    %v148 = vsel %vm146, %v98, 0
    %v151 = vsel %vm146, %v99, 0
    %v154 = vsel %vm146, %v100, 0
    %v157 = vsel %vm146, %v101, 0
    %v160 = vsel %vm146, %v102, 0
    %v163 = vsel %vm146, %v103, 0
    %v166 = vsel %vm146, %v104, 0
    %v169 = vsel %vm146, %v105, 0
    %v172 = vsel %vm146, %v106, 0
    %v175 = vsel %vm146, %v107, 0
    %v178 = vsel %vm146, %v108, 0
    %v181 = vsel %vm146, %v109, 0
    %v184 = vsel %vm146, %v110, 0
    %v187 = vsel %vm146, %v111, 0
    %v190 = vsel %vm146, %v112, 0
    %v193 = vsel %vm146, %v113, 0
    %v196 = vsel %vm146, %v130, 0
    %v199 = vsel %vm146, %v131, 0
    %v202 = vsel %vm146, %v132, 0
    %v205 = vsel %vm146, %v133, 0
    %v208 = vsel %vm146, %v134, 0
    %v211 = vsel %vm146, %v135, 0
    %v214 = vsel %vm146, %v136, 0
    %v217 = vsel %vm146, %v137, 0
    %v220 = vsel %vm146, %v138, 0
    %v223 = vsel %vm146, %v139, 0
    %v226 = vsel %vm146, %v140, 0
    %v229 = vsel %vm146, %v141, 0
    %v232 = vsel %vm146, %v142, 0
    %v235 = vsel %vm146, %v143, 0
    %v238 = vsel %vm146, %v144, 0
    %v241 = vsel %vm146, %v145, 0
    %243 = vmatprep.subr.mxu0 0.0
    %244 = vmatpush1.msra.mxu0 %v54
    %245 = vmatprep.subr.mxu0 0.0
    %246 = vmatpush1.msra.mxu0 %v55
    %247 = vmatprep.subr.mxu0 0.0
    %248 = vmatpush1.msra.mxu0 %v56
    %249 = vmatprep.subr.mxu0 0.0
    %250 = vmatpush1.msra.mxu0 %v57
    %251 = vmatprep.subr.mxu0 0.0
    %252 = vmatpush1.msra.mxu0 %v58
    %253 = vmatprep.subr.mxu0 0.0
    %254 = vmatpush1.msra.mxu0 %v59
    %255 = vmatprep.subr.mxu0 0.0
    %256 = vmatpush1.msra.mxu0 %v60
    %257 = vmatprep.subr.mxu0 0.0
    %258 = vmatpush1.msra.mxu0 %v61
    %259 = vmatprep.subr.mxu0 0.0
    %260 = vmatpush1.msra.mxu0 0.0
    %261 = vmatprep.subr.mxu0 0.0
    %262 = vmatpush1.msra.mxu0 0.0
    %263 = vmatprep.subr.mxu0 0.0
    %264 = vmatpush1.msra.mxu0 0.0
    %265 = vmatprep.subr.mxu0 0.0
    %266 = vmatpush1.msra.mxu0 0.0
    %267 = vmatprep.subr.mxu0 0.0
    %268 = vmatpush1.msra.mxu0 0.0
    %269 = vmatprep.subr.mxu0 0.0
    %270 = vmatpush1.msra.mxu0 0.0
    %271 = vmatprep.subr.mxu0 0.0
    %272 = vmatpush1.msra.mxu0 0.0
    %273 = vmatprep.subr.mxu0 0.0
    %274 = vmatpush1.msra.mxu0 0.0
    %275 = vmatprep.subr.mxu0 0.0
    %276 = vmatpush1.msra.mxu0 0.0
    %277 = vmatprep.subr.mxu0 0.0
    %278 = vmatpush1.msra.mxu0 0.0
    %279 = vmatprep.subr.mxu0 0.0
    %280 = vmatpush1.msra.mxu0 0.0
    %281 = vmatprep.subr.mxu0 0.0
    %282 = vmatpush1.msra.mxu0 0.0
    %283 = vmatprep.subr.mxu0 0.0
    %284 = vmatpush1.msra.mxu0 0.0
    %285 = vmatprep.subr.mxu0 0.0
    %286 = vmatpush1.msra.mxu0 0.0
    %287 = vmatprep.subr.mxu0 0.0
    %288 = vmatpush1.msra.mxu0 0.0
    %289 = vmatprep.subr.mxu0 0.0
    %290 = vmatpush1.msra.mxu0 0.0
    %291 = vmatprep.subr.mxu0 0.0
    %292 = vmatpush1.msra.mxu0 0.0
    %293 = vmatprep.subr.mxu0 0.0
    %294 = vmatpush1.msra.mxu0 0.0
    %295 = vmatprep.subr.mxu0 0.0
    %296 = vmatpush1.msra.mxu0 0.0
    %297 = vmatprep.subr.mxu0 0.0
    %298 = vmatpush1.msra.mxu0 0.0
    %299 = vmatprep.subr.mxu0 0.0
    %300 = vmatpush1.msra.mxu0 0.0
    %301 = vmatprep.subr.mxu0 0.0
    %302 = vmatpush1.msra.mxu0 0.0
    %303 = vmatprep.subr.mxu0 0.0
    %304 = vmatpush1.msra.mxu0 0.0
    %305 = vmatprep.subr.mxu0 0.0
    %306 = vmatpush1.msra.mxu0 0.0
    %307 = vmatprep.mubr.f32.mxu0 0.0
    %308 = vmatmul.mubr.f32.gmra.mrb[0].mxu0 %v148
    %v309 = vpop.f32.mrb[0].mxu0
    %v310 = vadd.f32 0.0, %v309
    %v311 = vpop.f32.mrb[0].mxu0
    %312 = vmatprep.mubr.f32.mxu0 0.0
    %313 = vmatmul.mubr.f32.gmra.mrb[0].mxu0 %v151
    %v314 = vpop.f32.mrb[0].mxu0
    %v315 = vadd.f32 0.0, %v314
    %v316 = vpop.f32.mrb[0].mxu0
    %317 = vmatprep.mubr.f32.mxu0 0.0
    %318 = vmatmul.mubr.f32.gmra.mrb[0].mxu0 %v154
    %v319 = vpop.f32.mrb[0].mxu0
    %v320 = vadd.f32 0.0, %v319
    %v321 = vpop.f32.mrb[0].mxu0
    %322 = vmatprep.mubr.f32.mxu0 0.0
    %323 = vmatmul.mubr.f32.gmra.mrb[0].mxu0 %v157
    %v324 = vpop.f32.mrb[0].mxu0
    %v325 = vadd.f32 0.0, %v324
    %v326 = vpop.f32.mrb[0].mxu0
    %327 = vmatprep.mubr.f32.mxu0 0.0
    %328 = vmatmul.mubr.f32.gmra.mrb[0].mxu0 %v160
    %v329 = vpop.f32.mrb[0].mxu0
    %v330 = vadd.f32 0.0, %v329
    %v331 = vpop.f32.mrb[0].mxu0
    %332 = vmatprep.mubr.f32.mxu0 0.0
    %333 = vmatmul.mubr.f32.gmra.mrb[0].mxu0 %v163
    %v334 = vpop.f32.mrb[0].mxu0
    %v335 = vadd.f32 0.0, %v334
    %v336 = vpop.f32.mrb[0].mxu0
    %337 = vmatprep.mubr.f32.mxu0 0.0
    %338 = vmatmul.mubr.f32.gmra.mrb[0].mxu0 %v166
    %v339 = vpop.f32.mrb[0].mxu0
    %v340 = vadd.f32 0.0, %v339
    %v341 = vpop.f32.mrb[0].mxu0
    %342 = vmatprep.mubr.f32.mxu0 0.0
    %343 = vmatmul.mubr.f32.gmra.mrb[0].mxu0 %v169
    %v344 = vpop.f32.mrb[0].mxu0
    %v345 = vadd.f32 0.0, %v344
    %v346 = vpop.f32.mrb[0].mxu0
    %347 = vmatprep.mubr.f32.mxu0 0.0
    %348 = vmatmul.mubr.f32.gmra.mrb[0].mxu0 %v172
    %v349 = vpop.f32.mrb[0].mxu0
    %v350 = vadd.f32 0.0, %v349
    %v351 = vpop.f32.mrb[0].mxu0
    %352 = vmatprep.mubr.f32.mxu0 0.0
    %353 = vmatmul.mubr.f32.gmra.mrb[0].mxu0 %v175
    %v354 = vpop.f32.mrb[0].mxu0
    %v355 = vadd.f32 0.0, %v354
    %v356 = vpop.f32.mrb[0].mxu0
    %357 = vmatprep.mubr.f32.mxu0 0.0
    %358 = vmatmul.mubr.f32.gmra.mrb[0].mxu0 %v178
    %v359 = vpop.f32.mrb[0].mxu0
    %v360 = vadd.f32 0.0, %v359
    %v361 = vpop.f32.mrb[0].mxu0
    %362 = vmatprep.mubr.f32.mxu0 0.0
    %363 = vmatmul.mubr.f32.gmra.mrb[0].mxu0 %v181
    %v364 = vpop.f32.mrb[0].mxu0
    %v365 = vadd.f32 0.0, %v364
    %v366 = vpop.f32.mrb[0].mxu0
    %367 = vmatprep.mubr.f32.mxu0 0.0
    %368 = vmatmul.mubr.f32.gmra.mrb[0].mxu0 %v184
    %v369 = vpop.f32.mrb[0].mxu0
    %v370 = vadd.f32 0.0, %v369
    %v371 = vpop.f32.mrb[0].mxu0
    %372 = vmatprep.mubr.f32.mxu0 0.0
    %373 = vmatmul.mubr.f32.gmra.mrb[0].mxu0 %v187
    %v374 = vpop.f32.mrb[0].mxu0
    %v375 = vadd.f32 0.0, %v374
    %v376 = vpop.f32.mrb[0].mxu0
    %377 = vmatprep.mubr.f32.mxu0 0.0
    %378 = vmatmul.mubr.f32.gmra.mrb[0].mxu0 %v190
    %v379 = vpop.f32.mrb[0].mxu0
    %v380 = vadd.f32 0.0, %v379
    %v381 = vpop.f32.mrb[0].mxu0
    %382 = vmatprep.mubr.f32.mxu0 0.0
    %383 = vmatmul.mubr.f32.gmra.mrb[0].mxu0 %v193
    %v384 = vpop.f32.mrb[0].mxu0
    %v385 = vadd.f32 0.0, %v384
    %v386 = vpop.f32.mrb[0].mxu0
    %387 = vmatprep.mubr.f32.mxu0 0.0
    %388 = vmatmul.mubr.f32.gmra.mrb[0].mxu0 %v196
    %v389 = vpop.f32.mrb[0].mxu0
    %v390 = vadd.f32 0.0, %v389
    %v391 = vpop.f32.mrb[0].mxu0
    %392 = vmatprep.mubr.f32.mxu0 0.0
    %393 = vmatmul.mubr.f32.gmra.mrb[0].mxu0 %v199
    %v394 = vpop.f32.mrb[0].mxu0
    %v395 = vadd.f32 0.0, %v394
    %v396 = vpop.f32.mrb[0].mxu0
    %397 = vmatprep.mubr.f32.mxu0 0.0
    %398 = vmatmul.mubr.f32.gmra.mrb[0].mxu0 %v202
    %v399 = vpop.f32.mrb[0].mxu0
    %v400 = vadd.f32 0.0, %v399
    %v401 = vpop.f32.mrb[0].mxu0
    %402 = vmatprep.mubr.f32.mxu0 0.0
    %403 = vmatmul.mubr.f32.gmra.mrb[0].mxu0 %v205
    %v404 = vpop.f32.mrb[0].mxu0
    %v405 = vadd.f32 0.0, %v404
    %v406 = vpop.f32.mrb[0].mxu0
    %407 = vmatprep.mubr.f32.mxu0 0.0
    %408 = vmatmul.mubr.f32.gmra.mrb[0].mxu0 %v208
    %v409 = vpop.f32.mrb[0].mxu0
    %v410 = vadd.f32 0.0, %v409
    %v411 = vpop.f32.mrb[0].mxu0
    %412 = vmatprep.mubr.f32.mxu0 0.0
    %413 = vmatmul.mubr.f32.gmra.mrb[0].mxu0 %v211
    %v414 = vpop.f32.mrb[0].mxu0
    %v415 = vadd.f32 0.0, %v414
    %v416 = vpop.f32.mrb[0].mxu0
    %417 = vmatprep.mubr.f32.mxu0 0.0
    %418 = vmatmul.mubr.f32.gmra.mrb[0].mxu0 %v214
    %v419 = vpop.f32.mrb[0].mxu0
    %v420 = vadd.f32 0.0, %v419
    %v421 = vpop.f32.mrb[0].mxu0
    %422 = vmatprep.mubr.f32.mxu0 0.0
    %423 = vmatmul.mubr.f32.gmra.mrb[0].mxu0 %v217
    %v424 = vpop.f32.mrb[0].mxu0
    %v425 = vadd.f32 0.0, %v424
    %v426 = vpop.f32.mrb[0].mxu0
    %427 = vmatprep.mubr.f32.mxu0 0.0
    %428 = vmatmul.mubr.f32.gmra.mrb[0].mxu0 %v220
    %v429 = vpop.f32.mrb[0].mxu0
    %v430 = vadd.f32 0.0, %v429
    %v431 = vpop.f32.mrb[0].mxu0
    %432 = vmatprep.mubr.f32.mxu0 0.0
    %433 = vmatmul.mubr.f32.gmra.mrb[0].mxu0 %v223
    %v434 = vpop.f32.mrb[0].mxu0
    %v435 = vadd.f32 0.0, %v434
    %v436 = vpop.f32.mrb[0].mxu0
    %437 = vmatprep.mubr.f32.mxu0 0.0
    %438 = vmatmul.mubr.f32.gmra.mrb[0].mxu0 %v226
    %v439 = vpop.f32.mrb[0].mxu0
    %v440 = vadd.f32 0.0, %v439
    %v441 = vpop.f32.mrb[0].mxu0
    %442 = vmatprep.mubr.f32.mxu0 0.0
    %443 = vmatmul.mubr.f32.gmra.mrb[0].mxu0 %v229
    %v444 = vpop.f32.mrb[0].mxu0
    %v445 = vadd.f32 0.0, %v444
    %v446 = vpop.f32.mrb[0].mxu0
    %447 = vmatprep.mubr.f32.mxu0 0.0
    %448 = vmatmul.mubr.f32.gmra.mrb[0].mxu0 %v232
    %v449 = vpop.f32.mrb[0].mxu0
    %v450 = vadd.f32 0.0, %v449
    %v451 = vpop.f32.mrb[0].mxu0
    %452 = vmatprep.mubr.f32.mxu0 0.0
    %453 = vmatmul.mubr.f32.gmra.mrb[0].mxu0 %v235
    %v454 = vpop.f32.mrb[0].mxu0
    %v455 = vadd.f32 0.0, %v454
    %v456 = vpop.f32.mrb[0].mxu0
    %457 = vmatprep.mubr.f32.mxu0 0.0
    %458 = vmatmul.mubr.f32.gmra.mrb[0].mxu0 %v238
    %v459 = vpop.f32.mrb[0].mxu0
    %v460 = vadd.f32 0.0, %v459
    %v461 = vpop.f32.mrb[0].mxu0
    %462 = vmatprep.mubr.f32.mxu0 0.0
    %463 = vmatmul.mubr.f32.gmra.mrb[0].mxu0 %v241
    %v464 = vpop.f32.mrb[0].mxu0
    %v465 = vadd.f32 0.0, %v464
    %v466 = vpop.f32.mrb[0].mxu0
    %467 = vdwg.mxu0
    %v468 = vld [vmem:[%s1] sm:$0xff]
    %v469 = vld [vmem:[%s1 + $0x8] sm:$0xff]
    %v470 = vld [vmem:[%s1 + $0x10] sm:$0xff]
    %v471 = vld [vmem:[%s1 + $0x18] sm:$0xff]
    %v472 = vld [vmem:[%s1 + $0x20] sm:$0xff]
    %v473 = vld [vmem:[%s1 + $0x28] sm:$0xff]
    %v474 = vld [vmem:[%s1 + $0x30] sm:$0xff]
    %v475 = vld [vmem:[%s1 + $0x38] sm:$0xff]
    %476 = vxpose.xlu0.b32.start [1/16] %v468, 128
    %477 = vxpose.xlu0.b32.cont [2/16] %v470, 128
    %478 = vxpose.xlu0.b32.cont [3/16] %v472, 128
    %479 = vxpose.xlu0.b32.cont [4/16] %v474, 128
    %480 = vxpose.xlu0.b32.cont [5/16] 0.0, 128
    %481 = vxpose.xlu0.b32.cont [6/16] 0.0, 128
    %482 = vxpose.xlu0.b32.cont [7/16] 0.0, 128
    %483 = vxpose.xlu0.b32.cont [8/16] 0.0, 128
    %484 = vxpose.xlu0.b32.cont [9/16] 0.0, 128
    %485 = vxpose.xlu0.b32.cont [10/16] 0.0, 128
    %486 = vxpose.xlu0.b32.cont [11/16] 0.0, 128
    %487 = vxpose.xlu0.b32.cont [12/16] 0.0, 128
    %488 = vxpose.xlu0.b32.cont [13/16] 0.0, 128
    %489 = vxpose.xlu0.b32.cont [14/16] 0.0, 128
    %490 = vxpose.xlu0.b32.cont [15/16] 0.0, 128
    %491 = vxpose.xlu0.b32.end [16/16] 0.0, 128
    %v492 = vpop.trf.xlu0
    %v493 = vpop.trf.xlu0
    %v494 = vpop.trf.xlu0
    %v495 = vpop.trf.xlu0
    %v496 = vpop.trf.xlu0
    %v497 = vpop.trf.xlu0
    %v498 = vpop.trf.xlu0
    %v499 = vpop.trf.xlu0
    %v500 = vpop.trf.xlu0
    %v501 = vpop.trf.xlu0
    %v502 = vpop.trf.xlu0
    %v503 = vpop.trf.xlu0
    %v504 = vpop.trf.xlu0
    %v505 = vpop.trf.xlu0
    %v506 = vpop.trf.xlu0
    %v507 = vpop.trf.xlu0
    %508 = vxpose.xlu0.b32.start [1/16] %v469, 128
    %509 = vxpose.xlu0.b32.cont [2/16] %v471, 128
    %510 = vxpose.xlu0.b32.cont [3/16] %v473, 128
    %511 = vxpose.xlu0.b32.cont [4/16] %v475, 128
    %512 = vxpose.xlu0.b32.cont [5/16] 0.0, 128
    %513 = vxpose.xlu0.b32.cont [6/16] 0.0, 128
    %514 = vxpose.xlu0.b32.cont [7/16] 0.0, 128
    %515 = vxpose.xlu0.b32.cont [8/16] 0.0, 128
    %516 = vxpose.xlu0.b32.cont [9/16] 0.0, 128
    %517 = vxpose.xlu0.b32.cont [10/16] 0.0, 128
    %518 = vxpose.xlu0.b32.cont [11/16] 0.0, 128
    %519 = vxpose.xlu0.b32.cont [12/16] 0.0, 128
    %520 = vxpose.xlu0.b32.cont [13/16] 0.0, 128
    %521 = vxpose.xlu0.b32.cont [14/16] 0.0, 128
    %522 = vxpose.xlu0.b32.cont [15/16] 0.0, 128
    %523 = vxpose.xlu0.b32.end [16/16] 0.0, 128
    %v524 = vpop.trf.xlu0
    %v525 = vpop.trf.xlu0
    %v526 = vpop.trf.xlu0
    %v527 = vpop.trf.xlu0
    %v528 = vpop.trf.xlu0
    %v529 = vpop.trf.xlu0
    %v530 = vpop.trf.xlu0
    %v531 = vpop.trf.xlu0
    %v532 = vpop.trf.xlu0
    %v533 = vpop.trf.xlu0
    %v534 = vpop.trf.xlu0
    %v535 = vpop.trf.xlu0
    %v536 = vpop.trf.xlu0
    %v537 = vpop.trf.xlu0
    %v538 = vpop.trf.xlu0
    %v539 = vpop.trf.xlu0
    %vm540 = vcmask 261120
    %v542 = vsel %vm540, %v492, 0
    %v545 = vsel %vm540, %v493, 0
    %v548 = vsel %vm540, %v494, 0
    %v551 = vsel %vm540, %v495, 0
    %v554 = vsel %vm540, %v496, 0
    %v557 = vsel %vm540, %v497, 0
    %v560 = vsel %vm540, %v498, 0
    %v563 = vsel %vm540, %v499, 0
    %v566 = vsel %vm540, %v500, 0
    %v569 = vsel %vm540, %v501, 0
    %v572 = vsel %vm540, %v502, 0
    %v575 = vsel %vm540, %v503, 0
    %v578 = vsel %vm540, %v504, 0
    %v581 = vsel %vm540, %v505, 0
    %v584 = vsel %vm540, %v506, 0
    %v587 = vsel %vm540, %v507, 0
    %v590 = vsel %vm540, %v524, 0
    %v593 = vsel %vm540, %v525, 0
    %v596 = vsel %vm540, %v526, 0
    %v599 = vsel %vm540, %v527, 0
    %v602 = vsel %vm540, %v528, 0
    %v605 = vsel %vm540, %v529, 0
    %v608 = vsel %vm540, %v530, 0
    %v611 = vsel %vm540, %v531, 0
    %v614 = vsel %vm540, %v532, 0
    %v617 = vsel %vm540, %v533, 0
    %v620 = vsel %vm540, %v534, 0
    %v623 = vsel %vm540, %v535, 0
    %v626 = vsel %vm540, %v536, 0
    %v629 = vsel %vm540, %v537, 0
    %v632 = vsel %vm540, %v538, 0
    %v635 = vsel %vm540, %v539, 0
    %637 = vmatprep.subr.mxu0 0.0
    %638 = vmatpush1.msra.mxu0 %v62
    %639 = vmatprep.subr.mxu0 0.0
    %640 = vmatpush1.msra.mxu0 %v63
    %641 = vmatprep.subr.mxu0 0.0
    %642 = vmatpush1.msra.mxu0 %v64
    %643 = vmatprep.subr.mxu0 0.0
    %644 = vmatpush1.msra.mxu0 %v65
    %645 = vmatprep.subr.mxu0 0.0
    %646 = vmatpush1.msra.mxu0 0.0
    %647 = vmatprep.subr.mxu0 0.0
    %648 = vmatpush1.msra.mxu0 0.0
    %649 = vmatprep.subr.mxu0 0.0
    %650 = vmatpush1.msra.mxu0 0.0
    %651 = vmatprep.subr.mxu0 0.0
    %652 = vmatpush1.msra.mxu0 0.0
    %653 = vmatprep.subr.mxu0 0.0
    %654 = vmatpush1.msra.mxu0 0.0
    %655 = vmatprep.subr.mxu0 0.0
    %656 = vmatpush1.msra.mxu0 0.0
    %657 = vmatprep.subr.mxu0 0.0
    %658 = vmatpush1.msra.mxu0 0.0
    %659 = vmatprep.subr.mxu0 0.0
    %660 = vmatpush1.msra.mxu0 0.0
    %661 = vmatprep.subr.mxu0 0.0
    %662 = vmatpush1.msra.mxu0 0.0
    %663 = vmatprep.subr.mxu0 0.0
    %664 = vmatpush1.msra.mxu0 0.0
    %665 = vmatprep.subr.mxu0 0.0
    %666 = vmatpush1.msra.mxu0 0.0
    %667 = vmatprep.subr.mxu0 0.0
    %668 = vmatpush1.msra.mxu0 0.0
    %669 = vmatprep.subr.mxu0 0.0
    %670 = vmatpush1.msra.mxu0 0.0
    %671 = vmatprep.subr.mxu0 0.0
    %672 = vmatpush1.msra.mxu0 0.0
    %673 = vmatprep.subr.mxu0 0.0
    %674 = vmatpush1.msra.mxu0 0.0
    %675 = vmatprep.subr.mxu0 0.0
    %676 = vmatpush1.msra.mxu0 0.0
    %677 = vmatprep.subr.mxu0 0.0
    %678 = vmatpush1.msra.mxu0 0.0
    %679 = vmatprep.subr.mxu0 0.0
    %680 = vmatpush1.msra.mxu0 0.0
    %681 = vmatprep.subr.mxu0 0.0
    %682 = vmatpush1.msra.mxu0 0.0
    %683 = vmatprep.subr.mxu0 0.0
    %684 = vmatpush1.msra.mxu0 0.0
    %685 = vmatprep.subr.mxu0 0.0
    %686 = vmatpush1.msra.mxu0 0.0
    %687 = vmatprep.subr.mxu0 0.0
    %688 = vmatpush1.msra.mxu0 0.0
    %689 = vmatprep.subr.mxu0 0.0
    %690 = vmatpush1.msra.mxu0 0.0
    %691 = vmatprep.subr.mxu0 0.0
    %692 = vmatpush1.msra.mxu0 0.0
    %693 = vmatprep.subr.mxu0 0.0
    %694 = vmatpush1.msra.mxu0 0.0
    %695 = vmatprep.subr.mxu0 0.0
    %696 = vmatpush1.msra.mxu0 0.0
    %697 = vmatprep.subr.mxu0 0.0
    %698 = vmatpush1.msra.mxu0 0.0
    %699 = vmatprep.subr.mxu0 0.0
    %700 = vmatpush1.msra.mxu0 0.0
    %701 = vmatprep.mubr.f32.mxu0 0.0
    %702 = vmatmul.mubr.f32.gmra.mrb[0].mxu0 %v542
    %v703 = vpop.f32.mrb[0].mxu0
    %v704 = vadd.f32 0.0, %v703
    %v705 = vpop.f32.mrb[0].mxu0
    %706 = vmatprep.mubr.f32.mxu0 0.0
    %707 = vmatmul.mubr.f32.gmra.mrb[0].mxu0 %v545
    %v708 = vpop.f32.mrb[0].mxu0
    %v709 = vadd.f32 0.0, %v708
    %v710 = vpop.f32.mrb[0].mxu0
    %711 = vmatprep.mubr.f32.mxu0 0.0
    %712 = vmatmul.mubr.f32.gmra.mrb[0].mxu0 %v548
    %v713 = vpop.f32.mrb[0].mxu0
    %v714 = vadd.f32 0.0, %v713
    %v715 = vpop.f32.mrb[0].mxu0
    %716 = vmatprep.mubr.f32.mxu0 0.0
    %717 = vmatmul.mubr.f32.gmra.mrb[0].mxu0 %v551
    %v718 = vpop.f32.mrb[0].mxu0
    %v719 = vadd.f32 0.0, %v718
    %v720 = vpop.f32.mrb[0].mxu0
    %721 = vmatprep.mubr.f32.mxu0 0.0
    %722 = vmatmul.mubr.f32.gmra.mrb[0].mxu0 %v554
    %v723 = vpop.f32.mrb[0].mxu0
    %v724 = vadd.f32 0.0, %v723
    %v725 = vpop.f32.mrb[0].mxu0
    %726 = vmatprep.mubr.f32.mxu0 0.0
    %727 = vmatmul.mubr.f32.gmra.mrb[0].mxu0 %v557
    %v728 = vpop.f32.mrb[0].mxu0
    %v729 = vadd.f32 0.0, %v728
    %v730 = vpop.f32.mrb[0].mxu0
    %731 = vmatprep.mubr.f32.mxu0 0.0
    %732 = vmatmul.mubr.f32.gmra.mrb[0].mxu0 %v560
    %v733 = vpop.f32.mrb[0].mxu0
    %v734 = vadd.f32 0.0, %v733
    %v735 = vpop.f32.mrb[0].mxu0
    %736 = vmatprep.mubr.f32.mxu0 0.0
    %737 = vmatmul.mubr.f32.gmra.mrb[0].mxu0 %v563
    %v738 = vpop.f32.mrb[0].mxu0
    %v739 = vadd.f32 0.0, %v738
    %v740 = vpop.f32.mrb[0].mxu0
    %741 = vmatprep.mubr.f32.mxu0 0.0
    %742 = vmatmul.mubr.f32.gmra.mrb[0].mxu0 %v566
    %v743 = vpop.f32.mrb[0].mxu0
    %v744 = vadd.f32 0.0, %v743
    %v745 = vpop.f32.mrb[0].mxu0
    %746 = vmatprep.mubr.f32.mxu0 0.0
    %747 = vmatmul.mubr.f32.gmra.mrb[0].mxu0 %v569
    %v748 = vpop.f32.mrb[0].mxu0
    %v749 = vadd.f32 0.0, %v748
    %v750 = vpop.f32.mrb[0].mxu0
    %751 = vmatprep.mubr.f32.mxu0 0.0
    %752 = vmatmul.mubr.f32.gmra.mrb[0].mxu0 %v572
    %v753 = vpop.f32.mrb[0].mxu0
    %v754 = vadd.f32 0.0, %v753
    %v755 = vpop.f32.mrb[0].mxu0
    %756 = vmatprep.mubr.f32.mxu0 0.0
    %757 = vmatmul.mubr.f32.gmra.mrb[0].mxu0 %v575
    %v758 = vpop.f32.mrb[0].mxu0
    %v759 = vadd.f32 0.0, %v758
    %v760 = vpop.f32.mrb[0].mxu0
    %761 = vmatprep.mubr.f32.mxu0 0.0
    %762 = vmatmul.mubr.f32.gmra.mrb[0].mxu0 %v578
    %v763 = vpop.f32.mrb[0].mxu0
    %v764 = vadd.f32 0.0, %v763
    %v765 = vpop.f32.mrb[0].mxu0
    %766 = vmatprep.mubr.f32.mxu0 0.0
    %767 = vmatmul.mubr.f32.gmra.mrb[0].mxu0 %v581
    %v768 = vpop.f32.mrb[0].mxu0
    %v769 = vadd.f32 0.0, %v768
    %v770 = vpop.f32.mrb[0].mxu0
    %771 = vmatprep.mubr.f32.mxu0 0.0
    %772 = vmatmul.mubr.f32.gmra.mrb[0].mxu0 %v584
    %v773 = vpop.f32.mrb[0].mxu0
    %v774 = vadd.f32 0.0, %v773
    %v775 = vpop.f32.mrb[0].mxu0
    %776 = vmatprep.mubr.f32.mxu0 0.0
    %777 = vmatmul.mubr.f32.gmra.mrb[0].mxu0 %v587
    %v778 = vpop.f32.mrb[0].mxu0
    %v779 = vadd.f32 0.0, %v778
    %v780 = vpop.f32.mrb[0].mxu0
    %781 = vmatprep.mubr.f32.mxu0 0.0
    %782 = vmatmul.mubr.f32.gmra.mrb[0].mxu0 %v590
    %v783 = vpop.f32.mrb[0].mxu0
    %v784 = vadd.f32 0.0, %v783
    %v785 = vpop.f32.mrb[0].mxu0
    %786 = vmatprep.mubr.f32.mxu0 0.0
    %787 = vmatmul.mubr.f32.gmra.mrb[0].mxu0 %v593
    %v788 = vpop.f32.mrb[0].mxu0
    %v789 = vadd.f32 0.0, %v788
    %v790 = vpop.f32.mrb[0].mxu0
    %791 = vmatprep.mubr.f32.mxu0 0.0
    %792 = vmatmul.mubr.f32.gmra.mrb[0].mxu0 %v596
    %v793 = vpop.f32.mrb[0].mxu0
    %v794 = vadd.f32 0.0, %v793
    %v795 = vpop.f32.mrb[0].mxu0
    %796 = vmatprep.mubr.f32.mxu0 0.0
    %797 = vmatmul.mubr.f32.gmra.mrb[0].mxu0 %v599
    %v798 = vpop.f32.mrb[0].mxu0
    %v799 = vadd.f32 0.0, %v798
    %v800 = vpop.f32.mrb[0].mxu0
    %801 = vmatprep.mubr.f32.mxu0 0.0
    %802 = vmatmul.mubr.f32.gmra.mrb[0].mxu0 %v602
    %v803 = vpop.f32.mrb[0].mxu0
    %v804 = vadd.f32 0.0, %v803
    %v805 = vpop.f32.mrb[0].mxu0
    %806 = vmatprep.mubr.f32.mxu0 0.0
    %807 = vmatmul.mubr.f32.gmra.mrb[0].mxu0 %v605
    %v808 = vpop.f32.mrb[0].mxu0
    %v809 = vadd.f32 0.0, %v808
    %v810 = vpop.f32.mrb[0].mxu0
    %811 = vmatprep.mubr.f32.mxu0 0.0
    %812 = vmatmul.mubr.f32.gmra.mrb[0].mxu0 %v608
    %v813 = vpop.f32.mrb[0].mxu0
    %v814 = vadd.f32 0.0, %v813
    %v815 = vpop.f32.mrb[0].mxu0
    %816 = vmatprep.mubr.f32.mxu0 0.0
    %817 = vmatmul.mubr.f32.gmra.mrb[0].mxu0 %v611
    %v818 = vpop.f32.mrb[0].mxu0
    %v819 = vadd.f32 0.0, %v818
    %v820 = vpop.f32.mrb[0].mxu0
    %821 = vmatprep.mubr.f32.mxu0 0.0
    %822 = vmatmul.mubr.f32.gmra.mrb[0].mxu0 %v614
    %v823 = vpop.f32.mrb[0].mxu0
    %v824 = vadd.f32 0.0, %v823
    %v825 = vpop.f32.mrb[0].mxu0
    %826 = vmatprep.mubr.f32.mxu0 0.0
    %827 = vmatmul.mubr.f32.gmra.mrb[0].mxu0 %v617
    %v828 = vpop.f32.mrb[0].mxu0
    %v829 = vadd.f32 0.0, %v828
    %v830 = vpop.f32.mrb[0].mxu0
    %831 = vmatprep.mubr.f32.mxu0 0.0
    %832 = vmatmul.mubr.f32.gmra.mrb[0].mxu0 %v620
    %v833 = vpop.f32.mrb[0].mxu0
    %v834 = vadd.f32 0.0, %v833
    %v835 = vpop.f32.mrb[0].mxu0
    %836 = vmatprep.mubr.f32.mxu0 0.0
    %837 = vmatmul.mubr.f32.gmra.mrb[0].mxu0 %v623
    %v838 = vpop.f32.mrb[0].mxu0
    %v839 = vadd.f32 0.0, %v838
    %v840 = vpop.f32.mrb[0].mxu0
    %841 = vmatprep.mubr.f32.mxu0 0.0
    %842 = vmatmul.mubr.f32.gmra.mrb[0].mxu0 %v626
    %v843 = vpop.f32.mrb[0].mxu0
    %v844 = vadd.f32 0.0, %v843
    %v845 = vpop.f32.mrb[0].mxu0
    %846 = vmatprep.mubr.f32.mxu0 0.0
    %847 = vmatmul.mubr.f32.gmra.mrb[0].mxu0 %v629
    %v848 = vpop.f32.mrb[0].mxu0
    %v849 = vadd.f32 0.0, %v848
    %v850 = vpop.f32.mrb[0].mxu0
    %851 = vmatprep.mubr.f32.mxu0 0.0
    %852 = vmatmul.mubr.f32.gmra.mrb[0].mxu0 %v632
    %v853 = vpop.f32.mrb[0].mxu0
    %v854 = vadd.f32 0.0, %v853
    %v855 = vpop.f32.mrb[0].mxu0
    %856 = vmatprep.mubr.f32.mxu0 0.0
    %857 = vmatmul.mubr.f32.gmra.mrb[0].mxu0 %v635
    %v858 = vpop.f32.mrb[0].mxu0
    %v859 = vadd.f32 0.0, %v858
    %v860 = vpop.f32.mrb[0].mxu0
    %861 = vdwg.mxu0
    %vm862 = vcmask 785408
    %863 = vst.msk [vmem:[#allocation2] sm:$0xff] %vm862, %v310
    %864 = vst.msk [vmem:[#allocation2 + $0x8] sm:$0xff] %vm862, %v315
    %865 = vst.msk [vmem:[#allocation2 + $0x10] sm:$0xff] %vm862, %v320
    %866 = vst.msk [vmem:[#allocation2 + $0x18] sm:$0xff] %vm862, %v325
    %867 = vst.msk [vmem:[#allocation2 + $0x20] sm:$0xff] %vm862, %v330
    %868 = vst.msk [vmem:[#allocation2 + $0x28] sm:$0xff] %vm862, %v335
    %869 = vst.msk [vmem:[#allocation2 + $0x30] sm:$0xff] %vm862, %v340
    %870 = vst.msk [vmem:[#allocation2 + $0x38] sm:$0xff] %vm862, %v345
    %871 = vst.msk [vmem:[#allocation2 + $0x40] sm:$0xff] %vm862, %v350
    %872 = vst.msk [vmem:[#allocation2 + $0x48] sm:$0xff] %vm862, %v355
    %873 = vst.msk [vmem:[#allocation2 + $0x50] sm:$0xff] %vm862, %v360
    %874 = vst.msk [vmem:[#allocation2 + $0x58] sm:$0xff] %vm862, %v365
    %875 = vst.msk [vmem:[#allocation2 + $0x60] sm:$0xff] %vm862, %v370
    %876 = vst.msk [vmem:[#allocation2 + $0x68] sm:$0xff] %vm862, %v375
    %877 = vst.msk [vmem:[#allocation2 + $0x70] sm:$0xff] %vm862, %v380
    %878 = vst.msk [vmem:[#allocation2 + $0x78] sm:$0xff] %vm862, %v385
    %879 = vst.msk [vmem:[#allocation2 + $0x80] sm:$0xff] %vm862, %v390
    %880 = vst.msk [vmem:[#allocation2 + $0x88] sm:$0xff] %vm862, %v395
    %881 = vst.msk [vmem:[#allocation2 + $0x90] sm:$0xff] %vm862, %v400
    %882 = vst.msk [vmem:[#allocation2 + $0x98] sm:$0xff] %vm862, %v405
    %883 = vst.msk [vmem:[#allocation2 + $0xa0] sm:$0xff] %vm862, %v410
    %884 = vst.msk [vmem:[#allocation2 + $0xa8] sm:$0xff] %vm862, %v415
    %885 = vst.msk [vmem:[#allocation2 + $0xb0] sm:$0xff] %vm862, %v420
    %886 = vst.msk [vmem:[#allocation2 + $0xb8] sm:$0xff] %vm862, %v425
    %887 = vst.msk [vmem:[#allocation2 + $0xc0] sm:$0xff] %vm862, %v430
    %888 = vst.msk [vmem:[#allocation2 + $0xc8] sm:$0xff] %vm862, %v435
    %889 = vst.msk [vmem:[#allocation2 + $0xd0] sm:$0xff] %vm862, %v440
    %890 = vst.msk [vmem:[#allocation2 + $0xd8] sm:$0xff] %vm862, %v445
    %891 = vst.msk [vmem:[#allocation2 + $0xe0] sm:$0xff] %vm862, %v450
    %892 = vst.msk [vmem:[#allocation2 + $0xe8] sm:$0xff] %vm862, %v455
    %893 = vst.msk [vmem:[#allocation2 + $0xf0] sm:$0xff] %vm862, %v460
    %894 = vst.msk [vmem:[#allocation2 + $0xf8] sm:$0xff] %vm862, %v465
    %895 = vst.msk [vmem:[#allocation3] sm:$0xff] %vm540, %v704
    %896 = vst.msk [vmem:[#allocation3 + $0x8] sm:$0xff] %vm540, %v709
    %897 = vst.msk [vmem:[#allocation3 + $0x10] sm:$0xff] %vm540, %v714
    %898 = vst.msk [vmem:[#allocation3 + $0x18] sm:$0xff] %vm540, %v719
    %899 = vst.msk [vmem:[#allocation3 + $0x20] sm:$0xff] %vm540, %v724
    %900 = vst.msk [vmem:[#allocation3 + $0x28] sm:$0xff] %vm540, %v729
    %901 = vst.msk [vmem:[#allocation3 + $0x30] sm:$0xff] %vm540, %v734
    %902 = vst.msk [vmem:[#allocation3 + $0x38] sm:$0xff] %vm540, %v739
    %903 = vst.msk [vmem:[#allocation3 + $0x40] sm:$0xff] %vm540, %v744
    %904 = vst.msk [vmem:[#allocation3 + $0x48] sm:$0xff] %vm540, %v749
    %905 = vst.msk [vmem:[#allocation3 + $0x50] sm:$0xff] %vm540, %v754
    %906 = vst.msk [vmem:[#allocation3 + $0x58] sm:$0xff] %vm540, %v759
    %907 = vst.msk [vmem:[#allocation3 + $0x60] sm:$0xff] %vm540, %v764
    %908 = vst.msk [vmem:[#allocation3 + $0x68] sm:$0xff] %vm540, %v769
    %909 = vst.msk [vmem:[#allocation3 + $0x70] sm:$0xff] %vm540, %v774
    %910 = vst.msk [vmem:[#allocation3 + $0x78] sm:$0xff] %vm540, %v779
    %911 = vst.msk [vmem:[#allocation3 + $0x80] sm:$0xff] %vm540, %v784
    %912 = vst.msk [vmem:[#allocation3 + $0x88] sm:$0xff] %vm540, %v789
    %913 = vst.msk [vmem:[#allocation3 + $0x90] sm:$0xff] %vm540, %v794
    %914 = vst.msk [vmem:[#allocation3 + $0x98] sm:$0xff] %vm540, %v799
    %915 = vst.msk [vmem:[#allocation3 + $0xa0] sm:$0xff] %vm540, %v804
    %916 = vst.msk [vmem:[#allocation3 + $0xa8] sm:$0xff] %vm540, %v809
    %917 = vst.msk [vmem:[#allocation3 + $0xb0] sm:$0xff] %vm540, %v814
    %918 = vst.msk [vmem:[#allocation3 + $0xb8] sm:$0xff] %vm540, %v819
    %919 = vst.msk [vmem:[#allocation3 + $0xc0] sm:$0xff] %vm540, %v824
    %920 = vst.msk [vmem:[#allocation3 + $0xc8] sm:$0xff] %vm540, %v829
    %921 = vst.msk [vmem:[#allocation3 + $0xd0] sm:$0xff] %vm540, %v834
    %922 = vst.msk [vmem:[#allocation3 + $0xd8] sm:$0xff] %vm540, %v839
    %923 = vst.msk [vmem:[#allocation3 + $0xe0] sm:$0xff] %vm540, %v844
    %924 = vst.msk [vmem:[#allocation3 + $0xe8] sm:$0xff] %vm540, %v849
    %925 = vst.msk [vmem:[#allocation3 + $0xf0] sm:$0xff] %vm540, %v854
    %926 = vst.msk [vmem:[#allocation3 + $0xf8] sm:$0xff] %vm540, %v859
    %v927 = vsel %vm862, %v310, 0.0
    %v928 = vsel %vm862, %v315, 0.0
    %v929 = vadd.f32 %v927, %v928
    %v930 = vsel %vm862, %v320, 0.0
    %v931 = vadd.f32 %v929, %v930
    %v932 = vsel %vm862, %v325, 0.0
    %v933 = vadd.f32 %v931, %v932
    %v934 = vsel %vm862, %v330, 0.0
    %v935 = vadd.f32 %v933, %v934
    %v936 = vsel %vm862, %v335, 0.0
    %v937 = vadd.f32 %v935, %v936
    %v938 = vsel %vm862, %v340, 0.0
    %v939 = vadd.f32 %v937, %v938
    %v940 = vsel %vm862, %v345, 0.0
    %v941 = vadd.f32 %v939, %v940
    %v942 = vsel %vm862, %v350, 0.0
    %v943 = vadd.f32 %v941, %v942
    %v944 = vsel %vm862, %v355, 0.0
    %v945 = vadd.f32 %v943, %v944
    %v946 = vsel %vm862, %v360, 0.0
    %v947 = vadd.f32 %v945, %v946
    %v948 = vsel %vm862, %v365, 0.0
    %v949 = vadd.f32 %v947, %v948
    %v950 = vsel %vm862, %v370, 0.0
    %v951 = vadd.f32 %v949, %v950
    %v952 = vsel %vm862, %v375, 0.0
    %v953 = vadd.f32 %v951, %v952
    %v954 = vsel %vm862, %v380, 0.0
    %v955 = vadd.f32 %v953, %v954
    %v956 = vsel %vm862, %v385, 0.0
    %v957 = vadd.f32 %v955, %v956
    %v958 = vsel %vm862, %v390, 0.0
    %v959 = vadd.f32 %v957, %v958
    %v960 = vsel %vm862, %v395, 0.0
    %v961 = vadd.f32 %v959, %v960
    %v962 = vsel %vm862, %v400, 0.0
    %v963 = vadd.f32 %v961, %v962
    %v964 = vsel %vm862, %v405, 0.0
    %v965 = vadd.f32 %v963, %v964
    %v966 = vsel %vm862, %v410, 0.0
    %v967 = vadd.f32 %v965, %v966
    %v968 = vsel %vm862, %v415, 0.0
    %v969 = vadd.f32 %v967, %v968
    %v970 = vsel %vm862, %v420, 0.0
    %v971 = vadd.f32 %v969, %v970
    %v972 = vsel %vm862, %v425, 0.0
    %v973 = vadd.f32 %v971, %v972
    %v974 = vsel %vm862, %v430, 0.0
    %v975 = vadd.f32 %v973, %v974
    %v976 = vsel %vm862, %v435, 0.0
    %v977 = vadd.f32 %v975, %v976
    %v978 = vsel %vm862, %v440, 0.0
    %v979 = vadd.f32 %v977, %v978
    %v980 = vsel %vm862, %v445, 0.0
    %v981 = vadd.f32 %v979, %v980
    %v982 = vsel %vm862, %v450, 0.0
    %v983 = vadd.f32 %v981, %v982
    %v984 = vsel %vm862, %v455, 0.0
    %v985 = vadd.f32 %v983, %v984
    %v986 = vsel %vm862, %v460, 0.0
    %v987 = vadd.f32 %v985, %v986
    %v988 = vsel %vm862, %v465, 0.0
    %v989 = vadd.f32 %v987, %v988
    %v990 = vrot.slane %v989, 4
    %v991 = vadd.f32 %v989, %v990
    %v992 = vrot.slane %v991, 2
    %v993 = vadd.f32 %v991, %v992
    %v994 = vrot.slane %v993, 1
    %v995 = vadd.f32 %v993, %v994
    %v996 = vadd.f32 %v995, 0.0
    %v997 = vmul.f32 %v310, %v310
    %v998 = vmul.f32 %v315, %v315
    %v999 = vmul.f32 %v320, %v320
    %v1000 = vmul.f32 %v325, %v325
    %v1001 = vmul.f32 %v330, %v330
    %v1002 = vmul.f32 %v335, %v335
    %v1003 = vmul.f32 %v340, %v340
    %v1004 = vmul.f32 %v345, %v345
    %v1005 = vmul.f32 %v350, %v350
    %v1006 = vmul.f32 %v355, %v355
    %v1007 = vmul.f32 %v360, %v360
    %v1008 = vmul.f32 %v365, %v365
    %v1009 = vmul.f32 %v370, %v370
    %v1010 = vmul.f32 %v375, %v375
    %v1011 = vmul.f32 %v380, %v380
    %v1012 = vmul.f32 %v385, %v385
    %v1013 = vmul.f32 %v390, %v390
    %v1014 = vmul.f32 %v395, %v395
    %v1015 = vmul.f32 %v400, %v400
    %v1016 = vmul.f32 %v405, %v405
    %v1017 = vmul.f32 %v410, %v410
    %v1018 = vmul.f32 %v415, %v415
    %v1019 = vmul.f32 %v420, %v420
    %v1020 = vmul.f32 %v425, %v425
    %v1021 = vmul.f32 %v430, %v430
    %v1022 = vmul.f32 %v435, %v435
    %v1023 = vmul.f32 %v440, %v440
    %v1024 = vmul.f32 %v445, %v445
    %v1025 = vmul.f32 %v450, %v450
    %v1026 = vmul.f32 %v455, %v455
    %v1027 = vmul.f32 %v460, %v460
    %v1028 = vmul.f32 %v465, %v465
    %v1029 = vsel %vm862, %v997, 0.0
    %v1030 = vsel %vm862, %v998, 0.0
    %v1031 = vadd.f32 %v1029, %v1030
    %v1032 = vsel %vm862, %v999, 0.0
    %v1033 = vadd.f32 %v1031, %v1032
    %v1034 = vsel %vm862, %v1000, 0.0
    %v1035 = vadd.f32 %v1033, %v1034
    %v1036 = vsel %vm862, %v1001, 0.0
    %v1037 = vadd.f32 %v1035, %v1036
    %v1038 = vsel %vm862, %v1002, 0.0
    %v1039 = vadd.f32 %v1037, %v1038
    %v1040 = vsel %vm862, %v1003, 0.0
    %v1041 = vadd.f32 %v1039, %v1040
    %v1042 = vsel %vm862, %v1004, 0.0
    %v1043 = vadd.f32 %v1041, %v1042
    %v1044 = vsel %vm862, %v1005, 0.0
    %v1045 = vadd.f32 %v1043, %v1044
    %v1046 = vsel %vm862, %v1006, 0.0
    %v1047 = vadd.f32 %v1045, %v1046
    %v1048 = vsel %vm862, %v1007, 0.0
    %v1049 = vadd.f32 %v1047, %v1048
    %v1050 = vsel %vm862, %v1008, 0.0
    %v1051 = vadd.f32 %v1049, %v1050
    %v1052 = vsel %vm862, %v1009, 0.0
    %v1053 = vadd.f32 %v1051, %v1052
    %v1054 = vsel %vm862, %v1010, 0.0
    %v1055 = vadd.f32 %v1053, %v1054
    %v1056 = vsel %vm862, %v1011, 0.0
    %v1057 = vadd.f32 %v1055, %v1056
    %v1058 = vsel %vm862, %v1012, 0.0
    %v1059 = vadd.f32 %v1057, %v1058
    %v1060 = vsel %vm862, %v1013, 0.0
    %v1061 = vadd.f32 %v1059, %v1060
    %v1062 = vsel %vm862, %v1014, 0.0
    %v1063 = vadd.f32 %v1061, %v1062
    %v1064 = vsel %vm862, %v1015, 0.0
    %v1065 = vadd.f32 %v1063, %v1064
    %v1066 = vsel %vm862, %v1016, 0.0
    %v1067 = vadd.f32 %v1065, %v1066
    %v1068 = vsel %vm862, %v1017, 0.0
    %v1069 = vadd.f32 %v1067, %v1068
    %v1070 = vsel %vm862, %v1018, 0.0
    %v1071 = vadd.f32 %v1069, %v1070
    %v1072 = vsel %vm862, %v1019, 0.0
    %v1073 = vadd.f32 %v1071, %v1072
    %v1074 = vsel %vm862, %v1020, 0.0
    %v1075 = vadd.f32 %v1073, %v1074
    %v1076 = vsel %vm862, %v1021, 0.0
    %v1077 = vadd.f32 %v1075, %v1076
    %v1078 = vsel %vm862, %v1022, 0.0
    %v1079 = vadd.f32 %v1077, %v1078
    %v1080 = vsel %vm862, %v1023, 0.0
    %v1081 = vadd.f32 %v1079, %v1080
    %v1082 = vsel %vm862, %v1024, 0.0
    %v1083 = vadd.f32 %v1081, %v1082
    %v1084 = vsel %vm862, %v1025, 0.0
    %v1085 = vadd.f32 %v1083, %v1084
    %v1086 = vsel %vm862, %v1026, 0.0
    %v1087 = vadd.f32 %v1085, %v1086
    %v1088 = vsel %vm862, %v1027, 0.0
    %v1089 = vadd.f32 %v1087, %v1088
    %v1090 = vsel %vm862, %v1028, 0.0
    %v1091 = vadd.f32 %v1089, %v1090
    %v1092 = vrot.slane %v1091, 4
    %v1093 = vadd.f32 %v1091, %v1092
    %v1094 = vrot.slane %v1093, 2
    %v1095 = vadd.f32 %v1093, %v1094
    %v1096 = vrot.slane %v1095, 1
    %v1097 = vadd.f32 %v1095, %v1096
    %v1098 = vadd.f32 %v1097, 0.0
    %v1099 = vsel %vm540, %v704, 0.0
    %v1100 = vsel %vm540, %v709, 0.0
    %v1101 = vadd.f32 %v1099, %v1100
    %v1102 = vsel %vm540, %v714, 0.0
    %v1103 = vadd.f32 %v1101, %v1102
    %v1104 = vsel %vm540, %v719, 0.0
    %v1105 = vadd.f32 %v1103, %v1104
    %v1106 = vsel %vm540, %v724, 0.0
    %v1107 = vadd.f32 %v1105, %v1106
    %v1108 = vsel %vm540, %v729, 0.0
    %v1109 = vadd.f32 %v1107, %v1108
    %v1110 = vsel %vm540, %v734, 0.0
    %v1111 = vadd.f32 %v1109, %v1110
    %v1112 = vsel %vm540, %v739, 0.0
    %v1113 = vadd.f32 %v1111, %v1112
    %v1114 = vsel %vm540, %v744, 0.0
    %v1115 = vadd.f32 %v1113, %v1114
    %v1116 = vsel %vm540, %v749, 0.0
    %v1117 = vadd.f32 %v1115, %v1116
    %v1118 = vsel %vm540, %v754, 0.0
    %v1119 = vadd.f32 %v1117, %v1118
    %v1120 = vsel %vm540, %v759, 0.0
    %v1121 = vadd.f32 %v1119, %v1120
    %v1122 = vsel %vm540, %v764, 0.0
    %v1123 = vadd.f32 %v1121, %v1122
    %v1124 = vsel %vm540, %v769, 0.0
    %v1125 = vadd.f32 %v1123, %v1124
    %v1126 = vsel %vm540, %v774, 0.0
    %v1127 = vadd.f32 %v1125, %v1126
    %v1128 = vsel %vm540, %v779, 0.0
    %v1129 = vadd.f32 %v1127, %v1128
    %v1130 = vsel %vm540, %v784, 0.0
    %v1131 = vadd.f32 %v1129, %v1130
    %v1132 = vsel %vm540, %v789, 0.0
    %v1133 = vadd.f32 %v1131, %v1132
    %v1134 = vsel %vm540, %v794, 0.0
    %v1135 = vadd.f32 %v1133, %v1134
    %v1136 = vsel %vm540, %v799, 0.0
    %v1137 = vadd.f32 %v1135, %v1136
    %v1138 = vsel %vm540, %v804, 0.0
    %v1139 = vadd.f32 %v1137, %v1138
    %v1140 = vsel %vm540, %v809, 0.0
    %v1141 = vadd.f32 %v1139, %v1140
    %v1142 = vsel %vm540, %v814, 0.0
    %v1143 = vadd.f32 %v1141, %v1142
    %v1144 = vsel %vm540, %v819, 0.0
    %v1145 = vadd.f32 %v1143, %v1144
    %v1146 = vsel %vm540, %v824, 0.0
    %v1147 = vadd.f32 %v1145, %v1146
    %v1148 = vsel %vm540, %v829, 0.0
    %v1149 = vadd.f32 %v1147, %v1148
    %v1150 = vsel %vm540, %v834, 0.0
    %v1151 = vadd.f32 %v1149, %v1150
    %v1152 = vsel %vm540, %v839, 0.0
    %v1153 = vadd.f32 %v1151, %v1152
    %v1154 = vsel %vm540, %v844, 0.0
    %v1155 = vadd.f32 %v1153, %v1154
    %v1156 = vsel %vm540, %v849, 0.0
    %v1157 = vadd.f32 %v1155, %v1156
    %v1158 = vsel %vm540, %v854, 0.0
    %v1159 = vadd.f32 %v1157, %v1158
    %v1160 = vsel %vm540, %v859, 0.0
    %v1161 = vadd.f32 %v1159, %v1160
    %v1162 = vrot.slane %v1161, 4
    %v1163 = vadd.f32 %v1161, %v1162
    %v1164 = vrot.slane %v1163, 2
    %v1165 = vadd.f32 %v1163, %v1164
    %v1166 = vrot.slane %v1165, 1
    %v1167 = vadd.f32 %v1165, %v1166
    %v1168 = vadd.f32 %v1167, 0.0
    %v1169 = vmul.f32 %v704, %v704
    %v1170 = vmul.f32 %v709, %v709
    %v1171 = vmul.f32 %v714, %v714
    %v1172 = vmul.f32 %v719, %v719
    %v1173 = vmul.f32 %v724, %v724
    %v1174 = vmul.f32 %v729, %v729
    %v1175 = vmul.f32 %v734, %v734
    %v1176 = vmul.f32 %v739, %v739
    %v1177 = vmul.f32 %v744, %v744
    %v1178 = vmul.f32 %v749, %v749
    %v1179 = vmul.f32 %v754, %v754
    %v1180 = vmul.f32 %v759, %v759
    %v1181 = vmul.f32 %v764, %v764
    %v1182 = vmul.f32 %v769, %v769
    %v1183 = vmul.f32 %v774, %v774
    %v1184 = vmul.f32 %v779, %v779
    %v1185 = vmul.f32 %v784, %v784
    %v1186 = vmul.f32 %v789, %v789
    %v1187 = vmul.f32 %v794, %v794
    %v1188 = vmul.f32 %v799, %v799
    %v1189 = vmul.f32 %v804, %v804
    %v1190 = vmul.f32 %v809, %v809
    %v1191 = vmul.f32 %v814, %v814
    %v1192 = vmul.f32 %v819, %v819
    %v1193 = vmul.f32 %v824, %v824
    %v1194 = vmul.f32 %v829, %v829
    %v1195 = vmul.f32 %v834, %v834
    %v1196 = vmul.f32 %v839, %v839
    %v1197 = vmul.f32 %v844, %v844
    %v1198 = vmul.f32 %v849, %v849
    %v1199 = vmul.f32 %v854, %v854
    %v1200 = vmul.f32 %v859, %v859
    %v1201 = vsel %vm540, %v1169, 0.0
    %v1202 = vsel %vm540, %v1170, 0.0
    %v1203 = vadd.f32 %v1201, %v1202
    %v1204 = vsel %vm540, %v1171, 0.0
    %v1205 = vadd.f32 %v1203, %v1204
    %v1206 = vsel %vm540, %v1172, 0.0
    %v1207 = vadd.f32 %v1205, %v1206
    %v1208 = vsel %vm540, %v1173, 0.0
    %v1209 = vadd.f32 %v1207, %v1208
    %v1210 = vsel %vm540, %v1174, 0.0
    %v1211 = vadd.f32 %v1209, %v1210
    %v1212 = vsel %vm540, %v1175, 0.0
    %v1213 = vadd.f32 %v1211, %v1212
    %v1214 = vsel %vm540, %v1176, 0.0
    %v1215 = vadd.f32 %v1213, %v1214
    %v1216 = vsel %vm540, %v1177, 0.0
    %v1217 = vadd.f32 %v1215, %v1216
    %v1218 = vsel %vm540, %v1178, 0.0
    %v1219 = vadd.f32 %v1217, %v1218
    %v1220 = vsel %vm540, %v1179, 0.0
    %v1221 = vadd.f32 %v1219, %v1220
    %v1222 = vsel %vm540, %v1180, 0.0
    %v1223 = vadd.f32 %v1221, %v1222
    %v1224 = vsel %vm540, %v1181, 0.0
    %v1225 = vadd.f32 %v1223, %v1224
    %v1226 = vsel %vm540, %v1182, 0.0
    %v1227 = vadd.f32 %v1225, %v1226
    %v1228 = vsel %vm540, %v1183, 0.0
    %v1229 = vadd.f32 %v1227, %v1228
    %v1230 = vsel %vm540, %v1184, 0.0
    %v1231 = vadd.f32 %v1229, %v1230
    %v1232 = vsel %vm540, %v1185, 0.0
    %v1233 = vadd.f32 %v1231, %v1232
    %v1234 = vsel %vm540, %v1186, 0.0
    %v1235 = vadd.f32 %v1233, %v1234
    %v1236 = vsel %vm540, %v1187, 0.0
    %v1237 = vadd.f32 %v1235, %v1236
    %v1238 = vsel %vm540, %v1188, 0.0
    %v1239 = vadd.f32 %v1237, %v1238
    %v1240 = vsel %vm540, %v1189, 0.0
    %v1241 = vadd.f32 %v1239, %v1240
    %v1242 = vsel %vm540, %v1190, 0.0
    %v1243 = vadd.f32 %v1241, %v1242
    %v1244 = vsel %vm540, %v1191, 0.0
    %v1245 = vadd.f32 %v1243, %v1244
    %v1246 = vsel %vm540, %v1192, 0.0
    %v1247 = vadd.f32 %v1245, %v1246
    %v1248 = vsel %vm540, %v1193, 0.0
    %v1249 = vadd.f32 %v1247, %v1248
    %v1250 = vsel %vm540, %v1194, 0.0
    %v1251 = vadd.f32 %v1249, %v1250
    %v1252 = vsel %vm540, %v1195, 0.0
    %v1253 = vadd.f32 %v1251, %v1252
    %v1254 = vsel %vm540, %v1196, 0.0
    %v1255 = vadd.f32 %v1253, %v1254
    %v1256 = vsel %vm540, %v1197, 0.0
    %v1257 = vadd.f32 %v1255, %v1256
    %v1258 = vsel %vm540, %v1198, 0.0
    %v1259 = vadd.f32 %v1257, %v1258
    %v1260 = vsel %vm540, %v1199, 0.0
    %v1261 = vadd.f32 %v1259, %v1260
    %v1262 = vsel %vm540, %v1200, 0.0
    %v1263 = vadd.f32 %v1261, %v1262
    %v1264 = vrot.slane %v1263, 4
    %v1265 = vadd.f32 %v1263, %v1264
    %v1266 = vrot.slane %v1265, 2
    %v1267 = vadd.f32 %v1265, %v1266
    %v1268 = vrot.slane %v1267, 1
    %v1269 = vadd.f32 %v1267, %v1268
    %v1270 = vadd.f32 %v1269, 0.0
    %s1271 = scalar_lea.vmem %s0, 128
    %v1272 = vld [vmem:[%s1271] sm:$0xff]
    %v1273 = vld [vmem:[%s1271 + $0x8] sm:$0xff]
    %v1274 = vld [vmem:[%s1271 + $0x10] sm:$0xff]
    %v1275 = vld [vmem:[%s1271 + $0x18] sm:$0xff]
    %v1276 = vld [vmem:[%s1271 + $0x20] sm:$0xff]
    %v1277 = vld [vmem:[%s1271 + $0x28] sm:$0xff]
    %v1278 = vld [vmem:[%s1271 + $0x30] sm:$0xff]
    %v1279 = vld [vmem:[%s1271 + $0x38] sm:$0xff]
    %v1280 = vld [vmem:[%s1271 + $0x40] sm:$0xff]
    %v1281 = vld [vmem:[%s1271 + $0x48] sm:$0xff]
    %v1282 = vld [vmem:[%s1271 + $0x50] sm:$0xff]
    %v1283 = vld [vmem:[%s1271 + $0x58] sm:$0xff]
    %v1284 = vld [vmem:[%s1271 + $0x60] sm:$0xff]
    %v1285 = vld [vmem:[%s1271 + $0x68] sm:$0xff]
    %v1286 = vld [vmem:[%s1271 + $0x70] sm:$0xff]
    %v1287 = vld [vmem:[%s1271 + $0x78] sm:$0xff]
    %1288 = vxpose.xlu0.b32.start [1/16] %v1272, 128
    %1289 = vxpose.xlu0.b32.cont [2/16] %v1274, 128
    %1290 = vxpose.xlu0.b32.cont [3/16] %v1276, 128
    %1291 = vxpose.xlu0.b32.cont [4/16] %v1278, 128
    %1292 = vxpose.xlu0.b32.cont [5/16] %v1280, 128
    %1293 = vxpose.xlu0.b32.cont [6/16] %v1282, 128
    %1294 = vxpose.xlu0.b32.cont [7/16] %v1284, 128
    %1295 = vxpose.xlu0.b32.cont [8/16] %v1286, 128
    %1296 = vxpose.xlu0.b32.cont [9/16] 0.0, 128
    %1297 = vxpose.xlu0.b32.cont [10/16] 0.0, 128
    %1298 = vxpose.xlu0.b32.cont [11/16] 0.0, 128
    %1299 = vxpose.xlu0.b32.cont [12/16] 0.0, 128
    %1300 = vxpose.xlu0.b32.cont [13/16] 0.0, 128
    %1301 = vxpose.xlu0.b32.cont [14/16] 0.0, 128
    %1302 = vxpose.xlu0.b32.cont [15/16] 0.0, 128
    %1303 = vxpose.xlu0.b32.end [16/16] 0.0, 128
    %v1304 = vpop.trf.xlu0
    %v1305 = vpop.trf.xlu0
    %v1306 = vpop.trf.xlu0
    %v1307 = vpop.trf.xlu0
    %v1308 = vpop.trf.xlu0
    %v1309 = vpop.trf.xlu0
    %v1310 = vpop.trf.xlu0
    %v1311 = vpop.trf.xlu0
    %v1312 = vpop.trf.xlu0
    %v1313 = vpop.trf.xlu0
    %v1314 = vpop.trf.xlu0
    %v1315 = vpop.trf.xlu0
    %v1316 = vpop.trf.xlu0
    %v1317 = vpop.trf.xlu0
    %v1318 = vpop.trf.xlu0
    %v1319 = vpop.trf.xlu0
    %1320 = vxpose.xlu0.b32.start [1/16] %v1273, 128
    %1321 = vxpose.xlu0.b32.cont [2/16] %v1275, 128
    %1322 = vxpose.xlu0.b32.cont [3/16] %v1277, 128
    %1323 = vxpose.xlu0.b32.cont [4/16] %v1279, 128
    %1324 = vxpose.xlu0.b32.cont [5/16] %v1281, 128
    %1325 = vxpose.xlu0.b32.cont [6/16] %v1283, 128
    %1326 = vxpose.xlu0.b32.cont [7/16] %v1285, 128
    %1327 = vxpose.xlu0.b32.cont [8/16] %v1287, 128
    %1328 = vxpose.xlu0.b32.cont [9/16] 0.0, 128
    %1329 = vxpose.xlu0.b32.cont [10/16] 0.0, 128
    %1330 = vxpose.xlu0.b32.cont [11/16] 0.0, 128
    %1331 = vxpose.xlu0.b32.cont [12/16] 0.0, 128
    %1332 = vxpose.xlu0.b32.cont [13/16] 0.0, 128
    %1333 = vxpose.xlu0.b32.cont [14/16] 0.0, 128
    %1334 = vxpose.xlu0.b32.cont [15/16] 0.0, 128
    %1335 = vxpose.xlu0.b32.end [16/16] 0.0, 128
    %v1336 = vpop.trf.xlu0
    %v1337 = vpop.trf.xlu0
    %v1338 = vpop.trf.xlu0
    %v1339 = vpop.trf.xlu0
    %v1340 = vpop.trf.xlu0
    %v1341 = vpop.trf.xlu0
    %v1342 = vpop.trf.xlu0
    %v1343 = vpop.trf.xlu0
    %v1344 = vpop.trf.xlu0
    %v1345 = vpop.trf.xlu0
    %v1346 = vpop.trf.xlu0
    %v1347 = vpop.trf.xlu0
    %v1348 = vpop.trf.xlu0
    %v1349 = vpop.trf.xlu0
    %v1350 = vpop.trf.xlu0
    %v1351 = vpop.trf.xlu0
    %v1353 = vsel %vm146, %v1304, 0
    %v1356 = vsel %vm146, %v1305, 0
    %v1359 = vsel %vm146, %v1306, 0
    %v1362 = vsel %vm146, %v1307, 0
    %v1365 = vsel %vm146, %v1308, 0
    %v1368 = vsel %vm146, %v1309, 0
    %v1371 = vsel %vm146, %v1310, 0
    %v1374 = vsel %vm146, %v1311, 0
    %v1377 = vsel %vm146, %v1312, 0
    %v1380 = vsel %vm146, %v1313, 0
    %v1383 = vsel %vm146, %v1314, 0
    %v1386 = vsel %vm146, %v1315, 0
    %v1389 = vsel %vm146, %v1316, 0
    %v1392 = vsel %vm146, %v1317, 0
    %v1395 = vsel %vm146, %v1318, 0
    %v1398 = vsel %vm146, %v1319, 0
    %v1401 = vsel %vm146, %v1336, 0
    %v1404 = vsel %vm146, %v1337, 0
    %v1407 = vsel %vm146, %v1338, 0
    %v1410 = vsel %vm146, %v1339, 0
    %v1413 = vsel %vm146, %v1340, 0
    %v1416 = vsel %vm146, %v1341, 0
    %v1419 = vsel %vm146, %v1342, 0
    %v1422 = vsel %vm146, %v1343, 0
    %v1425 = vsel %vm146, %v1344, 0
    %v1428 = vsel %vm146, %v1345, 0
    %v1431 = vsel %vm146, %v1346, 0
    %v1434 = vsel %vm146, %v1347, 0
    %v1437 = vsel %vm146, %v1348, 0
    %v1440 = vsel %vm146, %v1349, 0
    %v1443 = vsel %vm146, %v1350, 0
    %v1446 = vsel %vm146, %v1351, 0
    %1448 = vmatprep.subr.mxu0 0.0
    %1449 = vmatpush1.msra.mxu0 %v54
    %1450 = vmatprep.subr.mxu0 0.0
    %1451 = vmatpush1.msra.mxu0 %v55
    %1452 = vmatprep.subr.mxu0 0.0
    %1453 = vmatpush1.msra.mxu0 %v56
    %1454 = vmatprep.subr.mxu0 0.0
    %1455 = vmatpush1.msra.mxu0 %v57
    %1456 = vmatprep.subr.mxu0 0.0
    %1457 = vmatpush1.msra.mxu0 %v58
    %1458 = vmatprep.subr.mxu0 0.0
    %1459 = vmatpush1.msra.mxu0 %v59
    %1460 = vmatprep.subr.mxu0 0.0
    %1461 = vmatpush1.msra.mxu0 %v60
    %1462 = vmatprep.subr.mxu0 0.0
    %1463 = vmatpush1.msra.mxu0 %v61
    %1464 = vmatprep.subr.mxu0 0.0
    %1465 = vmatpush1.msra.mxu0 0.0
    %1466 = vmatprep.subr.mxu0 0.0
    %1467 = vmatpush1.msra.mxu0 0.0
    %1468 = vmatprep.subr.mxu0 0.0
    %1469 = vmatpush1.msra.mxu0 0.0
    %1470 = vmatprep.subr.mxu0 0.0
    %1471 = vmatpush1.msra.mxu0 0.0
    %1472 = vmatprep.subr.mxu0 0.0
    %1473 = vmatpush1.msra.mxu0 0.0
    %1474 = vmatprep.subr.mxu0 0.0
    %1475 = vmatpush1.msra.mxu0 0.0
    %1476 = vmatprep.subr.mxu0 0.0
    %1477 = vmatpush1.msra.mxu0 0.0
    %1478 = vmatprep.subr.mxu0 0.0
    %1479 = vmatpush1.msra.mxu0 0.0
    %1480 = vmatprep.subr.mxu0 0.0
    %1481 = vmatpush1.msra.mxu0 0.0
    %1482 = vmatprep.subr.mxu0 0.0
    %1483 = vmatpush1.msra.mxu0 0.0
    %1484 = vmatprep.subr.mxu0 0.0
    %1485 = vmatpush1.msra.mxu0 0.0
    %1486 = vmatprep.subr.mxu0 0.0
    %1487 = vmatpush1.msra.mxu0 0.0
    %1488 = vmatprep.subr.mxu0 0.0
    %1489 = vmatpush1.msra.mxu0 0.0
    %1490 = vmatprep.subr.mxu0 0.0
    %1491 = vmatpush1.msra.mxu0 0.0
    %1492 = vmatprep.subr.mxu0 0.0
    %1493 = vmatpush1.msra.mxu0 0.0
    %1494 = vmatprep.subr.mxu0 0.0
    %1495 = vmatpush1.msra.mxu0 0.0
    %1496 = vmatprep.subr.mxu0 0.0
    %1497 = vmatpush1.msra.mxu0 0.0
    %1498 = vmatprep.subr.mxu0 0.0
    %1499 = vmatpush1.msra.mxu0 0.0
    %1500 = vmatprep.subr.mxu0 0.0
    %1501 = vmatpush1.msra.mxu0 0.0
    %1502 = vmatprep.subr.mxu0 0.0
    %1503 = vmatpush1.msra.mxu0 0.0
    %1504 = vmatprep.subr.mxu0 0.0
    %1505 = vmatpush1.msra.mxu0 0.0
    %1506 = vmatprep.subr.mxu0 0.0
    %1507 = vmatpush1.msra.mxu0 0.0
    %1508 = vmatprep.subr.mxu0 0.0
    %1509 = vmatpush1.msra.mxu0 0.0
    %1510 = vmatprep.subr.mxu0 0.0
    %1511 = vmatpush1.msra.mxu0 0.0
    %1512 = vmatprep.mubr.f32.mxu0 0.0
    %1513 = vmatmul.mubr.f32.gmra.mrb[0].mxu0 %v1353
    %v1514 = vpop.f32.mrb[0].mxu0
    %v1515 = vadd.f32 0.0, %v1514
    %v1516 = vpop.f32.mrb[0].mxu0
    %1517 = vmatprep.mubr.f32.mxu0 0.0
    %1518 = vmatmul.mubr.f32.gmra.mrb[0].mxu0 %v1356
    %v1519 = vpop.f32.mrb[0].mxu0
    %v1520 = vadd.f32 0.0, %v1519
    %v1521 = vpop.f32.mrb[0].mxu0
    %1522 = vmatprep.mubr.f32.mxu0 0.0
    %1523 = vmatmul.mubr.f32.gmra.mrb[0].mxu0 %v1359
    %v1524 = vpop.f32.mrb[0].mxu0
    %v1525 = vadd.f32 0.0, %v1524
    %v1526 = vpop.f32.mrb[0].mxu0
    %1527 = vmatprep.mubr.f32.mxu0 0.0
    %1528 = vmatmul.mubr.f32.gmra.mrb[0].mxu0 %v1362
    %v1529 = vpop.f32.mrb[0].mxu0
    %v1530 = vadd.f32 0.0, %v1529
    %v1531 = vpop.f32.mrb[0].mxu0
    %1532 = vmatprep.mubr.f32.mxu0 0.0
    %1533 = vmatmul.mubr.f32.gmra.mrb[0].mxu0 %v1365
    %v1534 = vpop.f32.mrb[0].mxu0
    %v1535 = vadd.f32 0.0, %v1534
    %v1536 = vpop.f32.mrb[0].mxu0
    %1537 = vmatprep.mubr.f32.mxu0 0.0
    %1538 = vmatmul.mubr.f32.gmra.mrb[0].mxu0 %v1368
    %v1539 = vpop.f32.mrb[0].mxu0
    %v1540 = vadd.f32 0.0, %v1539
    %v1541 = vpop.f32.mrb[0].mxu0
    %1542 = vmatprep.mubr.f32.mxu0 0.0
    %1543 = vmatmul.mubr.f32.gmra.mrb[0].mxu0 %v1371
    %v1544 = vpop.f32.mrb[0].mxu0
    %v1545 = vadd.f32 0.0, %v1544
    %v1546 = vpop.f32.mrb[0].mxu0
    %1547 = vmatprep.mubr.f32.mxu0 0.0
    %1548 = vmatmul.mubr.f32.gmra.mrb[0].mxu0 %v1374
    %v1549 = vpop.f32.mrb[0].mxu0
    %v1550 = vadd.f32 0.0, %v1549
    %v1551 = vpop.f32.mrb[0].mxu0
    %1552 = vmatprep.mubr.f32.mxu0 0.0
    %1553 = vmatmul.mubr.f32.gmra.mrb[0].mxu0 %v1377
    %v1554 = vpop.f32.mrb[0].mxu0
    %v1555 = vadd.f32 0.0, %v1554
    %v1556 = vpop.f32.mrb[0].mxu0
    %1557 = vmatprep.mubr.f32.mxu0 0.0
    %1558 = vmatmul.mubr.f32.gmra.mrb[0].mxu0 %v1380
    %v1559 = vpop.f32.mrb[0].mxu0
    %v1560 = vadd.f32 0.0, %v1559
    %v1561 = vpop.f32.mrb[0].mxu0
    %1562 = vmatprep.mubr.f32.mxu0 0.0
    %1563 = vmatmul.mubr.f32.gmra.mrb[0].mxu0 %v1383
    %v1564 = vpop.f32.mrb[0].mxu0
    %v1565 = vadd.f32 0.0, %v1564
    %v1566 = vpop.f32.mrb[0].mxu0
    %1567 = vmatprep.mubr.f32.mxu0 0.0
    %1568 = vmatmul.mubr.f32.gmra.mrb[0].mxu0 %v1386
    %v1569 = vpop.f32.mrb[0].mxu0
    %v1570 = vadd.f32 0.0, %v1569
    %v1571 = vpop.f32.mrb[0].mxu0
    %1572 = vmatprep.mubr.f32.mxu0 0.0
    %1573 = vmatmul.mubr.f32.gmra.mrb[0].mxu0 %v1389
    %v1574 = vpop.f32.mrb[0].mxu0
    %v1575 = vadd.f32 0.0, %v1574
    %v1576 = vpop.f32.mrb[0].mxu0
    %1577 = vmatprep.mubr.f32.mxu0 0.0
    %1578 = vmatmul.mubr.f32.gmra.mrb[0].mxu0 %v1392
    %v1579 = vpop.f32.mrb[0].mxu0
    %v1580 = vadd.f32 0.0, %v1579
    %v1581 = vpop.f32.mrb[0].mxu0
    %1582 = vmatprep.mubr.f32.mxu0 0.0
    %1583 = vmatmul.mubr.f32.gmra.mrb[0].mxu0 %v1395
    %v1584 = vpop.f32.mrb[0].mxu0
    %v1585 = vadd.f32 0.0, %v1584
    %v1586 = vpop.f32.mrb[0].mxu0
    %1587 = vmatprep.mubr.f32.mxu0 0.0
    %1588 = vmatmul.mubr.f32.gmra.mrb[0].mxu0 %v1398
    %v1589 = vpop.f32.mrb[0].mxu0
    %v1590 = vadd.f32 0.0, %v1589
    %v1591 = vpop.f32.mrb[0].mxu0
    %1592 = vmatprep.mubr.f32.mxu0 0.0
    %1593 = vmatmul.mubr.f32.gmra.mrb[0].mxu0 %v1401
    %v1594 = vpop.f32.mrb[0].mxu0
    %v1595 = vadd.f32 0.0, %v1594
    %v1596 = vpop.f32.mrb[0].mxu0
    %1597 = vmatprep.mubr.f32.mxu0 0.0
    %1598 = vmatmul.mubr.f32.gmra.mrb[0].mxu0 %v1404
    %v1599 = vpop.f32.mrb[0].mxu0
    %v1600 = vadd.f32 0.0, %v1599
    %v1601 = vpop.f32.mrb[0].mxu0
    %1602 = vmatprep.mubr.f32.mxu0 0.0
    %1603 = vmatmul.mubr.f32.gmra.mrb[0].mxu0 %v1407
    %v1604 = vpop.f32.mrb[0].mxu0
    %v1605 = vadd.f32 0.0, %v1604
    %v1606 = vpop.f32.mrb[0].mxu0
    %1607 = vmatprep.mubr.f32.mxu0 0.0
    %1608 = vmatmul.mubr.f32.gmra.mrb[0].mxu0 %v1410
    %v1609 = vpop.f32.mrb[0].mxu0
    %v1610 = vadd.f32 0.0, %v1609
    %v1611 = vpop.f32.mrb[0].mxu0
    %1612 = vmatprep.mubr.f32.mxu0 0.0
    %1613 = vmatmul.mubr.f32.gmra.mrb[0].mxu0 %v1413
    %v1614 = vpop.f32.mrb[0].mxu0
    %v1615 = vadd.f32 0.0, %v1614
    %v1616 = vpop.f32.mrb[0].mxu0
    %1617 = vmatprep.mubr.f32.mxu0 0.0
    %1618 = vmatmul.mubr.f32.gmra.mrb[0].mxu0 %v1416
    %v1619 = vpop.f32.mrb[0].mxu0
    %v1620 = vadd.f32 0.0, %v1619
    %v1621 = vpop.f32.mrb[0].mxu0
    %1622 = vmatprep.mubr.f32.mxu0 0.0
    %1623 = vmatmul.mubr.f32.gmra.mrb[0].mxu0 %v1419
    %v1624 = vpop.f32.mrb[0].mxu0
    %v1625 = vadd.f32 0.0, %v1624
    %v1626 = vpop.f32.mrb[0].mxu0
    %1627 = vmatprep.mubr.f32.mxu0 0.0
    %1628 = vmatmul.mubr.f32.gmra.mrb[0].mxu0 %v1422
    %v1629 = vpop.f32.mrb[0].mxu0
    %v1630 = vadd.f32 0.0, %v1629
    %v1631 = vpop.f32.mrb[0].mxu0
    %1632 = vmatprep.mubr.f32.mxu0 0.0
    %1633 = vmatmul.mubr.f32.gmra.mrb[0].mxu0 %v1425
    %v1634 = vpop.f32.mrb[0].mxu0
    %v1635 = vadd.f32 0.0, %v1634
    %v1636 = vpop.f32.mrb[0].mxu0
    %1637 = vmatprep.mubr.f32.mxu0 0.0
    %1638 = vmatmul.mubr.f32.gmra.mrb[0].mxu0 %v1428
    %v1639 = vpop.f32.mrb[0].mxu0
    %v1640 = vadd.f32 0.0, %v1639
    %v1641 = vpop.f32.mrb[0].mxu0
    %1642 = vmatprep.mubr.f32.mxu0 0.0
    %1643 = vmatmul.mubr.f32.gmra.mrb[0].mxu0 %v1431
    %v1644 = vpop.f32.mrb[0].mxu0
    %v1645 = vadd.f32 0.0, %v1644
    %v1646 = vpop.f32.mrb[0].mxu0
    %1647 = vmatprep.mubr.f32.mxu0 0.0
    %1648 = vmatmul.mubr.f32.gmra.mrb[0].mxu0 %v1434
    %v1649 = vpop.f32.mrb[0].mxu0
    %v1650 = vadd.f32 0.0, %v1649
    %v1651 = vpop.f32.mrb[0].mxu0
    %1652 = vmatprep.mubr.f32.mxu0 0.0
    %1653 = vmatmul.mubr.f32.gmra.mrb[0].mxu0 %v1437
    %v1654 = vpop.f32.mrb[0].mxu0
    %v1655 = vadd.f32 0.0, %v1654
    %v1656 = vpop.f32.mrb[0].mxu0
    %1657 = vmatprep.mubr.f32.mxu0 0.0
    %1658 = vmatmul.mubr.f32.gmra.mrb[0].mxu0 %v1440
    %v1659 = vpop.f32.mrb[0].mxu0
    %v1660 = vadd.f32 0.0, %v1659
    %v1661 = vpop.f32.mrb[0].mxu0
    %1662 = vmatprep.mubr.f32.mxu0 0.0
    %1663 = vmatmul.mubr.f32.gmra.mrb[0].mxu0 %v1443
    %v1664 = vpop.f32.mrb[0].mxu0
    %v1665 = vadd.f32 0.0, %v1664
    %v1666 = vpop.f32.mrb[0].mxu0
    %1667 = vmatprep.mubr.f32.mxu0 0.0
    %1668 = vmatmul.mubr.f32.gmra.mrb[0].mxu0 %v1446
    %v1669 = vpop.f32.mrb[0].mxu0
    %v1670 = vadd.f32 0.0, %v1669
    %v1671 = vpop.f32.mrb[0].mxu0
    %1672 = vdwg.mxu0
    %s1673 = scalar_lea.vmem %s1, 64
    %v1674 = vld [vmem:[%s1673] sm:$0xff]
    %v1675 = vld [vmem:[%s1673 + $0x8] sm:$0xff]
    %v1676 = vld [vmem:[%s1673 + $0x10] sm:$0xff]
    %v1677 = vld [vmem:[%s1673 + $0x18] sm:$0xff]
    %v1678 = vld [vmem:[%s1673 + $0x20] sm:$0xff]
    %v1679 = vld [vmem:[%s1673 + $0x28] sm:$0xff]
    %v1680 = vld [vmem:[%s1673 + $0x30] sm:$0xff]
    %v1681 = vld [vmem:[%s1673 + $0x38] sm:$0xff]
    %1682 = vxpose.xlu0.b32.start [1/16] %v1674, 128
    %1683 = vxpose.xlu0.b32.cont [2/16] %v1676, 128
    %1684 = vxpose.xlu0.b32.cont [3/16] %v1678, 128
    %1685 = vxpose.xlu0.b32.cont [4/16] %v1680, 128
    %1686 = vxpose.xlu0.b32.cont [5/16] 0.0, 128
    %1687 = vxpose.xlu0.b32.cont [6/16] 0.0, 128
    %1688 = vxpose.xlu0.b32.cont [7/16] 0.0, 128
    %1689 = vxpose.xlu0.b32.cont [8/16] 0.0, 128
    %1690 = vxpose.xlu0.b32.cont [9/16] 0.0, 128
    %1691 = vxpose.xlu0.b32.cont [10/16] 0.0, 128
    %1692 = vxpose.xlu0.b32.cont [11/16] 0.0, 128
    %1693 = vxpose.xlu0.b32.cont [12/16] 0.0, 128
    %1694 = vxpose.xlu0.b32.cont [13/16] 0.0, 128
    %1695 = vxpose.xlu0.b32.cont [14/16] 0.0, 128
    %1696 = vxpose.xlu0.b32.cont [15/16] 0.0, 128
    %1697 = vxpose.xlu0.b32.end [16/16] 0.0, 128
    %v1698 = vpop.trf.xlu0
    %v1699 = vpop.trf.xlu0
    %v1700 = vpop.trf.xlu0
    %v1701 = vpop.trf.xlu0
    %v1702 = vpop.trf.xlu0
    %v1703 = vpop.trf.xlu0
    %v1704 = vpop.trf.xlu0
    %v1705 = vpop.trf.xlu0
    %v1706 = vpop.trf.xlu0
    %v1707 = vpop.trf.xlu0
    %v1708 = vpop.trf.xlu0
    %v1709 = vpop.trf.xlu0
    %v1710 = vpop.trf.xlu0
    %v1711 = vpop.trf.xlu0
    %v1712 = vpop.trf.xlu0
    %v1713 = vpop.trf.xlu0
    %1714 = vxpose.xlu0.b32.start [1/16] %v1675, 128
    %1715 = vxpose.xlu0.b32.cont [2/16] %v1677, 128
    %1716 = vxpose.xlu0.b32.cont [3/16] %v1679, 128
    %1717 = vxpose.xlu0.b32.cont [4/16] %v1681, 128
    %1718 = vxpose.xlu0.b32.cont [5/16] 0.0, 128
    %1719 = vxpose.xlu0.b32.cont [6/16] 0.0, 128
    %1720 = vxpose.xlu0.b32.cont [7/16] 0.0, 128
    %1721 = vxpose.xlu0.b32.cont [8/16] 0.0, 128
    %1722 = vxpose.xlu0.b32.cont [9/16] 0.0, 128
    %1723 = vxpose.xlu0.b32.cont [10/16] 0.0, 128
    %1724 = vxpose.xlu0.b32.cont [11/16] 0.0, 128
    %1725 = vxpose.xlu0.b32.cont [12/16] 0.0, 128
    %1726 = vxpose.xlu0.b32.cont [13/16] 0.0, 128
    %1727 = vxpose.xlu0.b32.cont [14/16] 0.0, 128
    %1728 = vxpose.xlu0.b32.cont [15/16] 0.0, 128
    %1729 = vxpose.xlu0.b32.end [16/16] 0.0, 128
    %v1730 = vpop.trf.xlu0
    %v1731 = vpop.trf.xlu0
    %v1732 = vpop.trf.xlu0
    %v1733 = vpop.trf.xlu0
    %v1734 = vpop.trf.xlu0
    %v1735 = vpop.trf.xlu0
    %v1736 = vpop.trf.xlu0
    %v1737 = vpop.trf.xlu0
    %v1738 = vpop.trf.xlu0
    %v1739 = vpop.trf.xlu0
    %v1740 = vpop.trf.xlu0
    %v1741 = vpop.trf.xlu0
    %v1742 = vpop.trf.xlu0
    %v1743 = vpop.trf.xlu0
    %v1744 = vpop.trf.xlu0
    %v1745 = vpop.trf.xlu0
    %v1747 = vsel %vm540, %v1698, 0
    %v1750 = vsel %vm540, %v1699, 0
    %v1753 = vsel %vm540, %v1700, 0
    %v1756 = vsel %vm540, %v1701, 0
    %v1759 = vsel %vm540, %v1702, 0
    %v1762 = vsel %vm540, %v1703, 0
    %v1765 = vsel %vm540, %v1704, 0
    %v1768 = vsel %vm540, %v1705, 0
    %v1771 = vsel %vm540, %v1706, 0
    %v1774 = vsel %vm540, %v1707, 0
    %v1777 = vsel %vm540, %v1708, 0
    %v1780 = vsel %vm540, %v1709, 0
    %v1783 = vsel %vm540, %v1710, 0
    %v1786 = vsel %vm540, %v1711, 0
    %v1789 = vsel %vm540, %v1712, 0
    %v1792 = vsel %vm540, %v1713, 0
    %v1795 = vsel %vm540, %v1730, 0
    %v1798 = vsel %vm540, %v1731, 0
    %v1801 = vsel %vm540, %v1732, 0
    %v1804 = vsel %vm540, %v1733, 0
    %v1807 = vsel %vm540, %v1734, 0
    %v1810 = vsel %vm540, %v1735, 0
    %v1813 = vsel %vm540, %v1736, 0
    %v1816 = vsel %vm540, %v1737, 0
    %v1819 = vsel %vm540, %v1738, 0
    %v1822 = vsel %vm540, %v1739, 0
    %v1825 = vsel %vm540, %v1740, 0
    %v1828 = vsel %vm540, %v1741, 0
    %v1831 = vsel %vm540, %v1742, 0
    %v1834 = vsel %vm540, %v1743, 0
    %v1837 = vsel %vm540, %v1744, 0
    %v1840 = vsel %vm540, %v1745, 0
    %1842 = vmatprep.subr.mxu0 0.0
    %1843 = vmatpush1.msra.mxu0 %v62
    %1844 = vmatprep.subr.mxu0 0.0
    %1845 = vmatpush1.msra.mxu0 %v63
    %1846 = vmatprep.subr.mxu0 0.0
    %1847 = vmatpush1.msra.mxu0 %v64
    %1848 = vmatprep.subr.mxu0 0.0
    %1849 = vmatpush1.msra.mxu0 %v65
    %1850 = vmatprep.subr.mxu0 0.0
    %1851 = vmatpush1.msra.mxu0 0.0
    %1852 = vmatprep.subr.mxu0 0.0
    %1853 = vmatpush1.msra.mxu0 0.0
    %1854 = vmatprep.subr.mxu0 0.0
    %1855 = vmatpush1.msra.mxu0 0.0
    %1856 = vmatprep.subr.mxu0 0.0
    %1857 = vmatpush1.msra.mxu0 0.0
    %1858 = vmatprep.subr.mxu0 0.0
    %1859 = vmatpush1.msra.mxu0 0.0
    %1860 = vmatprep.subr.mxu0 0.0
    %1861 = vmatpush1.msra.mxu0 0.0
    %1862 = vmatprep.subr.mxu0 0.0
    %1863 = vmatpush1.msra.mxu0 0.0
    %1864 = vmatprep.subr.mxu0 0.0
    %1865 = vmatpush1.msra.mxu0 0.0
    %1866 = vmatprep.subr.mxu0 0.0
    %1867 = vmatpush1.msra.mxu0 0.0
    %1868 = vmatprep.subr.mxu0 0.0
    %1869 = vmatpush1.msra.mxu0 0.0
    %1870 = vmatprep.subr.mxu0 0.0
    %1871 = vmatpush1.msra.mxu0 0.0
    %1872 = vmatprep.subr.mxu0 0.0
    %1873 = vmatpush1.msra.mxu0 0.0
    %1874 = vmatprep.subr.mxu0 0.0
    %1875 = vmatpush1.msra.mxu0 0.0
    %1876 = vmatprep.subr.mxu0 0.0
    %1877 = vmatpush1.msra.mxu0 0.0
    %1878 = vmatprep.subr.mxu0 0.0
    %1879 = vmatpush1.msra.mxu0 0.0
    %1880 = vmatprep.subr.mxu0 0.0
    %1881 = vmatpush1.msra.mxu0 0.0
    %1882 = vmatprep.subr.mxu0 0.0
    %1883 = vmatpush1.msra.mxu0 0.0
    %1884 = vmatprep.subr.mxu0 0.0
    %1885 = vmatpush1.msra.mxu0 0.0
    %1886 = vmatprep.subr.mxu0 0.0
    %1887 = vmatpush1.msra.mxu0 0.0
    %1888 = vmatprep.subr.mxu0 0.0
    %1889 = vmatpush1.msra.mxu0 0.0
    %1890 = vmatprep.subr.mxu0 0.0
    %1891 = vmatpush1.msra.mxu0 0.0
    %1892 = vmatprep.subr.mxu0 0.0
    %1893 = vmatpush1.msra.mxu0 0.0
    %1894 = vmatprep.subr.mxu0 0.0
    %1895 = vmatpush1.msra.mxu0 0.0
    %1896 = vmatprep.subr.mxu0 0.0
    %1897 = vmatpush1.msra.mxu0 0.0
    %1898 = vmatprep.subr.mxu0 0.0
    %1899 = vmatpush1.msra.mxu0 0.0
    %1900 = vmatprep.subr.mxu0 0.0
    %1901 = vmatpush1.msra.mxu0 0.0
    %1902 = vmatprep.subr.mxu0 0.0
    %1903 = vmatpush1.msra.mxu0 0.0
    %1904 = vmatprep.subr.mxu0 0.0
    %1905 = vmatpush1.msra.mxu0 0.0
    %1906 = vmatprep.mubr.f32.mxu0 0.0
    %1907 = vmatmul.mubr.f32.gmra.mrb[0].mxu0 %v1747
    %v1908 = vpop.f32.mrb[0].mxu0
    %v1909 = vadd.f32 0.0, %v1908
    %v1910 = vpop.f32.mrb[0].mxu0
    %1911 = vmatprep.mubr.f32.mxu0 0.0
    %1912 = vmatmul.mubr.f32.gmra.mrb[0].mxu0 %v1750
    %v1913 = vpop.f32.mrb[0].mxu0
    %v1914 = vadd.f32 0.0, %v1913
    %v1915 = vpop.f32.mrb[0].mxu0
    %1916 = vmatprep.mubr.f32.mxu0 0.0
    %1917 = vmatmul.mubr.f32.gmra.mrb[0].mxu0 %v1753
    %v1918 = vpop.f32.mrb[0].mxu0
    %v1919 = vadd.f32 0.0, %v1918
    %v1920 = vpop.f32.mrb[0].mxu0
    %1921 = vmatprep.mubr.f32.mxu0 0.0
    %1922 = vmatmul.mubr.f32.gmra.mrb[0].mxu0 %v1756
    %v1923 = vpop.f32.mrb[0].mxu0
    %v1924 = vadd.f32 0.0, %v1923
    %v1925 = vpop.f32.mrb[0].mxu0
    %1926 = vmatprep.mubr.f32.mxu0 0.0
    %1927 = vmatmul.mubr.f32.gmra.mrb[0].mxu0 %v1759
    %v1928 = vpop.f32.mrb[0].mxu0
    %v1929 = vadd.f32 0.0, %v1928
    %v1930 = vpop.f32.mrb[0].mxu0
    %1931 = vmatprep.mubr.f32.mxu0 0.0
    %1932 = vmatmul.mubr.f32.gmra.mrb[0].mxu0 %v1762
    %v1933 = vpop.f32.mrb[0].mxu0
    %v1934 = vadd.f32 0.0, %v1933
    %v1935 = vpop.f32.mrb[0].mxu0
    %1936 = vmatprep.mubr.f32.mxu0 0.0
    %1937 = vmatmul.mubr.f32.gmra.mrb[0].mxu0 %v1765
    %v1938 = vpop.f32.mrb[0].mxu0
    %v1939 = vadd.f32 0.0, %v1938
    %v1940 = vpop.f32.mrb[0].mxu0
    %1941 = vmatprep.mubr.f32.mxu0 0.0
    %1942 = vmatmul.mubr.f32.gmra.mrb[0].mxu0 %v1768
    %v1943 = vpop.f32.mrb[0].mxu0
    %v1944 = vadd.f32 0.0, %v1943
    %v1945 = vpop.f32.mrb[0].mxu0
    %1946 = vmatprep.mubr.f32.mxu0 0.0
    %1947 = vmatmul.mubr.f32.gmra.mrb[0].mxu0 %v1771
    %v1948 = vpop.f32.mrb[0].mxu0
    %v1949 = vadd.f32 0.0, %v1948
    %v1950 = vpop.f32.mrb[0].mxu0
    %1951 = vmatprep.mubr.f32.mxu0 0.0
    %1952 = vmatmul.mubr.f32.gmra.mrb[0].mxu0 %v1774
    %v1953 = vpop.f32.mrb[0].mxu0
    %v1954 = vadd.f32 0.0, %v1953
    %v1955 = vpop.f32.mrb[0].mxu0
    %1956 = vmatprep.mubr.f32.mxu0 0.0
    %1957 = vmatmul.mubr.f32.gmra.mrb[0].mxu0 %v1777
    %v1958 = vpop.f32.mrb[0].mxu0
    %v1959 = vadd.f32 0.0, %v1958
    %v1960 = vpop.f32.mrb[0].mxu0
    %1961 = vmatprep.mubr.f32.mxu0 0.0
    %1962 = vmatmul.mubr.f32.gmra.mrb[0].mxu0 %v1780
    %v1963 = vpop.f32.mrb[0].mxu0
    %v1964 = vadd.f32 0.0, %v1963
    %v1965 = vpop.f32.mrb[0].mxu0
    %1966 = vmatprep.mubr.f32.mxu0 0.0
    %1967 = vmatmul.mubr.f32.gmra.mrb[0].mxu0 %v1783
    %v1968 = vpop.f32.mrb[0].mxu0
    %v1969 = vadd.f32 0.0, %v1968
    %v1970 = vpop.f32.mrb[0].mxu0
    %1971 = vmatprep.mubr.f32.mxu0 0.0
    %1972 = vmatmul.mubr.f32.gmra.mrb[0].mxu0 %v1786
    %v1973 = vpop.f32.mrb[0].mxu0
    %v1974 = vadd.f32 0.0, %v1973
    %v1975 = vpop.f32.mrb[0].mxu0
    %1976 = vmatprep.mubr.f32.mxu0 0.0
    %1977 = vmatmul.mubr.f32.gmra.mrb[0].mxu0 %v1789
    %v1978 = vpop.f32.mrb[0].mxu0
    %v1979 = vadd.f32 0.0, %v1978
    %v1980 = vpop.f32.mrb[0].mxu0
    %1981 = vmatprep.mubr.f32.mxu0 0.0
    %1982 = vmatmul.mubr.f32.gmra.mrb[0].mxu0 %v1792
    %v1983 = vpop.f32.mrb[0].mxu0
    %v1984 = vadd.f32 0.0, %v1983
    %v1985 = vpop.f32.mrb[0].mxu0
    %1986 = vmatprep.mubr.f32.mxu0 0.0
    %1987 = vmatmul.mubr.f32.gmra.mrb[0].mxu0 %v1795
    %v1988 = vpop.f32.mrb[0].mxu0
    %v1989 = vadd.f32 0.0, %v1988
    %v1990 = vpop.f32.mrb[0].mxu0
    %1991 = vmatprep.mubr.f32.mxu0 0.0
    %1992 = vmatmul.mubr.f32.gmra.mrb[0].mxu0 %v1798
    %v1993 = vpop.f32.mrb[0].mxu0
    %v1994 = vadd.f32 0.0, %v1993
    %v1995 = vpop.f32.mrb[0].mxu0
    %1996 = vmatprep.mubr.f32.mxu0 0.0
    %1997 = vmatmul.mubr.f32.gmra.mrb[0].mxu0 %v1801
    %v1998 = vpop.f32.mrb[0].mxu0
    %v1999 = vadd.f32 0.0, %v1998
    %v2000 = vpop.f32.mrb[0].mxu0
    %2001 = vmatprep.mubr.f32.mxu0 0.0
    %2002 = vmatmul.mubr.f32.gmra.mrb[0].mxu0 %v1804
    %v2003 = vpop.f32.mrb[0].mxu0
    %v2004 = vadd.f32 0.0, %v2003
    %v2005 = vpop.f32.mrb[0].mxu0
    %2006 = vmatprep.mubr.f32.mxu0 0.0
    %2007 = vmatmul.mubr.f32.gmra.mrb[0].mxu0 %v1807
    %v2008 = vpop.f32.mrb[0].mxu0
    %v2009 = vadd.f32 0.0, %v2008
    %v2010 = vpop.f32.mrb[0].mxu0
    %2011 = vmatprep.mubr.f32.mxu0 0.0
    %2012 = vmatmul.mubr.f32.gmra.mrb[0].mxu0 %v1810
    %v2013 = vpop.f32.mrb[0].mxu0
    %v2014 = vadd.f32 0.0, %v2013
    %v2015 = vpop.f32.mrb[0].mxu0
    %2016 = vmatprep.mubr.f32.mxu0 0.0
    %2017 = vmatmul.mubr.f32.gmra.mrb[0].mxu0 %v1813
    %v2018 = vpop.f32.mrb[0].mxu0
    %v2019 = vadd.f32 0.0, %v2018
    %v2020 = vpop.f32.mrb[0].mxu0
    %2021 = vmatprep.mubr.f32.mxu0 0.0
    %2022 = vmatmul.mubr.f32.gmra.mrb[0].mxu0 %v1816
    %v2023 = vpop.f32.mrb[0].mxu0
    %v2024 = vadd.f32 0.0, %v2023
    %v2025 = vpop.f32.mrb[0].mxu0
    %2026 = vmatprep.mubr.f32.mxu0 0.0
    %2027 = vmatmul.mubr.f32.gmra.mrb[0].mxu0 %v1819
    %v2028 = vpop.f32.mrb[0].mxu0
    %v2029 = vadd.f32 0.0, %v2028
    %v2030 = vpop.f32.mrb[0].mxu0
    %2031 = vmatprep.mubr.f32.mxu0 0.0
    %2032 = vmatmul.mubr.f32.gmra.mrb[0].mxu0 %v1822
    %v2033 = vpop.f32.mrb[0].mxu0
    %v2034 = vadd.f32 0.0, %v2033
    %v2035 = vpop.f32.mrb[0].mxu0
    %2036 = vmatprep.mubr.f32.mxu0 0.0
    %2037 = vmatmul.mubr.f32.gmra.mrb[0].mxu0 %v1825
    %v2038 = vpop.f32.mrb[0].mxu0
    %v2039 = vadd.f32 0.0, %v2038
    %v2040 = vpop.f32.mrb[0].mxu0
    %2041 = vmatprep.mubr.f32.mxu0 0.0
    %2042 = vmatmul.mubr.f32.gmra.mrb[0].mxu0 %v1828
    %v2043 = vpop.f32.mrb[0].mxu0
    %v2044 = vadd.f32 0.0, %v2043
    %v2045 = vpop.f32.mrb[0].mxu0
    %2046 = vmatprep.mubr.f32.mxu0 0.0
    %2047 = vmatmul.mubr.f32.gmra.mrb[0].mxu0 %v1831
    %v2048 = vpop.f32.mrb[0].mxu0
    %v2049 = vadd.f32 0.0, %v2048
    %v2050 = vpop.f32.mrb[0].mxu0
    %2051 = vmatprep.mubr.f32.mxu0 0.0
    %2052 = vmatmul.mubr.f32.gmra.mrb[0].mxu0 %v1834
    %v2053 = vpop.f32.mrb[0].mxu0
    %v2054 = vadd.f32 0.0, %v2053
    %v2055 = vpop.f32.mrb[0].mxu0
    %2056 = vmatprep.mubr.f32.mxu0 0.0
    %2057 = vmatmul.mubr.f32.gmra.mrb[0].mxu0 %v1837
    %v2058 = vpop.f32.mrb[0].mxu0
    %v2059 = vadd.f32 0.0, %v2058
    %v2060 = vpop.f32.mrb[0].mxu0
    %2061 = vmatprep.mubr.f32.mxu0 0.0
    %2062 = vmatmul.mubr.f32.gmra.mrb[0].mxu0 %v1840
    %v2063 = vpop.f32.mrb[0].mxu0
    %v2064 = vadd.f32 0.0, %v2063
    %v2065 = vpop.f32.mrb[0].mxu0
    %2066 = vdwg.mxu0
    %s2067 = scalar_lea.vmem [#allocation2], 256
    %2068 = vst.msk [vmem:[%s2067] sm:$0xff] %vm862, %v1515
    %2069 = vst.msk [vmem:[%s2067 + $0x8] sm:$0xff] %vm862, %v1520
    %2070 = vst.msk [vmem:[%s2067 + $0x10] sm:$0xff] %vm862, %v1525
    %2071 = vst.msk [vmem:[%s2067 + $0x18] sm:$0xff] %vm862, %v1530
    %2072 = vst.msk [vmem:[%s2067 + $0x20] sm:$0xff] %vm862, %v1535
    %2073 = vst.msk [vmem:[%s2067 + $0x28] sm:$0xff] %vm862, %v1540
    %2074 = vst.msk [vmem:[%s2067 + $0x30] sm:$0xff] %vm862, %v1545
    %2075 = vst.msk [vmem:[%s2067 + $0x38] sm:$0xff] %vm862, %v1550
    %2076 = vst.msk [vmem:[%s2067 + $0x40] sm:$0xff] %vm862, %v1555
    %2077 = vst.msk [vmem:[%s2067 + $0x48] sm:$0xff] %vm862, %v1560
    %2078 = vst.msk [vmem:[%s2067 + $0x50] sm:$0xff] %vm862, %v1565
    %2079 = vst.msk [vmem:[%s2067 + $0x58] sm:$0xff] %vm862, %v1570
    %2080 = vst.msk [vmem:[%s2067 + $0x60] sm:$0xff] %vm862, %v1575
    %2081 = vst.msk [vmem:[%s2067 + $0x68] sm:$0xff] %vm862, %v1580
    %2082 = vst.msk [vmem:[%s2067 + $0x70] sm:$0xff] %vm862, %v1585
    %2083 = vst.msk [vmem:[%s2067 + $0x78] sm:$0xff] %vm862, %v1590
    %2084 = vst.msk [vmem:[%s2067 + $0x80] sm:$0xff] %vm862, %v1595
    %2085 = vst.msk [vmem:[%s2067 + $0x88] sm:$0xff] %vm862, %v1600
    %2086 = vst.msk [vmem:[%s2067 + $0x90] sm:$0xff] %vm862, %v1605
    %2087 = vst.msk [vmem:[%s2067 + $0x98] sm:$0xff] %vm862, %v1610
    %2088 = vst.msk [vmem:[%s2067 + $0xa0] sm:$0xff] %vm862, %v1615
    %2089 = vst.msk [vmem:[%s2067 + $0xa8] sm:$0xff] %vm862, %v1620
    %2090 = vst.msk [vmem:[%s2067 + $0xb0] sm:$0xff] %vm862, %v1625
    %2091 = vst.msk [vmem:[%s2067 + $0xb8] sm:$0xff] %vm862, %v1630
    %2092 = vst.msk [vmem:[%s2067 + $0xc0] sm:$0xff] %vm862, %v1635
    %2093 = vst.msk [vmem:[%s2067 + $0xc8] sm:$0xff] %vm862, %v1640
    %2094 = vst.msk [vmem:[%s2067 + $0xd0] sm:$0xff] %vm862, %v1645
    %2095 = vst.msk [vmem:[%s2067 + $0xd8] sm:$0xff] %vm862, %v1650
    %2096 = vst.msk [vmem:[%s2067 + $0xe0] sm:$0xff] %vm862, %v1655
    %2097 = vst.msk [vmem:[%s2067 + $0xe8] sm:$0xff] %vm862, %v1660
    %2098 = vst.msk [vmem:[%s2067 + $0xf0] sm:$0xff] %vm862, %v1665
    %2099 = vst.msk [vmem:[%s2067 + $0xf8] sm:$0xff] %vm862, %v1670
    %s2100 = scalar_lea.vmem [#allocation3], 256
    %2101 = vst.msk [vmem:[%s2100] sm:$0xff] %vm540, %v1909
    %2102 = vst.msk [vmem:[%s2100 + $0x8] sm:$0xff] %vm540, %v1914
    %2103 = vst.msk [vmem:[%s2100 + $0x10] sm:$0xff] %vm540, %v1919
    %2104 = vst.msk [vmem:[%s2100 + $0x18] sm:$0xff] %vm540, %v1924
    %2105 = vst.msk [vmem:[%s2100 + $0x20] sm:$0xff] %vm540, %v1929
    %2106 = vst.msk [vmem:[%s2100 + $0x28] sm:$0xff] %vm540, %v1934
    %2107 = vst.msk [vmem:[%s2100 + $0x30] sm:$0xff] %vm540, %v1939
    %2108 = vst.msk [vmem:[%s2100 + $0x38] sm:$0xff] %vm540, %v1944
    %2109 = vst.msk [vmem:[%s2100 + $0x40] sm:$0xff] %vm540, %v1949
    %2110 = vst.msk [vmem:[%s2100 + $0x48] sm:$0xff] %vm540, %v1954
    %2111 = vst.msk [vmem:[%s2100 + $0x50] sm:$0xff] %vm540, %v1959
    %2112 = vst.msk [vmem:[%s2100 + $0x58] sm:$0xff] %vm540, %v1964
    %2113 = vst.msk [vmem:[%s2100 + $0x60] sm:$0xff] %vm540, %v1969
    %2114 = vst.msk [vmem:[%s2100 + $0x68] sm:$0xff] %vm540, %v1974
    %2115 = vst.msk [vmem:[%s2100 + $0x70] sm:$0xff] %vm540, %v1979
    %2116 = vst.msk [vmem:[%s2100 + $0x78] sm:$0xff] %vm540, %v1984
    %2117 = vst.msk [vmem:[%s2100 + $0x80] sm:$0xff] %vm540, %v1989
    %2118 = vst.msk [vmem:[%s2100 + $0x88] sm:$0xff] %vm540, %v1994
    %2119 = vst.msk [vmem:[%s2100 + $0x90] sm:$0xff] %vm540, %v1999
    %2120 = vst.msk [vmem:[%s2100 + $0x98] sm:$0xff] %vm540, %v2004
    %2121 = vst.msk [vmem:[%s2100 + $0xa0] sm:$0xff] %vm540, %v2009
    %2122 = vst.msk [vmem:[%s2100 + $0xa8] sm:$0xff] %vm540, %v2014
    %2123 = vst.msk [vmem:[%s2100 + $0xb0] sm:$0xff] %vm540, %v2019
    %2124 = vst.msk [vmem:[%s2100 + $0xb8] sm:$0xff] %vm540, %v2024
    %2125 = vst.msk [vmem:[%s2100 + $0xc0] sm:$0xff] %vm540, %v2029
    %2126 = vst.msk [vmem:[%s2100 + $0xc8] sm:$0xff] %vm540, %v2034
    %2127 = vst.msk [vmem:[%s2100 + $0xd0] sm:$0xff] %vm540, %v2039
    %2128 = vst.msk [vmem:[%s2100 + $0xd8] sm:$0xff] %vm540, %v2044
    %2129 = vst.msk [vmem:[%s2100 + $0xe0] sm:$0xff] %vm540, %v2049
    %2130 = vst.msk [vmem:[%s2100 + $0xe8] sm:$0xff] %vm540, %v2054
    %2131 = vst.msk [vmem:[%s2100 + $0xf0] sm:$0xff] %vm540, %v2059
    %2132 = vst.msk [vmem:[%s2100 + $0xf8] sm:$0xff] %vm540, %v2064
    %v2133 = vsel %vm862, %v1515, 0.0
    %v2134 = vsel %vm862, %v1520, 0.0
    %v2135 = vadd.f32 %v2133, %v2134
    %v2136 = vsel %vm862, %v1525, 0.0
    %v2137 = vadd.f32 %v2135, %v2136
    %v2138 = vsel %vm862, %v1530, 0.0
    %v2139 = vadd.f32 %v2137, %v2138
    %v2140 = vsel %vm862, %v1535, 0.0
    %v2141 = vadd.f32 %v2139, %v2140
    %v2142 = vsel %vm862, %v1540, 0.0
    %v2143 = vadd.f32 %v2141, %v2142
    %v2144 = vsel %vm862, %v1545, 0.0
    %v2145 = vadd.f32 %v2143, %v2144
    %v2146 = vsel %vm862, %v1550, 0.0
    %v2147 = vadd.f32 %v2145, %v2146
    %v2148 = vsel %vm862, %v1555, 0.0
    %v2149 = vadd.f32 %v2147, %v2148
    %v2150 = vsel %vm862, %v1560, 0.0
    %v2151 = vadd.f32 %v2149, %v2150
    %v2152 = vsel %vm862, %v1565, 0.0
    %v2153 = vadd.f32 %v2151, %v2152
    %v2154 = vsel %vm862, %v1570, 0.0
    %v2155 = vadd.f32 %v2153, %v2154
    %v2156 = vsel %vm862, %v1575, 0.0
    %v2157 = vadd.f32 %v2155, %v2156
    %v2158 = vsel %vm862, %v1580, 0.0
    %v2159 = vadd.f32 %v2157, %v2158
    %v2160 = vsel %vm862, %v1585, 0.0
    %v2161 = vadd.f32 %v2159, %v2160
    %v2162 = vsel %vm862, %v1590, 0.0
    %v2163 = vadd.f32 %v2161, %v2162
    %v2164 = vsel %vm862, %v1595, 0.0
    %v2165 = vadd.f32 %v2163, %v2164
    %v2166 = vsel %vm862, %v1600, 0.0
    %v2167 = vadd.f32 %v2165, %v2166
    %v2168 = vsel %vm862, %v1605, 0.0
    %v2169 = vadd.f32 %v2167, %v2168
    %v2170 = vsel %vm862, %v1610, 0.0
    %v2171 = vadd.f32 %v2169, %v2170
    %v2172 = vsel %vm862, %v1615, 0.0
    %v2173 = vadd.f32 %v2171, %v2172
    %v2174 = vsel %vm862, %v1620, 0.0
    %v2175 = vadd.f32 %v2173, %v2174
    %v2176 = vsel %vm862, %v1625, 0.0
    %v2177 = vadd.f32 %v2175, %v2176
    %v2178 = vsel %vm862, %v1630, 0.0
    %v2179 = vadd.f32 %v2177, %v2178
    %v2180 = vsel %vm862, %v1635, 0.0
    %v2181 = vadd.f32 %v2179, %v2180
    %v2182 = vsel %vm862, %v1640, 0.0
    %v2183 = vadd.f32 %v2181, %v2182
    %v2184 = vsel %vm862, %v1645, 0.0
    %v2185 = vadd.f32 %v2183, %v2184
    %v2186 = vsel %vm862, %v1650, 0.0
    %v2187 = vadd.f32 %v2185, %v2186
    %v2188 = vsel %vm862, %v1655, 0.0
    %v2189 = vadd.f32 %v2187, %v2188
    %v2190 = vsel %vm862, %v1660, 0.0
    %v2191 = vadd.f32 %v2189, %v2190
    %v2192 = vsel %vm862, %v1665, 0.0
    %v2193 = vadd.f32 %v2191, %v2192
    %v2194 = vsel %vm862, %v1670, 0.0
    %v2195 = vadd.f32 %v2193, %v2194
    %v2196 = vrot.slane %v2195, 4
    %v2197 = vadd.f32 %v2195, %v2196
    %v2198 = vrot.slane %v2197, 2
    %v2199 = vadd.f32 %v2197, %v2198
    %v2200 = vrot.slane %v2199, 1
    %v2201 = vadd.f32 %v2199, %v2200
    %v2202 = vadd.f32 %v996, %v2201
    %v2203 = vmul.f32 %v1515, %v1515
    %v2204 = vmul.f32 %v1520, %v1520
    %v2205 = vmul.f32 %v1525, %v1525
    %v2206 = vmul.f32 %v1530, %v1530
    %v2207 = vmul.f32 %v1535, %v1535
    %v2208 = vmul.f32 %v1540, %v1540
    %v2209 = vmul.f32 %v1545, %v1545
    %v2210 = vmul.f32 %v1550, %v1550
    %v2211 = vmul.f32 %v1555, %v1555
    %v2212 = vmul.f32 %v1560, %v1560
    %v2213 = vmul.f32 %v1565, %v1565
    %v2214 = vmul.f32 %v1570, %v1570
    %v2215 = vmul.f32 %v1575, %v1575
    %v2216 = vmul.f32 %v1580, %v1580
    %v2217 = vmul.f32 %v1585, %v1585
    %v2218 = vmul.f32 %v1590, %v1590
    %v2219 = vmul.f32 %v1595, %v1595
    %v2220 = vmul.f32 %v1600, %v1600
    %v2221 = vmul.f32 %v1605, %v1605
    %v2222 = vmul.f32 %v1610, %v1610
    %v2223 = vmul.f32 %v1615, %v1615
    %v2224 = vmul.f32 %v1620, %v1620
    %v2225 = vmul.f32 %v1625, %v1625
    %v2226 = vmul.f32 %v1630, %v1630
    %v2227 = vmul.f32 %v1635, %v1635
    %v2228 = vmul.f32 %v1640, %v1640
    %v2229 = vmul.f32 %v1645, %v1645
    %v2230 = vmul.f32 %v1650, %v1650
    %v2231 = vmul.f32 %v1655, %v1655
    %v2232 = vmul.f32 %v1660, %v1660
    %v2233 = vmul.f32 %v1665, %v1665
    %v2234 = vmul.f32 %v1670, %v1670
    %v2235 = vsel %vm862, %v2203, 0.0
    %v2236 = vsel %vm862, %v2204, 0.0
    %v2237 = vadd.f32 %v2235, %v2236
    %v2238 = vsel %vm862, %v2205, 0.0
    %v2239 = vadd.f32 %v2237, %v2238
    %v2240 = vsel %vm862, %v2206, 0.0
    %v2241 = vadd.f32 %v2239, %v2240
    %v2242 = vsel %vm862, %v2207, 0.0
    %v2243 = vadd.f32 %v2241, %v2242
    %v2244 = vsel %vm862, %v2208, 0.0
    %v2245 = vadd.f32 %v2243, %v2244
    %v2246 = vsel %vm862, %v2209, 0.0
    %v2247 = vadd.f32 %v2245, %v2246
    %v2248 = vsel %vm862, %v2210, 0.0
    %v2249 = vadd.f32 %v2247, %v2248
    %v2250 = vsel %vm862, %v2211, 0.0
    %v2251 = vadd.f32 %v2249, %v2250
    %v2252 = vsel %vm862, %v2212, 0.0
    %v2253 = vadd.f32 %v2251, %v2252
    %v2254 = vsel %vm862, %v2213, 0.0
    %v2255 = vadd.f32 %v2253, %v2254
    %v2256 = vsel %vm862, %v2214, 0.0
    %v2257 = vadd.f32 %v2255, %v2256
    %v2258 = vsel %vm862, %v2215, 0.0
    %v2259 = vadd.f32 %v2257, %v2258
    %v2260 = vsel %vm862, %v2216, 0.0
    %v2261 = vadd.f32 %v2259, %v2260
    %v2262 = vsel %vm862, %v2217, 0.0
    %v2263 = vadd.f32 %v2261, %v2262
    %v2264 = vsel %vm862, %v2218, 0.0
    %v2265 = vadd.f32 %v2263, %v2264
    %v2266 = vsel %vm862, %v2219, 0.0
    %v2267 = vadd.f32 %v2265, %v2266
    %v2268 = vsel %vm862, %v2220, 0.0
    %v2269 = vadd.f32 %v2267, %v2268
    %v2270 = vsel %vm862, %v2221, 0.0
    %v2271 = vadd.f32 %v2269, %v2270
    %v2272 = vsel %vm862, %v2222, 0.0
    %v2273 = vadd.f32 %v2271, %v2272
    %v2274 = vsel %vm862, %v2223, 0.0
    %v2275 = vadd.f32 %v2273, %v2274
    %v2276 = vsel %vm862, %v2224, 0.0
    %v2277 = vadd.f32 %v2275, %v2276
    %v2278 = vsel %vm862, %v2225, 0.0
    %v2279 = vadd.f32 %v2277, %v2278
    %v2280 = vsel %vm862, %v2226, 0.0
    %v2281 = vadd.f32 %v2279, %v2280
    %v2282 = vsel %vm862, %v2227, 0.0
    %v2283 = vadd.f32 %v2281, %v2282
    %v2284 = vsel %vm862, %v2228, 0.0
    %v2285 = vadd.f32 %v2283, %v2284
    %v2286 = vsel %vm862, %v2229, 0.0
    %v2287 = vadd.f32 %v2285, %v2286
    %v2288 = vsel %vm862, %v2230, 0.0
    %v2289 = vadd.f32 %v2287, %v2288
    %v2290 = vsel %vm862, %v2231, 0.0
    %v2291 = vadd.f32 %v2289, %v2290
    %v2292 = vsel %vm862, %v2232, 0.0
    %v2293 = vadd.f32 %v2291, %v2292
    %v2294 = vsel %vm862, %v2233, 0.0
    %v2295 = vadd.f32 %v2293, %v2294
    %v2296 = vsel %vm862, %v2234, 0.0
    %v2297 = vadd.f32 %v2295, %v2296
    %v2298 = vrot.slane %v2297, 4
    %v2299 = vadd.f32 %v2297, %v2298
    %v2300 = vrot.slane %v2299, 2
    %v2301 = vadd.f32 %v2299, %v2300
    %v2302 = vrot.slane %v2301, 1
    %v2303 = vadd.f32 %v2301, %v2302
    %v2304 = vadd.f32 %v1098, %v2303
    %v2305 = vsel %vm540, %v1909, 0.0
    %v2306 = vsel %vm540, %v1914, 0.0
    %v2307 = vadd.f32 %v2305, %v2306
    %v2308 = vsel %vm540, %v1919, 0.0
    %v2309 = vadd.f32 %v2307, %v2308
    %v2310 = vsel %vm540, %v1924, 0.0
    %v2311 = vadd.f32 %v2309, %v2310
    %v2312 = vsel %vm540, %v1929, 0.0
    %v2313 = vadd.f32 %v2311, %v2312
    %v2314 = vsel %vm540, %v1934, 0.0
    %v2315 = vadd.f32 %v2313, %v2314
    %v2316 = vsel %vm540, %v1939, 0.0
    %v2317 = vadd.f32 %v2315, %v2316
    %v2318 = vsel %vm540, %v1944, 0.0
    %v2319 = vadd.f32 %v2317, %v2318
    %v2320 = vsel %vm540, %v1949, 0.0
    %v2321 = vadd.f32 %v2319, %v2320
    %v2322 = vsel %vm540, %v1954, 0.0
    %v2323 = vadd.f32 %v2321, %v2322
    %v2324 = vsel %vm540, %v1959, 0.0
    %v2325 = vadd.f32 %v2323, %v2324
    %v2326 = vsel %vm540, %v1964, 0.0
    %v2327 = vadd.f32 %v2325, %v2326
    %v2328 = vsel %vm540, %v1969, 0.0
    %v2329 = vadd.f32 %v2327, %v2328
    %v2330 = vsel %vm540, %v1974, 0.0
    %v2331 = vadd.f32 %v2329, %v2330
    %v2332 = vsel %vm540, %v1979, 0.0
    %v2333 = vadd.f32 %v2331, %v2332
    %v2334 = vsel %vm540, %v1984, 0.0
    %v2335 = vadd.f32 %v2333, %v2334
    %v2336 = vsel %vm540, %v1989, 0.0
    %v2337 = vadd.f32 %v2335, %v2336
    %v2338 = vsel %vm540, %v1994, 0.0
    %v2339 = vadd.f32 %v2337, %v2338
    %v2340 = vsel %vm540, %v1999, 0.0
    %v2341 = vadd.f32 %v2339, %v2340
    %v2342 = vsel %vm540, %v2004, 0.0
    %v2343 = vadd.f32 %v2341, %v2342
    %v2344 = vsel %vm540, %v2009, 0.0
    %v2345 = vadd.f32 %v2343, %v2344
    %v2346 = vsel %vm540, %v2014, 0.0
    %v2347 = vadd.f32 %v2345, %v2346
    %v2348 = vsel %vm540, %v2019, 0.0
    %v2349 = vadd.f32 %v2347, %v2348
    %v2350 = vsel %vm540, %v2024, 0.0
    %v2351 = vadd.f32 %v2349, %v2350
    %v2352 = vsel %vm540, %v2029, 0.0
    %v2353 = vadd.f32 %v2351, %v2352
    %v2354 = vsel %vm540, %v2034, 0.0
    %v2355 = vadd.f32 %v2353, %v2354
    %v2356 = vsel %vm540, %v2039, 0.0
    %v2357 = vadd.f32 %v2355, %v2356
    %v2358 = vsel %vm540, %v2044, 0.0
    %v2359 = vadd.f32 %v2357, %v2358
    %v2360 = vsel %vm540, %v2049, 0.0
    %v2361 = vadd.f32 %v2359, %v2360
    %v2362 = vsel %vm540, %v2054, 0.0
    %v2363 = vadd.f32 %v2361, %v2362
    %v2364 = vsel %vm540, %v2059, 0.0
    %v2365 = vadd.f32 %v2363, %v2364
    %v2366 = vsel %vm540, %v2064, 0.0
    %v2367 = vadd.f32 %v2365, %v2366
    %v2368 = vrot.slane %v2367, 4
    %v2369 = vadd.f32 %v2367, %v2368
    %v2370 = vrot.slane %v2369, 2
    %v2371 = vadd.f32 %v2369, %v2370
    %v2372 = vrot.slane %v2371, 1
    %v2373 = vadd.f32 %v2371, %v2372
    %v2374 = vadd.f32 %v1168, %v2373
    %v2375 = vmul.f32 %v1909, %v1909
    %v2376 = vmul.f32 %v1914, %v1914
    %v2377 = vmul.f32 %v1919, %v1919
    %v2378 = vmul.f32 %v1924, %v1924
    %v2379 = vmul.f32 %v1929, %v1929
    %v2380 = vmul.f32 %v1934, %v1934
    %v2381 = vmul.f32 %v1939, %v1939
    %v2382 = vmul.f32 %v1944, %v1944
    %v2383 = vmul.f32 %v1949, %v1949
    %v2384 = vmul.f32 %v1954, %v1954
    %v2385 = vmul.f32 %v1959, %v1959
    %v2386 = vmul.f32 %v1964, %v1964
    %v2387 = vmul.f32 %v1969, %v1969
    %v2388 = vmul.f32 %v1974, %v1974
    %v2389 = vmul.f32 %v1979, %v1979
    %v2390 = vmul.f32 %v1984, %v1984
    %v2391 = vmul.f32 %v1989, %v1989
    %v2392 = vmul.f32 %v1994, %v1994
    %v2393 = vmul.f32 %v1999, %v1999
    %v2394 = vmul.f32 %v2004, %v2004
    %v2395 = vmul.f32 %v2009, %v2009
    %v2396 = vmul.f32 %v2014, %v2014
    %v2397 = vmul.f32 %v2019, %v2019
    %v2398 = vmul.f32 %v2024, %v2024
    %v2399 = vmul.f32 %v2029, %v2029
    %v2400 = vmul.f32 %v2034, %v2034
    %v2401 = vmul.f32 %v2039, %v2039
    %v2402 = vmul.f32 %v2044, %v2044
    %v2403 = vmul.f32 %v2049, %v2049
    %v2404 = vmul.f32 %v2054, %v2054
    %v2405 = vmul.f32 %v2059, %v2059
    %v2406 = vmul.f32 %v2064, %v2064
    %v2407 = vsel %vm540, %v2375, 0.0
    %v2408 = vsel %vm540, %v2376, 0.0
    %v2409 = vadd.f32 %v2407, %v2408
    %v2410 = vsel %vm540, %v2377, 0.0
    %v2411 = vadd.f32 %v2409, %v2410
    %v2412 = vsel %vm540, %v2378, 0.0
    %v2413 = vadd.f32 %v2411, %v2412
    %v2414 = vsel %vm540, %v2379, 0.0
    %v2415 = vadd.f32 %v2413, %v2414
    %v2416 = vsel %vm540, %v2380, 0.0
    %v2417 = vadd.f32 %v2415, %v2416
    %v2418 = vsel %vm540, %v2381, 0.0
    %v2419 = vadd.f32 %v2417, %v2418
    %v2420 = vsel %vm540, %v2382, 0.0
    %v2421 = vadd.f32 %v2419, %v2420
    %v2422 = vsel %vm540, %v2383, 0.0
    %v2423 = vadd.f32 %v2421, %v2422
    %v2424 = vsel %vm540, %v2384, 0.0
    %v2425 = vadd.f32 %v2423, %v2424
    %v2426 = vsel %vm540, %v2385, 0.0
    %v2427 = vadd.f32 %v2425, %v2426
    %v2428 = vsel %vm540, %v2386, 0.0
    %v2429 = vadd.f32 %v2427, %v2428
    %v2430 = vsel %vm540, %v2387, 0.0
    %v2431 = vadd.f32 %v2429, %v2430
    %v2432 = vsel %vm540, %v2388, 0.0
    %v2433 = vadd.f32 %v2431, %v2432
    %v2434 = vsel %vm540, %v2389, 0.0
    %v2435 = vadd.f32 %v2433, %v2434
    %v2436 = vsel %vm540, %v2390, 0.0
    %v2437 = vadd.f32 %v2435, %v2436
    %v2438 = vsel %vm540, %v2391, 0.0
    %v2439 = vadd.f32 %v2437, %v2438
    %v2440 = vsel %vm540, %v2392, 0.0
    %v2441 = vadd.f32 %v2439, %v2440
    %v2442 = vsel %vm540, %v2393, 0.0
    %v2443 = vadd.f32 %v2441, %v2442
    %v2444 = vsel %vm540, %v2394, 0.0
    %v2445 = vadd.f32 %v2443, %v2444
    %v2446 = vsel %vm540, %v2395, 0.0
    %v2447 = vadd.f32 %v2445, %v2446
    %v2448 = vsel %vm540, %v2396, 0.0
    %v2449 = vadd.f32 %v2447, %v2448
    %v2450 = vsel %vm540, %v2397, 0.0
    %v2451 = vadd.f32 %v2449, %v2450
    %v2452 = vsel %vm540, %v2398, 0.0
    %v2453 = vadd.f32 %v2451, %v2452
    %v2454 = vsel %vm540, %v2399, 0.0
    %v2455 = vadd.f32 %v2453, %v2454
    %v2456 = vsel %vm540, %v2400, 0.0
    %v2457 = vadd.f32 %v2455, %v2456
    %v2458 = vsel %vm540, %v2401, 0.0
    %v2459 = vadd.f32 %v2457, %v2458
    %v2460 = vsel %vm540, %v2402, 0.0
    %v2461 = vadd.f32 %v2459, %v2460
    %v2462 = vsel %vm540, %v2403, 0.0
    %v2463 = vadd.f32 %v2461, %v2462
    %v2464 = vsel %vm540, %v2404, 0.0
    %v2465 = vadd.f32 %v2463, %v2464
    %v2466 = vsel %vm540, %v2405, 0.0
    %v2467 = vadd.f32 %v2465, %v2466
    %v2468 = vsel %vm540, %v2406, 0.0
    %v2469 = vadd.f32 %v2467, %v2468
    %v2470 = vrot.slane %v2469, 4
    %v2471 = vadd.f32 %v2469, %v2470
    %v2472 = vrot.slane %v2471, 2
    %v2473 = vadd.f32 %v2471, %v2472
    %v2474 = vrot.slane %v2473, 1
    %v2475 = vadd.f32 %v2473, %v2474
    %v2476 = vadd.f32 %v1270, %v2475
    %v2477 = vmul.f32 %v2202, 0.001953125
    %v2478 = vmul.f32 %v2304, 0.001953125
    %v2479 = vmul.f32 %v2477, %v2477
    %v2480 = vsub.f32 %v2478, %v2479
    %v2481 = vmax.f32 %v2480, 0.0
    %v2482 = vmul.f32 %v2374, 0.001953125
    %v2483 = vmul.f32 %v2476, 0.001953125
    %v2484 = vmul.f32 %v2482, %v2482
    %v2485 = vsub.f32 %v2483, %v2484
    %v2486 = vmax.f32 %v2485, 0.0
    %v2487 = vld [vmem:[%s4] sm:$0x1]
    %v2488 = vadd.f32 %v2481, 1e-05
    %v2489 = vrsqrt.pop %v2488
    %v2490 = vmul.f32 %v2487, %v2489
    %v2491 = vld [vmem:[%s4 + $0x1] sm:$0x1]
    %v2492 = vmul.f32 %v2477, %v2490
    %v2493 = vsub.f32 %v2491, %v2492
    %v2494 = vld [vmem:[%s5] sm:$0x1]
    %v2495 = vadd.f32 %v2486, 1e-05
    %v2496 = vrsqrt.pop %v2495
    %v2497 = vmul.f32 %v2494, %v2496
    %v2498 = vld [vmem:[%s5 + $0x1] sm:$0x1]
    %v2499 = vmul.f32 %v2482, %v2497
    %v2500 = vsub.f32 %v2498, %v2499
    %v2501 = vld [vmem:[#allocation2] sm:$0xff]
    %v2502 = vld [vmem:[#allocation2 + $0x8] sm:$0xff]
    %v2503 = vld [vmem:[#allocation2 + $0x10] sm:$0xff]
    %v2504 = vld [vmem:[#allocation2 + $0x18] sm:$0xff]
    %v2505 = vld [vmem:[#allocation2 + $0x20] sm:$0xff]
    %v2506 = vld [vmem:[#allocation2 + $0x28] sm:$0xff]
    %v2507 = vld [vmem:[#allocation2 + $0x30] sm:$0xff]
    %v2508 = vld [vmem:[#allocation2 + $0x38] sm:$0xff]
    %v2509 = vld [vmem:[#allocation2 + $0x40] sm:$0xff]
    %v2510 = vld [vmem:[#allocation2 + $0x48] sm:$0xff]
    %v2511 = vld [vmem:[#allocation2 + $0x50] sm:$0xff]
    %v2512 = vld [vmem:[#allocation2 + $0x58] sm:$0xff]
    %v2513 = vld [vmem:[#allocation2 + $0x60] sm:$0xff]
    %v2514 = vld [vmem:[#allocation2 + $0x68] sm:$0xff]
    %v2515 = vld [vmem:[#allocation2 + $0x70] sm:$0xff]
    %v2516 = vld [vmem:[#allocation2 + $0x78] sm:$0xff]
    %v2517 = vld [vmem:[#allocation2 + $0x80] sm:$0xff]
    %v2518 = vld [vmem:[#allocation2 + $0x88] sm:$0xff]
    %v2519 = vld [vmem:[#allocation2 + $0x90] sm:$0xff]
    %v2520 = vld [vmem:[#allocation2 + $0x98] sm:$0xff]
    %v2521 = vld [vmem:[#allocation2 + $0xa0] sm:$0xff]
    %v2522 = vld [vmem:[#allocation2 + $0xa8] sm:$0xff]
    %v2523 = vld [vmem:[#allocation2 + $0xb0] sm:$0xff]
    %v2524 = vld [vmem:[#allocation2 + $0xb8] sm:$0xff]
    %v2525 = vld [vmem:[#allocation2 + $0xc0] sm:$0xff]
    %v2526 = vld [vmem:[#allocation2 + $0xc8] sm:$0xff]
    %v2527 = vld [vmem:[#allocation2 + $0xd0] sm:$0xff]
    %v2528 = vld [vmem:[#allocation2 + $0xd8] sm:$0xff]
    %v2529 = vld [vmem:[#allocation2 + $0xe0] sm:$0xff]
    %v2530 = vld [vmem:[#allocation2 + $0xe8] sm:$0xff]
    %v2531 = vld [vmem:[#allocation2 + $0xf0] sm:$0xff]
    %v2532 = vld [vmem:[#allocation2 + $0xf8] sm:$0xff]
    %v2533 = vlaneseq
    %v2534 = vshrl.u32 %v2533, 7
    %v2535 = vsub.s32 0, %v2534
    %v2536 = vrot.slane %v2490, %v2535
    %v2537 = vmul.f32 %v2501, %v2536
    %v2538 = vmul.f32 %v2502, %v2536
    %v2539 = vmul.f32 %v2503, %v2536
    %v2540 = vmul.f32 %v2504, %v2536
    %v2541 = vmul.f32 %v2505, %v2536
    %v2542 = vmul.f32 %v2506, %v2536
    %v2543 = vmul.f32 %v2507, %v2536
    %v2544 = vmul.f32 %v2508, %v2536
    %v2545 = vmul.f32 %v2509, %v2536
    %v2546 = vmul.f32 %v2510, %v2536
    %v2547 = vmul.f32 %v2511, %v2536
    %v2548 = vmul.f32 %v2512, %v2536
    %v2549 = vmul.f32 %v2513, %v2536
    %v2550 = vmul.f32 %v2514, %v2536
    %v2551 = vmul.f32 %v2515, %v2536
    %v2552 = vmul.f32 %v2516, %v2536
    %v2553 = vmul.f32 %v2517, %v2536
    %v2554 = vmul.f32 %v2518, %v2536
    %v2555 = vmul.f32 %v2519, %v2536
    %v2556 = vmul.f32 %v2520, %v2536
    %v2557 = vmul.f32 %v2521, %v2536
    %v2558 = vmul.f32 %v2522, %v2536
    %v2559 = vmul.f32 %v2523, %v2536
    %v2560 = vmul.f32 %v2524, %v2536
    %v2561 = vmul.f32 %v2525, %v2536
    %v2562 = vmul.f32 %v2526, %v2536
    %v2563 = vmul.f32 %v2527, %v2536
    %v2564 = vmul.f32 %v2528, %v2536
    %v2565 = vmul.f32 %v2529, %v2536
    %v2566 = vmul.f32 %v2530, %v2536
    %v2567 = vmul.f32 %v2531, %v2536
    %v2568 = vmul.f32 %v2532, %v2536
    %v2569 = vlaneseq
    %v2570 = vshrl.u32 %v2569, 7
    %v2571 = vsub.s32 0, %v2570
    %v2572 = vrot.slane %v2493, %v2571
    %v2573 = vadd.f32 %v2537, %v2572
    %v2574 = vadd.f32 %v2538, %v2572
    %v2575 = vadd.f32 %v2539, %v2572
    %v2576 = vadd.f32 %v2540, %v2572
    %v2577 = vadd.f32 %v2541, %v2572
    %v2578 = vadd.f32 %v2542, %v2572
    %v2579 = vadd.f32 %v2543, %v2572
    %v2580 = vadd.f32 %v2544, %v2572
    %v2581 = vadd.f32 %v2545, %v2572
    %v2582 = vadd.f32 %v2546, %v2572
    %v2583 = vadd.f32 %v2547, %v2572
    %v2584 = vadd.f32 %v2548, %v2572
    %v2585 = vadd.f32 %v2549, %v2572
    %v2586 = vadd.f32 %v2550, %v2572
    %v2587 = vadd.f32 %v2551, %v2572
    %v2588 = vadd.f32 %v2552, %v2572
    %v2589 = vadd.f32 %v2553, %v2572
    %v2590 = vadd.f32 %v2554, %v2572
    %v2591 = vadd.f32 %v2555, %v2572
    %v2592 = vadd.f32 %v2556, %v2572
    %v2593 = vadd.f32 %v2557, %v2572
    %v2594 = vadd.f32 %v2558, %v2572
    %v2595 = vadd.f32 %v2559, %v2572
    %v2596 = vadd.f32 %v2560, %v2572
    %v2597 = vadd.f32 %v2561, %v2572
    %v2598 = vadd.f32 %v2562, %v2572
    %v2599 = vadd.f32 %v2563, %v2572
    %v2600 = vadd.f32 %v2564, %v2572
    %v2601 = vadd.f32 %v2565, %v2572
    %v2602 = vadd.f32 %v2566, %v2572
    %v2603 = vadd.f32 %v2567, %v2572
    %v2604 = vadd.f32 %v2568, %v2572
    %2605 = vst.msk [vmem:[%s6] sm:$0xff] %vm862, %v2573
    %2606 = vst.msk [vmem:[%s6 + $0x8] sm:$0xff] %vm862, %v2574
    %2607 = vst.msk [vmem:[%s6 + $0x10] sm:$0xff] %vm862, %v2575
    %2608 = vst.msk [vmem:[%s6 + $0x18] sm:$0xff] %vm862, %v2576
    %2609 = vst.msk [vmem:[%s6 + $0x20] sm:$0xff] %vm862, %v2577
    %2610 = vst.msk [vmem:[%s6 + $0x28] sm:$0xff] %vm862, %v2578
    %2611 = vst.msk [vmem:[%s6 + $0x30] sm:$0xff] %vm862, %v2579
    %2612 = vst.msk [vmem:[%s6 + $0x38] sm:$0xff] %vm862, %v2580
    %2613 = vst.msk [vmem:[%s6 + $0x40] sm:$0xff] %vm862, %v2581
    %2614 = vst.msk [vmem:[%s6 + $0x48] sm:$0xff] %vm862, %v2582
    %2615 = vst.msk [vmem:[%s6 + $0x50] sm:$0xff] %vm862, %v2583
    %2616 = vst.msk [vmem:[%s6 + $0x58] sm:$0xff] %vm862, %v2584
    %2617 = vst.msk [vmem:[%s6 + $0x60] sm:$0xff] %vm862, %v2585
    %2618 = vst.msk [vmem:[%s6 + $0x68] sm:$0xff] %vm862, %v2586
    %2619 = vst.msk [vmem:[%s6 + $0x70] sm:$0xff] %vm862, %v2587
    %2620 = vst.msk [vmem:[%s6 + $0x78] sm:$0xff] %vm862, %v2588
    %2621 = vst.msk [vmem:[%s6 + $0x80] sm:$0xff] %vm862, %v2589
    %2622 = vst.msk [vmem:[%s6 + $0x88] sm:$0xff] %vm862, %v2590
    %2623 = vst.msk [vmem:[%s6 + $0x90] sm:$0xff] %vm862, %v2591
    %2624 = vst.msk [vmem:[%s6 + $0x98] sm:$0xff] %vm862, %v2592
    %2625 = vst.msk [vmem:[%s6 + $0xa0] sm:$0xff] %vm862, %v2593
    %2626 = vst.msk [vmem:[%s6 + $0xa8] sm:$0xff] %vm862, %v2594
    %2627 = vst.msk [vmem:[%s6 + $0xb0] sm:$0xff] %vm862, %v2595
    %2628 = vst.msk [vmem:[%s6 + $0xb8] sm:$0xff] %vm862, %v2596
    %2629 = vst.msk [vmem:[%s6 + $0xc0] sm:$0xff] %vm862, %v2597
    %2630 = vst.msk [vmem:[%s6 + $0xc8] sm:$0xff] %vm862, %v2598
    %2631 = vst.msk [vmem:[%s6 + $0xd0] sm:$0xff] %vm862, %v2599
    %2632 = vst.msk [vmem:[%s6 + $0xd8] sm:$0xff] %vm862, %v2600
    %2633 = vst.msk [vmem:[%s6 + $0xe0] sm:$0xff] %vm862, %v2601
    %2634 = vst.msk [vmem:[%s6 + $0xe8] sm:$0xff] %vm862, %v2602
    %2635 = vst.msk [vmem:[%s6 + $0xf0] sm:$0xff] %vm862, %v2603
    %2636 = vst.msk [vmem:[%s6 + $0xf8] sm:$0xff] %vm862, %v2604
    %v2637 = vld [vmem:[#allocation3] sm:$0xff]
    %v2638 = vld [vmem:[#allocation3 + $0x8] sm:$0xff]
    %v2639 = vld [vmem:[#allocation3 + $0x10] sm:$0xff]
    %v2640 = vld [vmem:[#allocation3 + $0x18] sm:$0xff]
    %v2641 = vld [vmem:[#allocation3 + $0x20] sm:$0xff]
    %v2642 = vld [vmem:[#allocation3 + $0x28] sm:$0xff]
    %v2643 = vld [vmem:[#allocation3 + $0x30] sm:$0xff]
    %v2644 = vld [vmem:[#allocation3 + $0x38] sm:$0xff]
    %v2645 = vld [vmem:[#allocation3 + $0x40] sm:$0xff]
    %v2646 = vld [vmem:[#allocation3 + $0x48] sm:$0xff]
    %v2647 = vld [vmem:[#allocation3 + $0x50] sm:$0xff]
    %v2648 = vld [vmem:[#allocation3 + $0x58] sm:$0xff]
    %v2649 = vld [vmem:[#allocation3 + $0x60] sm:$0xff]
    %v2650 = vld [vmem:[#allocation3 + $0x68] sm:$0xff]
    %v2651 = vld [vmem:[#allocation3 + $0x70] sm:$0xff]
    %v2652 = vld [vmem:[#allocation3 + $0x78] sm:$0xff]
    %v2653 = vld [vmem:[#allocation3 + $0x80] sm:$0xff]
    %v2654 = vld [vmem:[#allocation3 + $0x88] sm:$0xff]
    %v2655 = vld [vmem:[#allocation3 + $0x90] sm:$0xff]
    %v2656 = vld [vmem:[#allocation3 + $0x98] sm:$0xff]
    %v2657 = vld [vmem:[#allocation3 + $0xa0] sm:$0xff]
    %v2658 = vld [vmem:[#allocation3 + $0xa8] sm:$0xff]
    %v2659 = vld [vmem:[#allocation3 + $0xb0] sm:$0xff]
    %v2660 = vld [vmem:[#allocation3 + $0xb8] sm:$0xff]
    %v2661 = vld [vmem:[#allocation3 + $0xc0] sm:$0xff]
    %v2662 = vld [vmem:[#allocation3 + $0xc8] sm:$0xff]
    %v2663 = vld [vmem:[#allocation3 + $0xd0] sm:$0xff]
    %v2664 = vld [vmem:[#allocation3 + $0xd8] sm:$0xff]
    %v2665 = vld [vmem:[#allocation3 + $0xe0] sm:$0xff]
    %v2666 = vld [vmem:[#allocation3 + $0xe8] sm:$0xff]
    %v2667 = vld [vmem:[#allocation3 + $0xf0] sm:$0xff]
    %v2668 = vld [vmem:[#allocation3 + $0xf8] sm:$0xff]
    %v2669 = vlaneseq
    %v2670 = vshrl.u32 %v2669, 7
    %v2671 = vsub.s32 0, %v2670
    %v2672 = vrot.slane %v2497, %v2671
    %v2673 = vmul.f32 %v2637, %v2672
    %v2674 = vmul.f32 %v2638, %v2672
    %v2675 = vmul.f32 %v2639, %v2672
    %v2676 = vmul.f32 %v2640, %v2672
    %v2677 = vmul.f32 %v2641, %v2672
    %v2678 = vmul.f32 %v2642, %v2672
    %v2679 = vmul.f32 %v2643, %v2672
    %v2680 = vmul.f32 %v2644, %v2672
    %v2681 = vmul.f32 %v2645, %v2672
    %v2682 = vmul.f32 %v2646, %v2672
    %v2683 = vmul.f32 %v2647, %v2672
    %v2684 = vmul.f32 %v2648, %v2672
    %v2685 = vmul.f32 %v2649, %v2672
    %v2686 = vmul.f32 %v2650, %v2672
    %v2687 = vmul.f32 %v2651, %v2672
    %v2688 = vmul.f32 %v2652, %v2672
    %v2689 = vmul.f32 %v2653, %v2672
    %v2690 = vmul.f32 %v2654, %v2672
    %v2691 = vmul.f32 %v2655, %v2672
    %v2692 = vmul.f32 %v2656, %v2672
    %v2693 = vmul.f32 %v2657, %v2672
    %v2694 = vmul.f32 %v2658, %v2672
    %v2695 = vmul.f32 %v2659, %v2672
    %v2696 = vmul.f32 %v2660, %v2672
    %v2697 = vmul.f32 %v2661, %v2672
    %v2698 = vmul.f32 %v2662, %v2672
    %v2699 = vmul.f32 %v2663, %v2672
    %v2700 = vmul.f32 %v2664, %v2672
    %v2701 = vmul.f32 %v2665, %v2672
    %v2702 = vmul.f32 %v2666, %v2672
    %v2703 = vmul.f32 %v2667, %v2672
    %v2704 = vmul.f32 %v2668, %v2672
    %v2705 = vlaneseq
    %v2706 = vshrl.u32 %v2705, 7
    %v2707 = vsub.s32 0, %v2706
    %v2708 = vrot.slane %v2500, %v2707
    %v2709 = vadd.f32 %v2673, %v2708
    %v2710 = vadd.f32 %v2674, %v2708
    %v2711 = vadd.f32 %v2675, %v2708
    %v2712 = vadd.f32 %v2676, %v2708
    %v2713 = vadd.f32 %v2677, %v2708
    %v2714 = vadd.f32 %v2678, %v2708
    %v2715 = vadd.f32 %v2679, %v2708
    %v2716 = vadd.f32 %v2680, %v2708
    %v2717 = vadd.f32 %v2681, %v2708
    %v2718 = vadd.f32 %v2682, %v2708
    %v2719 = vadd.f32 %v2683, %v2708
    %v2720 = vadd.f32 %v2684, %v2708
    %v2721 = vadd.f32 %v2685, %v2708
    %v2722 = vadd.f32 %v2686, %v2708
    %v2723 = vadd.f32 %v2687, %v2708
    %v2724 = vadd.f32 %v2688, %v2708
    %v2725 = vadd.f32 %v2689, %v2708
    %v2726 = vadd.f32 %v2690, %v2708
    %v2727 = vadd.f32 %v2691, %v2708
    %v2728 = vadd.f32 %v2692, %v2708
    %v2729 = vadd.f32 %v2693, %v2708
    %v2730 = vadd.f32 %v2694, %v2708
    %v2731 = vadd.f32 %v2695, %v2708
    %v2732 = vadd.f32 %v2696, %v2708
    %v2733 = vadd.f32 %v2697, %v2708
    %v2734 = vadd.f32 %v2698, %v2708
    %v2735 = vadd.f32 %v2699, %v2708
    %v2736 = vadd.f32 %v2700, %v2708
    %v2737 = vadd.f32 %v2701, %v2708
    %v2738 = vadd.f32 %v2702, %v2708
    %v2739 = vadd.f32 %v2703, %v2708
    %v2740 = vadd.f32 %v2704, %v2708
    %v2741 = vxor.u32 %v2709, 2147483648
    %v2742 = vxor.u32 %v2710, 2147483648
    %v2743 = vxor.u32 %v2711, 2147483648
    %v2744 = vxor.u32 %v2712, 2147483648
    %v2745 = vxor.u32 %v2713, 2147483648
    %v2746 = vxor.u32 %v2714, 2147483648
    %v2747 = vxor.u32 %v2715, 2147483648
    %v2748 = vxor.u32 %v2716, 2147483648
    %v2749 = vxor.u32 %v2717, 2147483648
    %v2750 = vxor.u32 %v2718, 2147483648
    %v2751 = vxor.u32 %v2719, 2147483648
    %v2752 = vxor.u32 %v2720, 2147483648
    %v2753 = vxor.u32 %v2721, 2147483648
    %v2754 = vxor.u32 %v2722, 2147483648
    %v2755 = vxor.u32 %v2723, 2147483648
    %v2756 = vxor.u32 %v2724, 2147483648
    %v2757 = vxor.u32 %v2725, 2147483648
    %v2758 = vxor.u32 %v2726, 2147483648
    %v2759 = vxor.u32 %v2727, 2147483648
    %v2760 = vxor.u32 %v2728, 2147483648
    %v2761 = vxor.u32 %v2729, 2147483648
    %v2762 = vxor.u32 %v2730, 2147483648
    %v2763 = vxor.u32 %v2731, 2147483648
    %v2764 = vxor.u32 %v2732, 2147483648
    %v2765 = vxor.u32 %v2733, 2147483648
    %v2766 = vxor.u32 %v2734, 2147483648
    %v2767 = vxor.u32 %v2735, 2147483648
    %v2768 = vxor.u32 %v2736, 2147483648
    %v2769 = vxor.u32 %v2737, 2147483648
    %v2770 = vxor.u32 %v2738, 2147483648
    %v2771 = vxor.u32 %v2739, 2147483648
    %v2772 = vxor.u32 %v2740, 2147483648
    %v2773 = vmul.f32 %v2741, 1.442695
    %v2774 = vpow.pop %v2773
    %v2775 = vmul.f32 %v2742, 1.442695
    %v2776 = vpow.pop %v2775
    %v2777 = vmul.f32 %v2743, 1.442695
    %v2778 = vpow.pop %v2777
    %v2779 = vmul.f32 %v2744, 1.442695
    %v2780 = vpow.pop %v2779
    %v2781 = vmul.f32 %v2745, 1.442695
    %v2782 = vpow.pop %v2781
    %v2783 = vmul.f32 %v2746, 1.442695
    %v2784 = vpow.pop %v2783
    %v2785 = vmul.f32 %v2747, 1.442695
    %v2786 = vpow.pop %v2785
    %v2787 = vmul.f32 %v2748, 1.442695
    %v2788 = vpow.pop %v2787
    %v2789 = vmul.f32 %v2749, 1.442695
    %v2790 = vpow.pop %v2789
    %v2791 = vmul.f32 %v2750, 1.442695
    %v2792 = vpow.pop %v2791
    %v2793 = vmul.f32 %v2751, 1.442695
    %v2794 = vpow.pop %v2793
    %v2795 = vmul.f32 %v2752, 1.442695
    %v2796 = vpow.pop %v2795
    %v2797 = vmul.f32 %v2753, 1.442695
    %v2798 = vpow.pop %v2797
    %v2799 = vmul.f32 %v2754, 1.442695
    %v2800 = vpow.pop %v2799
    %v2801 = vmul.f32 %v2755, 1.442695
    %v2802 = vpow.pop %v2801
    %v2803 = vmul.f32 %v2756, 1.442695
    %v2804 = vpow.pop %v2803
    %v2805 = vmul.f32 %v2757, 1.442695
    %v2806 = vpow.pop %v2805
    %v2807 = vmul.f32 %v2758, 1.442695
    %v2808 = vpow.pop %v2807
    %v2809 = vmul.f32 %v2759, 1.442695
    %v2810 = vpow.pop %v2809
    %v2811 = vmul.f32 %v2760, 1.442695
    %v2812 = vpow.pop %v2811
    %v2813 = vmul.f32 %v2761, 1.442695
    %v2814 = vpow.pop %v2813
    %v2815 = vmul.f32 %v2762, 1.442695
    %v2816 = vpow.pop %v2815
    %v2817 = vmul.f32 %v2763, 1.442695
    %v2818 = vpow.pop %v2817
    %v2819 = vmul.f32 %v2764, 1.442695
    %v2820 = vpow.pop %v2819
    %v2821 = vmul.f32 %v2765, 1.442695
    %v2822 = vpow.pop %v2821
    %v2823 = vmul.f32 %v2766, 1.442695
    %v2824 = vpow.pop %v2823
    %v2825 = vmul.f32 %v2767, 1.442695
    %v2826 = vpow.pop %v2825
    %v2827 = vmul.f32 %v2768, 1.442695
    %v2828 = vpow.pop %v2827
    %v2829 = vmul.f32 %v2769, 1.442695
    %v2830 = vpow.pop %v2829
    %v2831 = vmul.f32 %v2770, 1.442695
    %v2832 = vpow.pop %v2831
    %v2833 = vmul.f32 %v2771, 1.442695
    %v2834 = vpow.pop %v2833
    %v2835 = vmul.f32 %v2772, 1.442695
    %v2836 = vpow.pop %v2835
    %v2837 = vadd.f32 %v2774, 1.0
    %v2838 = vadd.f32 %v2776, 1.0
    %v2839 = vadd.f32 %v2778, 1.0
    %v2840 = vadd.f32 %v2780, 1.0
    %v2841 = vadd.f32 %v2782, 1.0
    %v2842 = vadd.f32 %v2784, 1.0
    %v2843 = vadd.f32 %v2786, 1.0
    %v2844 = vadd.f32 %v2788, 1.0
    %v2845 = vadd.f32 %v2790, 1.0
    %v2846 = vadd.f32 %v2792, 1.0
    %v2847 = vadd.f32 %v2794, 1.0
    %v2848 = vadd.f32 %v2796, 1.0
    %v2849 = vadd.f32 %v2798, 1.0
    %v2850 = vadd.f32 %v2800, 1.0
    %v2851 = vadd.f32 %v2802, 1.0
    %v2852 = vadd.f32 %v2804, 1.0
    %v2853 = vadd.f32 %v2806, 1.0
    %v2854 = vadd.f32 %v2808, 1.0
    %v2855 = vadd.f32 %v2810, 1.0
    %v2856 = vadd.f32 %v2812, 1.0
    %v2857 = vadd.f32 %v2814, 1.0
    %v2858 = vadd.f32 %v2816, 1.0
    %v2859 = vadd.f32 %v2818, 1.0
    %v2860 = vadd.f32 %v2820, 1.0
    %v2861 = vadd.f32 %v2822, 1.0
    %v2862 = vadd.f32 %v2824, 1.0
    %v2863 = vadd.f32 %v2826, 1.0
    %v2864 = vadd.f32 %v2828, 1.0
    %v2865 = vadd.f32 %v2830, 1.0
    %v2866 = vadd.f32 %v2832, 1.0
    %v2867 = vadd.f32 %v2834, 1.0
    %v2868 = vadd.f32 %v2836, 1.0
    %v2869 = vrcp.pop %v2837
    %v2870 = vmul.f32 1.0, %v2869
    %v2871 = vrcp.pop %v2838
    %v2872 = vmul.f32 1.0, %v2871
    %v2873 = vrcp.pop %v2839
    %v2874 = vmul.f32 1.0, %v2873
    %v2875 = vrcp.pop %v2840
    %v2876 = vmul.f32 1.0, %v2875
    %v2877 = vrcp.pop %v2841
    %v2878 = vmul.f32 1.0, %v2877
    %v2879 = vrcp.pop %v2842
    %v2880 = vmul.f32 1.0, %v2879
    %v2881 = vrcp.pop %v2843
    %v2882 = vmul.f32 1.0, %v2881
    %v2883 = vrcp.pop %v2844
    %v2884 = vmul.f32 1.0, %v2883
    %v2885 = vrcp.pop %v2845
    %v2886 = vmul.f32 1.0, %v2885
    %v2887 = vrcp.pop %v2846
    %v2888 = vmul.f32 1.0, %v2887
    %v2889 = vrcp.pop %v2847
    %v2890 = vmul.f32 1.0, %v2889
    %v2891 = vrcp.pop %v2848
    %v2892 = vmul.f32 1.0, %v2891
    %v2893 = vrcp.pop %v2849
    %v2894 = vmul.f32 1.0, %v2893
    %v2895 = vrcp.pop %v2850
    %v2896 = vmul.f32 1.0, %v2895
    %v2897 = vrcp.pop %v2851
    %v2898 = vmul.f32 1.0, %v2897
    %v2899 = vrcp.pop %v2852
    %v2900 = vmul.f32 1.0, %v2899
    %v2901 = vrcp.pop %v2853
    %v2902 = vmul.f32 1.0, %v2901
    %v2903 = vrcp.pop %v2854
    %v2904 = vmul.f32 1.0, %v2903
    %v2905 = vrcp.pop %v2855
    %v2906 = vmul.f32 1.0, %v2905
    %v2907 = vrcp.pop %v2856
    %v2908 = vmul.f32 1.0, %v2907
    %v2909 = vrcp.pop %v2857
    %v2910 = vmul.f32 1.0, %v2909
    %v2911 = vrcp.pop %v2858
    %v2912 = vmul.f32 1.0, %v2911
    %v2913 = vrcp.pop %v2859
    %v2914 = vmul.f32 1.0, %v2913
    %v2915 = vrcp.pop %v2860
    %v2916 = vmul.f32 1.0, %v2915
    %v2917 = vrcp.pop %v2861
    %v2918 = vmul.f32 1.0, %v2917
    %v2919 = vrcp.pop %v2862
    %v2920 = vmul.f32 1.0, %v2919
    %v2921 = vrcp.pop %v2863
    %v2922 = vmul.f32 1.0, %v2921
    %v2923 = vrcp.pop %v2864
    %v2924 = vmul.f32 1.0, %v2923
    %v2925 = vrcp.pop %v2865
    %v2926 = vmul.f32 1.0, %v2925
    %v2927 = vrcp.pop %v2866
    %v2928 = vmul.f32 1.0, %v2927
    %v2929 = vrcp.pop %v2867
    %v2930 = vmul.f32 1.0, %v2929
    %v2931 = vrcp.pop %v2868
    %v2932 = vmul.f32 1.0, %v2931
    %2933 = vst.msk [vmem:[#allocation9] sm:$0xff] %vm540, %v2870
    %2934 = vst.msk [vmem:[#allocation9 + $0x8] sm:$0xff] %vm540, %v2872
    %2935 = vst.msk [vmem:[#allocation9 + $0x10] sm:$0xff] %vm540, %v2874
    %2936 = vst.msk [vmem:[#allocation9 + $0x18] sm:$0xff] %vm540, %v2876
    %2937 = vst.msk [vmem:[#allocation9 + $0x20] sm:$0xff] %vm540, %v2878
    %2938 = vst.msk [vmem:[#allocation9 + $0x28] sm:$0xff] %vm540, %v2880
    %2939 = vst.msk [vmem:[#allocation9 + $0x30] sm:$0xff] %vm540, %v2882
    %2940 = vst.msk [vmem:[#allocation9 + $0x38] sm:$0xff] %vm540, %v2884
    %2941 = vst.msk [vmem:[#allocation9 + $0x40] sm:$0xff] %vm540, %v2886
    %2942 = vst.msk [vmem:[#allocation9 + $0x48] sm:$0xff] %vm540, %v2888
    %2943 = vst.msk [vmem:[#allocation9 + $0x50] sm:$0xff] %vm540, %v2890
    %2944 = vst.msk [vmem:[#allocation9 + $0x58] sm:$0xff] %vm540, %v2892
    %2945 = vst.msk [vmem:[#allocation9 + $0x60] sm:$0xff] %vm540, %v2894
    %2946 = vst.msk [vmem:[#allocation9 + $0x68] sm:$0xff] %vm540, %v2896
    %2947 = vst.msk [vmem:[#allocation9 + $0x70] sm:$0xff] %vm540, %v2898
    %2948 = vst.msk [vmem:[#allocation9 + $0x78] sm:$0xff] %vm540, %v2900
    %2949 = vst.msk [vmem:[#allocation9 + $0x80] sm:$0xff] %vm540, %v2902
    %2950 = vst.msk [vmem:[#allocation9 + $0x88] sm:$0xff] %vm540, %v2904
    %2951 = vst.msk [vmem:[#allocation9 + $0x90] sm:$0xff] %vm540, %v2906
    %2952 = vst.msk [vmem:[#allocation9 + $0x98] sm:$0xff] %vm540, %v2908
    %2953 = vst.msk [vmem:[#allocation9 + $0xa0] sm:$0xff] %vm540, %v2910
    %2954 = vst.msk [vmem:[#allocation9 + $0xa8] sm:$0xff] %vm540, %v2912
    %2955 = vst.msk [vmem:[#allocation9 + $0xb0] sm:$0xff] %vm540, %v2914
    %2956 = vst.msk [vmem:[#allocation9 + $0xb8] sm:$0xff] %vm540, %v2916
    %2957 = vst.msk [vmem:[#allocation9 + $0xc0] sm:$0xff] %vm540, %v2918
    %2958 = vst.msk [vmem:[#allocation9 + $0xc8] sm:$0xff] %vm540, %v2920
    %2959 = vst.msk [vmem:[#allocation9 + $0xd0] sm:$0xff] %vm540, %v2922
    %2960 = vst.msk [vmem:[#allocation9 + $0xd8] sm:$0xff] %vm540, %v2924
    %2961 = vst.msk [vmem:[#allocation9 + $0xe0] sm:$0xff] %vm540, %v2926
    %2962 = vst.msk [vmem:[#allocation9 + $0xe8] sm:$0xff] %vm540, %v2928
    %2963 = vst.msk [vmem:[#allocation9 + $0xf0] sm:$0xff] %vm540, %v2930
    %2964 = vst.msk [vmem:[#allocation9 + $0xf8] sm:$0xff] %vm540, %v2932
    %v2965 = vld [vmem:[%s2067] sm:$0xff]
    %v2966 = vld [vmem:[%s2067 + $0x8] sm:$0xff]
    %v2967 = vld [vmem:[%s2067 + $0x10] sm:$0xff]
    %v2968 = vld [vmem:[%s2067 + $0x18] sm:$0xff]
    %v2969 = vld [vmem:[%s2067 + $0x20] sm:$0xff]
    %v2970 = vld [vmem:[%s2067 + $0x28] sm:$0xff]
    %v2971 = vld [vmem:[%s2067 + $0x30] sm:$0xff]
    %v2972 = vld [vmem:[%s2067 + $0x38] sm:$0xff]
    %v2973 = vld [vmem:[%s2067 + $0x40] sm:$0xff]
    %v2974 = vld [vmem:[%s2067 + $0x48] sm:$0xff]
    %v2975 = vld [vmem:[%s2067 + $0x50] sm:$0xff]
    %v2976 = vld [vmem:[%s2067 + $0x58] sm:$0xff]
    %v2977 = vld [vmem:[%s2067 + $0x60] sm:$0xff]
    %v2978 = vld [vmem:[%s2067 + $0x68] sm:$0xff]
    %v2979 = vld [vmem:[%s2067 + $0x70] sm:$0xff]
    %v2980 = vld [vmem:[%s2067 + $0x78] sm:$0xff]
    %v2981 = vld [vmem:[%s2067 + $0x80] sm:$0xff]
    %v2982 = vld [vmem:[%s2067 + $0x88] sm:$0xff]
    %v2983 = vld [vmem:[%s2067 + $0x90] sm:$0xff]
    %v2984 = vld [vmem:[%s2067 + $0x98] sm:$0xff]
    %v2985 = vld [vmem:[%s2067 + $0xa0] sm:$0xff]
    %v2986 = vld [vmem:[%s2067 + $0xa8] sm:$0xff]
    %v2987 = vld [vmem:[%s2067 + $0xb0] sm:$0xff]
    %v2988 = vld [vmem:[%s2067 + $0xb8] sm:$0xff]
    %v2989 = vld [vmem:[%s2067 + $0xc0] sm:$0xff]
    %v2990 = vld [vmem:[%s2067 + $0xc8] sm:$0xff]
    %v2991 = vld [vmem:[%s2067 + $0xd0] sm:$0xff]
    %v2992 = vld [vmem:[%s2067 + $0xd8] sm:$0xff]
    %v2993 = vld [vmem:[%s2067 + $0xe0] sm:$0xff]
    %v2994 = vld [vmem:[%s2067 + $0xe8] sm:$0xff]
    %v2995 = vld [vmem:[%s2067 + $0xf0] sm:$0xff]
    %v2996 = vld [vmem:[%s2067 + $0xf8] sm:$0xff]
    %v2997 = vmul.f32 %v2965, %v2536
    %v2998 = vmul.f32 %v2966, %v2536
    %v2999 = vmul.f32 %v2967, %v2536
    %v3000 = vmul.f32 %v2968, %v2536
    %v3001 = vmul.f32 %v2969, %v2536
    %v3002 = vmul.f32 %v2970, %v2536
    %v3003 = vmul.f32 %v2971, %v2536
    %v3004 = vmul.f32 %v2972, %v2536
    %v3005 = vmul.f32 %v2973, %v2536
    %v3006 = vmul.f32 %v2974, %v2536
    %v3007 = vmul.f32 %v2975, %v2536
    %v3008 = vmul.f32 %v2976, %v2536
    %v3009 = vmul.f32 %v2977, %v2536
    %v3010 = vmul.f32 %v2978, %v2536
    %v3011 = vmul.f32 %v2979, %v2536
    %v3012 = vmul.f32 %v2980, %v2536
    %v3013 = vmul.f32 %v2981, %v2536
    %v3014 = vmul.f32 %v2982, %v2536
    %v3015 = vmul.f32 %v2983, %v2536
    %v3016 = vmul.f32 %v2984, %v2536
    %v3017 = vmul.f32 %v2985, %v2536
    %v3018 = vmul.f32 %v2986, %v2536
    %v3019 = vmul.f32 %v2987, %v2536
    %v3020 = vmul.f32 %v2988, %v2536
    %v3021 = vmul.f32 %v2989, %v2536
    %v3022 = vmul.f32 %v2990, %v2536
    %v3023 = vmul.f32 %v2991, %v2536
    %v3024 = vmul.f32 %v2992, %v2536
    %v3025 = vmul.f32 %v2993, %v2536
    %v3026 = vmul.f32 %v2994, %v2536
    %v3027 = vmul.f32 %v2995, %v2536
    %v3028 = vmul.f32 %v2996, %v2536
    %v3029 = vadd.f32 %v2997, %v2572
    %v3030 = vadd.f32 %v2998, %v2572
    %v3031 = vadd.f32 %v2999, %v2572
    %v3032 = vadd.f32 %v3000, %v2572
    %v3033 = vadd.f32 %v3001, %v2572
    %v3034 = vadd.f32 %v3002, %v2572
    %v3035 = vadd.f32 %v3003, %v2572
    %v3036 = vadd.f32 %v3004, %v2572
    %v3037 = vadd.f32 %v3005, %v2572
    %v3038 = vadd.f32 %v3006, %v2572
    %v3039 = vadd.f32 %v3007, %v2572
    %v3040 = vadd.f32 %v3008, %v2572
    %v3041 = vadd.f32 %v3009, %v2572
    %v3042 = vadd.f32 %v3010, %v2572
    %v3043 = vadd.f32 %v3011, %v2572
    %v3044 = vadd.f32 %v3012, %v2572
    %v3045 = vadd.f32 %v3013, %v2572
    %v3046 = vadd.f32 %v3014, %v2572
    %v3047 = vadd.f32 %v3015, %v2572
    %v3048 = vadd.f32 %v3016, %v2572
    %v3049 = vadd.f32 %v3017, %v2572
    %v3050 = vadd.f32 %v3018, %v2572
    %v3051 = vadd.f32 %v3019, %v2572
    %v3052 = vadd.f32 %v3020, %v2572
    %v3053 = vadd.f32 %v3021, %v2572
    %v3054 = vadd.f32 %v3022, %v2572
    %v3055 = vadd.f32 %v3023, %v2572
    %v3056 = vadd.f32 %v3024, %v2572
    %v3057 = vadd.f32 %v3025, %v2572
    %v3058 = vadd.f32 %v3026, %v2572
    %v3059 = vadd.f32 %v3027, %v2572
    %v3060 = vadd.f32 %v3028, %v2572
    %s3061 = scalar_lea.vmem %s6, 256
    %3062 = vst.msk [vmem:[%s3061] sm:$0xff] %vm862, %v3029
    %3063 = vst.msk [vmem:[%s3061 + $0x8] sm:$0xff] %vm862, %v3030
    %3064 = vst.msk [vmem:[%s3061 + $0x10] sm:$0xff] %vm862, %v3031
    %3065 = vst.msk [vmem:[%s3061 + $0x18] sm:$0xff] %vm862, %v3032
    %3066 = vst.msk [vmem:[%s3061 + $0x20] sm:$0xff] %vm862, %v3033
    %3067 = vst.msk [vmem:[%s3061 + $0x28] sm:$0xff] %vm862, %v3034
    %3068 = vst.msk [vmem:[%s3061 + $0x30] sm:$0xff] %vm862, %v3035
    %3069 = vst.msk [vmem:[%s3061 + $0x38] sm:$0xff] %vm862, %v3036
    %3070 = vst.msk [vmem:[%s3061 + $0x40] sm:$0xff] %vm862, %v3037
    %3071 = vst.msk [vmem:[%s3061 + $0x48] sm:$0xff] %vm862, %v3038
    %3072 = vst.msk [vmem:[%s3061 + $0x50] sm:$0xff] %vm862, %v3039
    %3073 = vst.msk [vmem:[%s3061 + $0x58] sm:$0xff] %vm862, %v3040
    %3074 = vst.msk [vmem:[%s3061 + $0x60] sm:$0xff] %vm862, %v3041
    %3075 = vst.msk [vmem:[%s3061 + $0x68] sm:$0xff] %vm862, %v3042
    %3076 = vst.msk [vmem:[%s3061 + $0x70] sm:$0xff] %vm862, %v3043
    %3077 = vst.msk [vmem:[%s3061 + $0x78] sm:$0xff] %vm862, %v3044
    %3078 = vst.msk [vmem:[%s3061 + $0x80] sm:$0xff] %vm862, %v3045
    %3079 = vst.msk [vmem:[%s3061 + $0x88] sm:$0xff] %vm862, %v3046
    %3080 = vst.msk [vmem:[%s3061 + $0x90] sm:$0xff] %vm862, %v3047
    %3081 = vst.msk [vmem:[%s3061 + $0x98] sm:$0xff] %vm862, %v3048
    %3082 = vst.msk [vmem:[%s3061 + $0xa0] sm:$0xff] %vm862, %v3049
    %3083 = vst.msk [vmem:[%s3061 + $0xa8] sm:$0xff] %vm862, %v3050
    %3084 = vst.msk [vmem:[%s3061 + $0xb0] sm:$0xff] %vm862, %v3051
    %3085 = vst.msk [vmem:[%s3061 + $0xb8] sm:$0xff] %vm862, %v3052
    %3086 = vst.msk [vmem:[%s3061 + $0xc0] sm:$0xff] %vm862, %v3053
    %3087 = vst.msk [vmem:[%s3061 + $0xc8] sm:$0xff] %vm862, %v3054
    %3088 = vst.msk [vmem:[%s3061 + $0xd0] sm:$0xff] %vm862, %v3055
    %3089 = vst.msk [vmem:[%s3061 + $0xd8] sm:$0xff] %vm862, %v3056
    %3090 = vst.msk [vmem:[%s3061 + $0xe0] sm:$0xff] %vm862, %v3057
    %3091 = vst.msk [vmem:[%s3061 + $0xe8] sm:$0xff] %vm862, %v3058
    %3092 = vst.msk [vmem:[%s3061 + $0xf0] sm:$0xff] %vm862, %v3059
    %3093 = vst.msk [vmem:[%s3061 + $0xf8] sm:$0xff] %vm862, %v3060
    %v3094 = vld [vmem:[%s2100] sm:$0xff]
    %v3095 = vld [vmem:[%s2100 + $0x8] sm:$0xff]
    %v3096 = vld [vmem:[%s2100 + $0x10] sm:$0xff]
    %v3097 = vld [vmem:[%s2100 + $0x18] sm:$0xff]
    %v3098 = vld [vmem:[%s2100 + $0x20] sm:$0xff]
    %v3099 = vld [vmem:[%s2100 + $0x28] sm:$0xff]
    %v3100 = vld [vmem:[%s2100 + $0x30] sm:$0xff]
    %v3101 = vld [vmem:[%s2100 + $0x38] sm:$0xff]
    %v3102 = vld [vmem:[%s2100 + $0x40] sm:$0xff]
    %v3103 = vld [vmem:[%s2100 + $0x48] sm:$0xff]
    %v3104 = vld [vmem:[%s2100 + $0x50] sm:$0xff]
    %v3105 = vld [vmem:[%s2100 + $0x58] sm:$0xff]
    %v3106 = vld [vmem:[%s2100 + $0x60] sm:$0xff]
    %v3107 = vld [vmem:[%s2100 + $0x68] sm:$0xff]
    %v3108 = vld [vmem:[%s2100 + $0x70] sm:$0xff]
    %v3109 = vld [vmem:[%s2100 + $0x78] sm:$0xff]
    %v3110 = vld [vmem:[%s2100 + $0x80] sm:$0xff]
    %v3111 = vld [vmem:[%s2100 + $0x88] sm:$0xff]
    %v3112 = vld [vmem:[%s2100 + $0x90] sm:$0xff]
    %v3113 = vld [vmem:[%s2100 + $0x98] sm:$0xff]
    %v3114 = vld [vmem:[%s2100 + $0xa0] sm:$0xff]
    %v3115 = vld [vmem:[%s2100 + $0xa8] sm:$0xff]
    %v3116 = vld [vmem:[%s2100 + $0xb0] sm:$0xff]
    %v3117 = vld [vmem:[%s2100 + $0xb8] sm:$0xff]
    %v3118 = vld [vmem:[%s2100 + $0xc0] sm:$0xff]
    %v3119 = vld [vmem:[%s2100 + $0xc8] sm:$0xff]
    %v3120 = vld [vmem:[%s2100 + $0xd0] sm:$0xff]
    %v3121 = vld [vmem:[%s2100 + $0xd8] sm:$0xff]
    %v3122 = vld [vmem:[%s2100 + $0xe0] sm:$0xff]
    %v3123 = vld [vmem:[%s2100 + $0xe8] sm:$0xff]
    %v3124 = vld [vmem:[%s2100 + $0xf0] sm:$0xff]
    %v3125 = vld [vmem:[%s2100 + $0xf8] sm:$0xff]
    %v3126 = vmul.f32 %v3094, %v2672
    %v3127 = vmul.f32 %v3095, %v2672
    %v3128 = vmul.f32 %v3096, %v2672
    %v3129 = vmul.f32 %v3097, %v2672
    %v3130 = vmul.f32 %v3098, %v2672
    %v3131 = vmul.f32 %v3099, %v2672
    %v3132 = vmul.f32 %v3100, %v2672
    %v3133 = vmul.f32 %v3101, %v2672
    %v3134 = vmul.f32 %v3102, %v2672
    %v3135 = vmul.f32 %v3103, %v2672
    %v3136 = vmul.f32 %v3104, %v2672
    %v3137 = vmul.f32 %v3105, %v2672
    %v3138 = vmul.f32 %v3106, %v2672
    %v3139 = vmul.f32 %v3107, %v2672
    %v3140 = vmul.f32 %v3108, %v2672
    %v3141 = vmul.f32 %v3109, %v2672
    %v3142 = vmul.f32 %v3110, %v2672
    %v3143 = vmul.f32 %v3111, %v2672
    %v3144 = vmul.f32 %v3112, %v2672
    %v3145 = vmul.f32 %v3113, %v2672
    %v3146 = vmul.f32 %v3114, %v2672
    %v3147 = vmul.f32 %v3115, %v2672
    %v3148 = vmul.f32 %v3116, %v2672
    %v3149 = vmul.f32 %v3117, %v2672
    %v3150 = vmul.f32 %v3118, %v2672
    %v3151 = vmul.f32 %v3119, %v2672
    %v3152 = vmul.f32 %v3120, %v2672
    %v3153 = vmul.f32 %v3121, %v2672
    %v3154 = vmul.f32 %v3122, %v2672
    %v3155 = vmul.f32 %v3123, %v2672
    %v3156 = vmul.f32 %v3124, %v2672
    %v3157 = vmul.f32 %v3125, %v2672
    %v3158 = vadd.f32 %v3126, %v2708
    %v3159 = vadd.f32 %v3127, %v2708
    %v3160 = vadd.f32 %v3128, %v2708
    %v3161 = vadd.f32 %v3129, %v2708
    %v3162 = vadd.f32 %v3130, %v2708
    %v3163 = vadd.f32 %v3131, %v2708
    %v3164 = vadd.f32 %v3132, %v2708
    %v3165 = vadd.f32 %v3133, %v2708
    %v3166 = vadd.f32 %v3134, %v2708
    %v3167 = vadd.f32 %v3135, %v2708
    %v3168 = vadd.f32 %v3136, %v2708
    %v3169 = vadd.f32 %v3137, %v2708
    %v3170 = vadd.f32 %v3138, %v2708
    %v3171 = vadd.f32 %v3139, %v2708
    %v3172 = vadd.f32 %v3140, %v2708
    %v3173 = vadd.f32 %v3141, %v2708
    %v3174 = vadd.f32 %v3142, %v2708
    %v3175 = vadd.f32 %v3143, %v2708
    %v3176 = vadd.f32 %v3144, %v2708
    %v3177 = vadd.f32 %v3145, %v2708
    %v3178 = vadd.f32 %v3146, %v2708
    %v3179 = vadd.f32 %v3147, %v2708
    %v3180 = vadd.f32 %v3148, %v2708
    %v3181 = vadd.f32 %v3149, %v2708
    %v3182 = vadd.f32 %v3150, %v2708
    %v3183 = vadd.f32 %v3151, %v2708
    %v3184 = vadd.f32 %v3152, %v2708
    %v3185 = vadd.f32 %v3153, %v2708
    %v3186 = vadd.f32 %v3154, %v2708
    %v3187 = vadd.f32 %v3155, %v2708
    %v3188 = vadd.f32 %v3156, %v2708
    %v3189 = vadd.f32 %v3157, %v2708
    %v3190 = vxor.u32 %v3158, 2147483648
    %v3191 = vxor.u32 %v3159, 2147483648
    %v3192 = vxor.u32 %v3160, 2147483648
    %v3193 = vxor.u32 %v3161, 2147483648
    %v3194 = vxor.u32 %v3162, 2147483648
    %v3195 = vxor.u32 %v3163, 2147483648
    %v3196 = vxor.u32 %v3164, 2147483648
    %v3197 = vxor.u32 %v3165, 2147483648
    %v3198 = vxor.u32 %v3166, 2147483648
    %v3199 = vxor.u32 %v3167, 2147483648
    %v3200 = vxor.u32 %v3168, 2147483648
    %v3201 = vxor.u32 %v3169, 2147483648
    %v3202 = vxor.u32 %v3170, 2147483648
    %v3203 = vxor.u32 %v3171, 2147483648
    %v3204 = vxor.u32 %v3172, 2147483648
    %v3205 = vxor.u32 %v3173, 2147483648
    %v3206 = vxor.u32 %v3174, 2147483648
    %v3207 = vxor.u32 %v3175, 2147483648
    %v3208 = vxor.u32 %v3176, 2147483648
    %v3209 = vxor.u32 %v3177, 2147483648
    %v3210 = vxor.u32 %v3178, 2147483648
    %v3211 = vxor.u32 %v3179, 2147483648
    %v3212 = vxor.u32 %v3180, 2147483648
    %v3213 = vxor.u32 %v3181, 2147483648
    %v3214 = vxor.u32 %v3182, 2147483648
    %v3215 = vxor.u32 %v3183, 2147483648
    %v3216 = vxor.u32 %v3184, 2147483648
    %v3217 = vxor.u32 %v3185, 2147483648
    %v3218 = vxor.u32 %v3186, 2147483648
    %v3219 = vxor.u32 %v3187, 2147483648
    %v3220 = vxor.u32 %v3188, 2147483648
    %v3221 = vxor.u32 %v3189, 2147483648
    %v3222 = vmul.f32 %v3190, 1.442695
    %v3223 = vpow.pop %v3222
    %v3224 = vmul.f32 %v3191, 1.442695
    %v3225 = vpow.pop %v3224
    %v3226 = vmul.f32 %v3192, 1.442695
    %v3227 = vpow.pop %v3226
    %v3228 = vmul.f32 %v3193, 1.442695
    %v3229 = vpow.pop %v3228
    %v3230 = vmul.f32 %v3194, 1.442695
    %v3231 = vpow.pop %v3230
    %v3232 = vmul.f32 %v3195, 1.442695
    %v3233 = vpow.pop %v3232
    %v3234 = vmul.f32 %v3196, 1.442695
    %v3235 = vpow.pop %v3234
    %v3236 = vmul.f32 %v3197, 1.442695
    %v3237 = vpow.pop %v3236
    %v3238 = vmul.f32 %v3198, 1.442695
    %v3239 = vpow.pop %v3238
    %v3240 = vmul.f32 %v3199, 1.442695
    %v3241 = vpow.pop %v3240
    %v3242 = vmul.f32 %v3200, 1.442695
    %v3243 = vpow.pop %v3242
    %v3244 = vmul.f32 %v3201, 1.442695
    %v3245 = vpow.pop %v3244
    %v3246 = vmul.f32 %v3202, 1.442695
    %v3247 = vpow.pop %v3246
    %v3248 = vmul.f32 %v3203, 1.442695
    %v3249 = vpow.pop %v3248
    %v3250 = vmul.f32 %v3204, 1.442695
    %v3251 = vpow.pop %v3250
    %v3252 = vmul.f32 %v3205, 1.442695
    %v3253 = vpow.pop %v3252
    %v3254 = vmul.f32 %v3206, 1.442695
    %v3255 = vpow.pop %v3254
    %v3256 = vmul.f32 %v3207, 1.442695
    %v3257 = vpow.pop %v3256
    %v3258 = vmul.f32 %v3208, 1.442695
    %v3259 = vpow.pop %v3258
    %v3260 = vmul.f32 %v3209, 1.442695
    %v3261 = vpow.pop %v3260
    %v3262 = vmul.f32 %v3210, 1.442695
    %v3263 = vpow.pop %v3262
    %v3264 = vmul.f32 %v3211, 1.442695
    %v3265 = vpow.pop %v3264
    %v3266 = vmul.f32 %v3212, 1.442695
    %v3267 = vpow.pop %v3266
    %v3268 = vmul.f32 %v3213, 1.442695
    %v3269 = vpow.pop %v3268
    %v3270 = vmul.f32 %v3214, 1.442695
    %v3271 = vpow.pop %v3270
    %v3272 = vmul.f32 %v3215, 1.442695
    %v3273 = vpow.pop %v3272
    %v3274 = vmul.f32 %v3216, 1.442695
    %v3275 = vpow.pop %v3274
    %v3276 = vmul.f32 %v3217, 1.442695
    %v3277 = vpow.pop %v3276
    %v3278 = vmul.f32 %v3218, 1.442695
    %v3279 = vpow.pop %v3278
    %v3280 = vmul.f32 %v3219, 1.442695
    %v3281 = vpow.pop %v3280
    %v3282 = vmul.f32 %v3220, 1.442695
    %v3283 = vpow.pop %v3282
    %v3284 = vmul.f32 %v3221, 1.442695
    %v3285 = vpow.pop %v3284
    %v3286 = vadd.f32 %v3223, 1.0
    %v3287 = vadd.f32 %v3225, 1.0
    %v3288 = vadd.f32 %v3227, 1.0
    %v3289 = vadd.f32 %v3229, 1.0
    %v3290 = vadd.f32 %v3231, 1.0
    %v3291 = vadd.f32 %v3233, 1.0
    %v3292 = vadd.f32 %v3235, 1.0
    %v3293 = vadd.f32 %v3237, 1.0
    %v3294 = vadd.f32 %v3239, 1.0
    %v3295 = vadd.f32 %v3241, 1.0
    %v3296 = vadd.f32 %v3243, 1.0
    %v3297 = vadd.f32 %v3245, 1.0
    %v3298 = vadd.f32 %v3247, 1.0
    %v3299 = vadd.f32 %v3249, 1.0
    %v3300 = vadd.f32 %v3251, 1.0
    %v3301 = vadd.f32 %v3253, 1.0
    %v3302 = vadd.f32 %v3255, 1.0
    %v3303 = vadd.f32 %v3257, 1.0
    %v3304 = vadd.f32 %v3259, 1.0
    %v3305 = vadd.f32 %v3261, 1.0
    %v3306 = vadd.f32 %v3263, 1.0
    %v3307 = vadd.f32 %v3265, 1.0
    %v3308 = vadd.f32 %v3267, 1.0
    %v3309 = vadd.f32 %v3269, 1.0
    %v3310 = vadd.f32 %v3271, 1.0
    %v3311 = vadd.f32 %v3273, 1.0
    %v3312 = vadd.f32 %v3275, 1.0
    %v3313 = vadd.f32 %v3277, 1.0
    %v3314 = vadd.f32 %v3279, 1.0
    %v3315 = vadd.f32 %v3281, 1.0
    %v3316 = vadd.f32 %v3283, 1.0
    %v3317 = vadd.f32 %v3285, 1.0
    %v3318 = vrcp.pop %v3286
    %v3319 = vmul.f32 1.0, %v3318
    %v3320 = vrcp.pop %v3287
    %v3321 = vmul.f32 1.0, %v3320
    %v3322 = vrcp.pop %v3288
    %v3323 = vmul.f32 1.0, %v3322
    %v3324 = vrcp.pop %v3289
    %v3325 = vmul.f32 1.0, %v3324
    %v3326 = vrcp.pop %v3290
    %v3327 = vmul.f32 1.0, %v3326
    %v3328 = vrcp.pop %v3291
    %v3329 = vmul.f32 1.0, %v3328
    %v3330 = vrcp.pop %v3292
    %v3331 = vmul.f32 1.0, %v3330
    %v3332 = vrcp.pop %v3293
    %v3333 = vmul.f32 1.0, %v3332
    %v3334 = vrcp.pop %v3294
    %v3335 = vmul.f32 1.0, %v3334
    %v3336 = vrcp.pop %v3295
    %v3337 = vmul.f32 1.0, %v3336
    %v3338 = vrcp.pop %v3296
    %v3339 = vmul.f32 1.0, %v3338
    %v3340 = vrcp.pop %v3297
    %v3341 = vmul.f32 1.0, %v3340
    %v3342 = vrcp.pop %v3298
    %v3343 = vmul.f32 1.0, %v3342
    %v3344 = vrcp.pop %v3299
    %v3345 = vmul.f32 1.0, %v3344
    %v3346 = vrcp.pop %v3300
    %v3347 = vmul.f32 1.0, %v3346
    %v3348 = vrcp.pop %v3301
    %v3349 = vmul.f32 1.0, %v3348
    %v3350 = vrcp.pop %v3302
    %v3351 = vmul.f32 1.0, %v3350
    %v3352 = vrcp.pop %v3303
    %v3353 = vmul.f32 1.0, %v3352
    %v3354 = vrcp.pop %v3304
    %v3355 = vmul.f32 1.0, %v3354
    %v3356 = vrcp.pop %v3305
    %v3357 = vmul.f32 1.0, %v3356
    %v3358 = vrcp.pop %v3306
    %v3359 = vmul.f32 1.0, %v3358
    %v3360 = vrcp.pop %v3307
    %v3361 = vmul.f32 1.0, %v3360
    %v3362 = vrcp.pop %v3308
    %v3363 = vmul.f32 1.0, %v3362
    %v3364 = vrcp.pop %v3309
    %v3365 = vmul.f32 1.0, %v3364
    %v3366 = vrcp.pop %v3310
    %v3367 = vmul.f32 1.0, %v3366
    %v3368 = vrcp.pop %v3311
    %v3369 = vmul.f32 1.0, %v3368
    %v3370 = vrcp.pop %v3312
    %v3371 = vmul.f32 1.0, %v3370
    %v3372 = vrcp.pop %v3313
    %v3373 = vmul.f32 1.0, %v3372
    %v3374 = vrcp.pop %v3314
    %v3375 = vmul.f32 1.0, %v3374
    %v3376 = vrcp.pop %v3315
    %v3377 = vmul.f32 1.0, %v3376
    %v3378 = vrcp.pop %v3316
    %v3379 = vmul.f32 1.0, %v3378
    %v3380 = vrcp.pop %v3317
    %v3381 = vmul.f32 1.0, %v3380
    %s3382 = scalar_lea.vmem [#allocation9], 256
    %3383 = vst.msk [vmem:[%s3382] sm:$0xff] %vm540, %v3319
    %3384 = vst.msk [vmem:[%s3382 + $0x8] sm:$0xff] %vm540, %v3321
    %3385 = vst.msk [vmem:[%s3382 + $0x10] sm:$0xff] %vm540, %v3323
    %3386 = vst.msk [vmem:[%s3382 + $0x18] sm:$0xff] %vm540, %v3325
    %3387 = vst.msk [vmem:[%s3382 + $0x20] sm:$0xff] %vm540, %v3327
    %3388 = vst.msk [vmem:[%s3382 + $0x28] sm:$0xff] %vm540, %v3329
    %3389 = vst.msk [vmem:[%s3382 + $0x30] sm:$0xff] %vm540, %v3331
    %3390 = vst.msk [vmem:[%s3382 + $0x38] sm:$0xff] %vm540, %v3333
    %3391 = vst.msk [vmem:[%s3382 + $0x40] sm:$0xff] %vm540, %v3335
    %3392 = vst.msk [vmem:[%s3382 + $0x48] sm:$0xff] %vm540, %v3337
    %3393 = vst.msk [vmem:[%s3382 + $0x50] sm:$0xff] %vm540, %v3339
    %3394 = vst.msk [vmem:[%s3382 + $0x58] sm:$0xff] %vm540, %v3341
    %3395 = vst.msk [vmem:[%s3382 + $0x60] sm:$0xff] %vm540, %v3343
    %3396 = vst.msk [vmem:[%s3382 + $0x68] sm:$0xff] %vm540, %v3345
    %3397 = vst.msk [vmem:[%s3382 + $0x70] sm:$0xff] %vm540, %v3347
    %3398 = vst.msk [vmem:[%s3382 + $0x78] sm:$0xff] %vm540, %v3349
    %3399 = vst.msk [vmem:[%s3382 + $0x80] sm:$0xff] %vm540, %v3351
    %3400 = vst.msk [vmem:[%s3382 + $0x88] sm:$0xff] %vm540, %v3353
    %3401 = vst.msk [vmem:[%s3382 + $0x90] sm:$0xff] %vm540, %v3355
    %3402 = vst.msk [vmem:[%s3382 + $0x98] sm:$0xff] %vm540, %v3357
    %3403 = vst.msk [vmem:[%s3382 + $0xa0] sm:$0xff] %vm540, %v3359
    %3404 = vst.msk [vmem:[%s3382 + $0xa8] sm:$0xff] %vm540, %v3361
    %3405 = vst.msk [vmem:[%s3382 + $0xb0] sm:$0xff] %vm540, %v3363
    %3406 = vst.msk [vmem:[%s3382 + $0xb8] sm:$0xff] %vm540, %v3365
    %3407 = vst.msk [vmem:[%s3382 + $0xc0] sm:$0xff] %vm540, %v3367
    %3408 = vst.msk [vmem:[%s3382 + $0xc8] sm:$0xff] %vm540, %v3369
    %3409 = vst.msk [vmem:[%s3382 + $0xd0] sm:$0xff] %vm540, %v3371
    %3410 = vst.msk [vmem:[%s3382 + $0xd8] sm:$0xff] %vm540, %v3373
    %3411 = vst.msk [vmem:[%s3382 + $0xe0] sm:$0xff] %vm540, %v3375
    %3412 = vst.msk [vmem:[%s3382 + $0xe8] sm:$0xff] %vm540, %v3377
    %3413 = vst.msk [vmem:[%s3382 + $0xf0] sm:$0xff] %vm540, %v3379
    %3414 = vst.msk [vmem:[%s3382 + $0xf8] sm:$0xff] %vm540, %v3381
    // Predicated region
    $region34: #{primary_quat_caps.1} parent=1 // pred_check
      _
    $region35: #{primary_quat_caps.1} parent=1 // pred_check_branch
      %3416 = sbr.rel (0) target = $region37
    $region36: #{primary_quat_caps.1} parent=1 // pred_region
      _
    $region37: #{primary_quat_caps.1} parent=1 // pred_fallthru
      _
    // Predicated region
    $region38: #{primary_quat_caps.1} parent=1 // pred_check
      _
    $region39: #{primary_quat_caps.1} parent=1 // pred_check_branch
      %3418 = sbr.rel (0) target = $region41
    $region40: #{primary_quat_caps.1} parent=1 // pred_region
      %s3420 = ssub.s32 8192, 8192
      %3421 = vsyncadd [#allocation6], %s3420
      %s3422 = sshll.u32 [#allocation9], 4
      %s3423 = int_to_ptr.vmem [resolvable:$true] %s3422
      %3428 = dma.vmem_to_hbm [thread:$0]  %s3423, 8192, %s7, [#allocation6], 128, 128, 8
    $region41: #{primary_quat_caps.1} parent=1 // pred_fallthru
      _
    // Predicated region
    $region42: #{primary_quat_caps.1} parent=1 // pred_check
      _
    $region43: #{primary_quat_caps.1} parent=1 // pred_check_branch
      %3430 = sbr.rel (0) target = $region45
    $region44: #{primary_quat_caps.1} parent=1 // pred_region
      _
    $region45: #{primary_quat_caps.1} parent=1 // pred_fallthru
      _
    // Predicated region
    $region46: #{primary_quat_caps.1} parent=1 // pred_check
      _
    $region47: #{primary_quat_caps.1} parent=1 // pred_check_branch
      %3432 = sbr.rel (0) target = $region49
    $region48: #{primary_quat_caps.1} parent=1 // pred_region
      %3433 = dma.done [#allocation6], 8192
    $region49: #{primary_quat_caps.1} parent=1 // pred_fallthru
      _
    %3434 = vsyncpa [#allocation5], 1
    %3435 = vsyncpa [#allocation8], 1
    %3436 = vsyncpa [#allocation6], 1

</llo_original>
